<compile_context>
chip_gen: v7x
topology: tpu7x:2x2x1
jax: 0.10.0
libtpu: 0.0.40
codegen_flags: <defaults>
</compile_context>

<pallas_src>
import functools
import math

import jax
import jax.numpy as jnp
from jax.experimental import pallas as pl
from jax.experimental.pallas import tpu as pltpu


# --------------------------------------------------------------------------- #
# Kernel 1: attention matrix  attn = softmax(pooled ·_pc (Wq^T Wk) ·_pc pooled)
# --------------------------------------------------------------------------- #
def _attn_kernel(pooled_ref, wq_t_ref, wk_ref, attn_ref, *, inv_scale):
    # pooled_ref: [P, N, C] (one channels-last [N, C] slab per pooled pixel)
    P, N, C = pooled_ref.shape
    m = jnp.dot(wq_t_ref[...].astype(jnp.float32),
                wk_ref[...].astype(jnp.float32),
                preferred_element_type=jnp.float32)             # M = Wq^T @ Wk  [C, C]

    acc = jnp.zeros((N, N), jnp.float32)
    for p in range(P):  # P is small & static -> fully unrolled, plain 2-D matmuls
        pp = pooled_ref[p].astype(jnp.float32)                  # [N, C]
        t = jnp.dot(pp, m, preferred_element_type=jnp.float32)  # [N, C]
        # acc += t @ pp^T  (contract the channel axis of both operands)
        acc += jax.lax.dot_general(t, pp, (((1,), (1,)), ((), ())),
                                   preferred_element_type=jnp.float32)

    s = acc * inv_scale                        # / sqrt(P * C) (== q.size(1) in torch)
    s = s - jnp.max(s, axis=1, keepdims=True)  # numerically stable softmax over dim=1
    e = jnp.exp(s)
    attn_ref[...] = (e / jnp.sum(e, axis=1, keepdims=True)).astype(attn_ref.dtype)


# --------------------------------------------------------------------------- #
# Kernel 2 (fused): per spatial block  out[n] = Wv @ (sum_m attn[n,m] * feat[m])
# --------------------------------------------------------------------------- #
def _fused_mix_project_kernel(attn_ref, wv_ref, feat_ref, out_ref):
    # attn_ref: [N, N] f32 in SMEM (cheap scalar reads)
    # wv_ref:   [C, C] in VMEM (constant block, fetched once)
    # feat_ref: [N, C, bS] NCHW-native spatial block
    # out_ref:  [N, C, bS]
    n_slices = feat_ref.shape[0]
    wv = wv_ref[...].astype(jnp.float32)
    for n in range(n_slices):
        # Slice mixing on the VPU: scalar (SMEM) * vector FMAs, ~N/4 flop per HBM byte,
        # fully hidden under the HBM DMA for small/moderate slice counts.
        acc = attn_ref[n, 0] * feat_ref[0].astype(jnp.float32)
        for m in range(1, n_slices):
            acc = acc + attn_ref[n, m] * feat_ref[m].astype(jnp.float32)
        # Channel projection on the MXU: [C, C] @ [C, bS]  (v never touches HBM).
        out_ref[n] = jnp.dot(wv, acc,
                             preferred_element_type=jnp.float32).astype(out_ref.dtype)


def _choose_spatial_block(S, N, C, itemsize, vmem_budget_bytes):
    """Largest lane-dense spatial block whose double-buffered in+out blocks fit budget."""
    per_lane = 4 * N * C * itemsize            # 2x double-buffered (feat in + out)
    budget_lanes = max(int(vmem_budget_bytes) // max(per_lane, 1), 128)
    if S <= budget_lanes:
        return S                               # whole spatial extent in one block
    return max((budget_lanes // 128) * 128, 128)


def cross_slice_attention(pooled_nchw, feat_nchw, wq, wk, wv, *,
                          spatial_block=None, vmem_budget_bytes=16 << 20):
    """Forward pass of CrossSliceAttention.

    pooled_nchw: [N, C, Hp, Wp], feat_nchw: [N, C, H, W],
    wq/wk/wv: [C_out, C_in] (squeezed 1x1 conv weights, no bias).
    Returns (out [N, C, H, W], attention x [N, N]).
    """
    N, C, Hp, Wp = pooled_nchw.shape
    _, _, H, W = feat_nchw.shape
    P = Hp * Wp
    S = H * W
    dtype = feat_nchw.dtype
    itemsize = jnp.dtype(dtype).itemsize
    vmem = pl.BlockSpec(memory_space=pltpu.MemorySpace.VMEM)
    smem = pl.BlockSpec(memory_space=pltpu.MemorySpace.SMEM)

    # ---------------- 1) attention matrix (tiny; pooled transpose is negligible) ----
    pooled_pnc = jnp.transpose(pooled_nchw, (2, 3, 0, 1)).reshape(P, N, C)  # [P,N,C]
    attn = pl.pallas_call(
        functools.partial(_attn_kernel, inv_scale=1.0 / math.sqrt(float(P * C))),
        out_shape=jax.ShapeDtypeStruct((N, N), jnp.float32),
        in_specs=[vmem, vmem, vmem],
        out_specs=vmem,
    )(pooled_pnc, jnp.transpose(wq), wk)

    # ---------------- 2) fused v-projection + attention mix, NCHW-native -------------
    feat_ncs = feat_nchw.reshape(N, C, S)       # free row-major reshape (no transpose)

    if spatial_block is None:
        bS = _choose_spatial_block(S, N, C, itemsize, vmem_budget_bytes)
    else:
        bS = max(int(spatial_block), 1)
    bS = min(bS, S)
    grid = (pl.cdiv(S, bS),)

    block_bytes = N * C * bS * itemsize
    vmem_limit = int(min(max(4 * block_bytes + 2 * C * C * 4 + (4 << 20), 32 << 20),
                         48 << 20))             # safe on v5e/v6e (128 MiB) and v7x (64 MiB)

    out_ncs = pl.pallas_call(
        _fused_mix_project_kernel,
        out_shape=jax.ShapeDtypeStruct((N, C, S), dtype),
        grid=grid,
        in_specs=[
            smem,                                              # attn  [N, N] -> SMEM
            pl.BlockSpec((C, C), lambda j: (0, 0)),            # Wv (constant block)
            pl.BlockSpec((N, C, bS), lambda j: (0, 0, j)),     # feat spatial block
        ],
        out_specs=pl.BlockSpec((N, C, bS), lambda j: (0, 0, j)),
        compiler_params=pltpu.CompilerParams(
            dimension_semantics=("parallel",),                 # both TCs on v7x
            vmem_limit_bytes=vmem_limit,
        ),
    )(attn, wv, feat_ncs)

    out_nchw = out_ncs.reshape(N, C, H, W)      # free reshape back to NCHW
    return out_nchw, attn


# --------------------------------------------------------------------------- #
# Pure-JAX reference (mirrors the PyTorch module exactly)
# --------------------------------------------------------------------------- #
def _reference(pooled_nchw, feat_nchw, wq, wk, wv):
    N = pooled_nchw.shape[0]
    q = jnp.einsum('oi,nihw->nohw', wq, pooled_nchw).reshape(N, -1)
    k = jnp.einsum('oi,nihw->nohw', wk, pooled_nchw).reshape(N, -1)
    v = jnp.einsum('oi,nihw->nihw'.replace('nihw->nihw', 'nihw->nohw'), wv, feat_nchw)
    x = jax.nn.softmax((q @ k.T) / jnp.sqrt(jnp.float32(q.shape[1])), axis=1)
    out = jnp.einsum('nm,mihw->nihw', x, v)
    return out, x


if __name__ == "__main__":
    key = jax.random.PRNGKey(0)
    k1, k2, k3, k4, k5 = jax.random.split(key, 5)

    N, C = 8, 32          # N slices, C input channels
    Hp, Wp = 4, 4         # pooled spatial  (P = 16)
    H, W = 16, 16         # feature spatial (S = 256)

    pooled = jax.random.normal(k1, (N, C, Hp, Wp), dtype=jnp.float32)
    feats = jax.random.normal(k2, (N, C, H, W), dtype=jnp.float32)

    # Deterministic 1x1-conv weights ([C_out, C_in, 1, 1] squeezed to [C, C]).
    scale = 1.0 / math.sqrt(C)
    wq = jax.random.uniform(k3, (C, C), jnp.float32, -scale, scale)
    wk = jax.random.uniform(k4, (C, C), jnp.float32, -scale, scale)
    wv = jax.random.uniform(k5, (C, C), jnp.float32, -scale, scale)

    # spatial_block=128 exercises a multi-step, lane-dense "parallel" grid even
    # at this small demo size; leave it None in real use to auto-size from VMEM.
    fn = jax.jit(functools.partial(cross_slice_attention, spatial_block=128))
    out, attn = fn(pooled, feats, wq, wk, wv)
    out = jax.block_until_ready(out)
    attn = jax.block_until_ready(attn)

    out_ref, attn_ref = _reference(pooled, feats, wq, wk, wv)
    assert out.shape == (N, C, H, W) and attn.shape == (N, N)
    assert jnp.allclose(attn, attn_ref, atol=1e-4, rtol=1e-4), \
        float(jnp.max(jnp.abs(attn - attn_ref)))
    assert jnp.allclose(out, out_ref, atol=1e-4, rtol=1e-4), \
        float(jnp.max(jnp.abs(out - out_ref)))

    print("KERNEL_OK")
</pallas_src>

<mosaic_0001>
module attributes {stable_mosaic.version = 11 : i64} {
  func.func @_attn_kernel(%arg0: memref<16x8x32xf32, #tpu.memory_space<vmem>>, %arg1: memref<32x32xf32, #tpu.memory_space<vmem>>, %arg2: memref<32x32xf32, #tpu.memory_space<vmem>>, %arg3: memref<8x8xf32, #tpu.memory_space<vmem>>) attributes {dimension_semantics = [], scalar_prefetch = 0 : i64, scratch_operands = 0 : i64, tpu.core_type = #tpu.core_type<tc>} {
    %c0 = arith.constant 0 : index
    %c0_0 = arith.constant 0 : index
    %0 = vector.load %arg1[%c0, %c0_0] : memref<32x32xf32, #tpu.memory_space<vmem>>, vector<32x32xf32>
    %c0_1 = arith.constant 0 : index
    %c0_2 = arith.constant 0 : index
    %1 = vector.load %arg2[%c0_1, %c0_2] : memref<32x32xf32, #tpu.memory_space<vmem>>, vector<32x32xf32>
    %cst = arith.constant dense<0.000000e+00> : vector<32x32xf32>
    %2 = tpu.matmul %0, %1, %cst {dimension_numbers = #tpu.dot_dimension_numbers<[1], [0], [0], [1], [0, 0, 1, 1], [], []>} : vector<32x32xf32>, vector<32x32xf32>, vector<32x32xf32> -> vector<32x32xf32>
    %cst_3 = arith.constant 0.000000e+00 : f32
    %3 = vector.broadcast %cst_3 : f32 to vector<8x8xf32>
    %c0_4 = arith.constant 0 : index
    %c0_5 = arith.constant 0 : index
    %c0_6 = arith.constant 0 : index
    %4 = vector.load %arg0[%c0_4, %c0_5, %c0_6] : memref<16x8x32xf32, #tpu.memory_space<vmem>>, vector<1x8x32xf32>
    %5 = vector.shape_cast %4 : vector<1x8x32xf32> to vector<8x32xf32>
    %cst_7 = arith.constant dense<0.000000e+00> : vector<8x32xf32>
    %6 = tpu.matmul %5, %2, %cst_7 {dimension_numbers = #tpu.dot_dimension_numbers<[1], [0], [0], [1], [0, 0, 1, 1], [], []>} : vector<8x32xf32>, vector<32x32xf32>, vector<8x32xf32> -> vector<8x32xf32>
    %cst_8 = arith.constant dense<0.000000e+00> : vector<8x8xf32>
    %7 = tpu.matmul %6, %5, %cst_8 {dimension_numbers = #tpu.dot_dimension_numbers<[1], [1], [0], [0], [0, 0, 1, 0], [], []>} : vector<8x32xf32>, vector<8x32xf32>, vector<8x8xf32> -> vector<8x8xf32>
    %8 = arith.addf %3, %7 : vector<8x8xf32>
    %c1 = arith.constant 1 : index
    %c0_9 = arith.constant 0 : index
    %c0_10 = arith.constant 0 : index
    %9 = vector.load %arg0[%c1, %c0_9, %c0_10] : memref<16x8x32xf32, #tpu.memory_space<vmem>>, vector<1x8x32xf32>
    %10 = vector.shape_cast %9 : vector<1x8x32xf32> to vector<8x32xf32>
    %cst_11 = arith.constant dense<0.000000e+00> : vector<8x32xf32>
    %11 = tpu.matmul %10, %2, %cst_11 {dimension_numbers = #tpu.dot_dimension_numbers<[1], [0], [0], [1], [0, 0, 1, 1], [], []>} : vector<8x32xf32>, vector<32x32xf32>, vector<8x32xf32> -> vector<8x32xf32>
    %cst_12 = arith.constant dense<0.000000e+00> : vector<8x8xf32>
    %12 = tpu.matmul %11, %10, %cst_12 {dimension_numbers = #tpu.dot_dimension_numbers<[1], [1], [0], [0], [0, 0, 1, 0], [], []>} : vector<8x32xf32>, vector<8x32xf32>, vector<8x8xf32> -> vector<8x8xf32>
    %13 = arith.addf %8, %12 : vector<8x8xf32>
    %c2 = arith.constant 2 : index
    %c0_13 = arith.constant 0 : index
    %c0_14 = arith.constant 0 : index
    %14 = vector.load %arg0[%c2, %c0_13, %c0_14] : memref<16x8x32xf32, #tpu.memory_space<vmem>>, vector<1x8x32xf32>
    %15 = vector.shape_cast %14 : vector<1x8x32xf32> to vector<8x32xf32>
    %cst_15 = arith.constant dense<0.000000e+00> : vector<8x32xf32>
    %16 = tpu.matmul %15, %2, %cst_15 {dimension_numbers = #tpu.dot_dimension_numbers<[1], [0], [0], [1], [0, 0, 1, 1], [], []>} : vector<8x32xf32>, vector<32x32xf32>, vector<8x32xf32> -> vector<8x32xf32>
    %cst_16 = arith.constant dense<0.000000e+00> : vector<8x8xf32>
    %17 = tpu.matmul %16, %15, %cst_16 {dimension_numbers = #tpu.dot_dimension_numbers<[1], [1], [0], [0], [0, 0, 1, 0], [], []>} : vector<8x32xf32>, vector<8x32xf32>, vector<8x8xf32> -> vector<8x8xf32>
    %18 = arith.addf %13, %17 : vector<8x8xf32>
    %c3 = arith.constant 3 : index
    %c0_17 = arith.constant 0 : index
    %c0_18 = arith.constant 0 : index
    %19 = vector.load %arg0[%c3, %c0_17, %c0_18] : memref<16x8x32xf32, #tpu.memory_space<vmem>>, vector<1x8x32xf32>
    %20 = vector.shape_cast %19 : vector<1x8x32xf32> to vector<8x32xf32>
    %cst_19 = arith.constant dense<0.000000e+00> : vector<8x32xf32>
    %21 = tpu.matmul %20, %2, %cst_19 {dimension_numbers = #tpu.dot_dimension_numbers<[1], [0], [0], [1], [0, 0, 1, 1], [], []>} : vector<8x32xf32>, vector<32x32xf32>, vector<8x32xf32> -> vector<8x32xf32>
    %cst_20 = arith.constant dense<0.000000e+00> : vector<8x8xf32>
    %22 = tpu.matmul %21, %20, %cst_20 {dimension_numbers = #tpu.dot_dimension_numbers<[1], [1], [0], [0], [0, 0, 1, 0], [], []>} : vector<8x32xf32>, vector<8x32xf32>, vector<8x8xf32> -> vector<8x8xf32>
    %23 = arith.addf %18, %22 : vector<8x8xf32>
    %c4 = arith.constant 4 : index
    %c0_21 = arith.constant 0 : index
    %c0_22 = arith.constant 0 : index
    %24 = vector.load %arg0[%c4, %c0_21, %c0_22] : memref<16x8x32xf32, #tpu.memory_space<vmem>>, vector<1x8x32xf32>
    %25 = vector.shape_cast %24 : vector<1x8x32xf32> to vector<8x32xf32>
    %cst_23 = arith.constant dense<0.000000e+00> : vector<8x32xf32>
    %26 = tpu.matmul %25, %2, %cst_23 {dimension_numbers = #tpu.dot_dimension_numbers<[1], [0], [0], [1], [0, 0, 1, 1], [], []>} : vector<8x32xf32>, vector<32x32xf32>, vector<8x32xf32> -> vector<8x32xf32>
    %cst_24 = arith.constant dense<0.000000e+00> : vector<8x8xf32>
    %27 = tpu.matmul %26, %25, %cst_24 {dimension_numbers = #tpu.dot_dimension_numbers<[1], [1], [0], [0], [0, 0, 1, 0], [], []>} : vector<8x32xf32>, vector<8x32xf32>, vector<8x8xf32> -> vector<8x8xf32>
    %28 = arith.addf %23, %27 : vector<8x8xf32>
    %c5 = arith.constant 5 : index
    %c0_25 = arith.constant 0 : index
    %c0_26 = arith.constant 0 : index
    %29 = vector.load %arg0[%c5, %c0_25, %c0_26] : memref<16x8x32xf32, #tpu.memory_space<vmem>>, vector<1x8x32xf32>
    %30 = vector.shape_cast %29 : vector<1x8x32xf32> to vector<8x32xf32>
    %cst_27 = arith.constant dense<0.000000e+00> : vector<8x32xf32>
    %31 = tpu.matmul %30, %2, %cst_27 {dimension_numbers = #tpu.dot_dimension_numbers<[1], [0], [0], [1], [0, 0, 1, 1], [], []>} : vector<8x32xf32>, vector<32x32xf32>, vector<8x32xf32> -> vector<8x32xf32>
    %cst_28 = arith.constant dense<0.000000e+00> : vector<8x8xf32>
    %32 = tpu.matmul %31, %30, %cst_28 {dimension_numbers = #tpu.dot_dimension_numbers<[1], [1], [0], [0], [0, 0, 1, 0], [], []>} : vector<8x32xf32>, vector<8x32xf32>, vector<8x8xf32> -> vector<8x8xf32>
    %33 = arith.addf %28, %32 : vector<8x8xf32>
    %c6 = arith.constant 6 : index
    %c0_29 = arith.constant 0 : index
    %c0_30 = arith.constant 0 : index
    %34 = vector.load %arg0[%c6, %c0_29, %c0_30] : memref<16x8x32xf32, #tpu.memory_space<vmem>>, vector<1x8x32xf32>
    %35 = vector.shape_cast %34 : vector<1x8x32xf32> to vector<8x32xf32>
    %cst_31 = arith.constant dense<0.000000e+00> : vector<8x32xf32>
    %36 = tpu.matmul %35, %2, %cst_31 {dimension_numbers = #tpu.dot_dimension_numbers<[1], [0], [0], [1], [0, 0, 1, 1], [], []>} : vector<8x32xf32>, vector<32x32xf32>, vector<8x32xf32> -> vector<8x32xf32>
    %cst_32 = arith.constant dense<0.000000e+00> : vector<8x8xf32>
    %37 = tpu.matmul %36, %35, %cst_32 {dimension_numbers = #tpu.dot_dimension_numbers<[1], [1], [0], [0], [0, 0, 1, 0], [], []>} : vector<8x32xf32>, vector<8x32xf32>, vector<8x8xf32> -> vector<8x8xf32>
    %38 = arith.addf %33, %37 : vector<8x8xf32>
    %c7 = arith.constant 7 : index
    %c0_33 = arith.constant 0 : index
    %c0_34 = arith.constant 0 : index
    %39 = vector.load %arg0[%c7, %c0_33, %c0_34] : memref<16x8x32xf32, #tpu.memory_space<vmem>>, vector<1x8x32xf32>
    %40 = vector.shape_cast %39 : vector<1x8x32xf32> to vector<8x32xf32>
    %cst_35 = arith.constant dense<0.000000e+00> : vector<8x32xf32>
    %41 = tpu.matmul %40, %2, %cst_35 {dimension_numbers = #tpu.dot_dimension_numbers<[1], [0], [0], [1], [0, 0, 1, 1], [], []>} : vector<8x32xf32>, vector<32x32xf32>, vector<8x32xf32> -> vector<8x32xf32>
    %cst_36 = arith.constant dense<0.000000e+00> : vector<8x8xf32>
    %42 = tpu.matmul %41, %40, %cst_36 {dimension_numbers = #tpu.dot_dimension_numbers<[1], [1], [0], [0], [0, 0, 1, 0], [], []>} : vector<8x32xf32>, vector<8x32xf32>, vector<8x8xf32> -> vector<8x8xf32>
    %43 = arith.addf %38, %42 : vector<8x8xf32>
    %c8 = arith.constant 8 : index
    %c0_37 = arith.constant 0 : index
    %c0_38 = arith.constant 0 : index
    %44 = vector.load %arg0[%c8, %c0_37, %c0_38] : memref<16x8x32xf32, #tpu.memory_space<vmem>>, vector<1x8x32xf32>
    %45 = vector.shape_cast %44 : vector<1x8x32xf32> to vector<8x32xf32>
    %cst_39 = arith.constant dense<0.000000e+00> : vector<8x32xf32>
    %46 = tpu.matmul %45, %2, %cst_39 {dimension_numbers = #tpu.dot_dimension_numbers<[1], [0], [0], [1], [0, 0, 1, 1], [], []>} : vector<8x32xf32>, vector<32x32xf32>, vector<8x32xf32> -> vector<8x32xf32>
    %cst_40 = arith.constant dense<0.000000e+00> : vector<8x8xf32>
    %47 = tpu.matmul %46, %45, %cst_40 {dimension_numbers = #tpu.dot_dimension_numbers<[1], [1], [0], [0], [0, 0, 1, 0], [], []>} : vector<8x32xf32>, vector<8x32xf32>, vector<8x8xf32> -> vector<8x8xf32>
    %48 = arith.addf %43, %47 : vector<8x8xf32>
    %c9 = arith.constant 9 : index
    %c0_41 = arith.constant 0 : index
    %c0_42 = arith.constant 0 : index
    %49 = vector.load %arg0[%c9, %c0_41, %c0_42] : memref<16x8x32xf32, #tpu.memory_space<vmem>>, vector<1x8x32xf32>
    %50 = vector.shape_cast %49 : vector<1x8x32xf32> to vector<8x32xf32>
    %cst_43 = arith.constant dense<0.000000e+00> : vector<8x32xf32>
    %51 = tpu.matmul %50, %2, %cst_43 {dimension_numbers = #tpu.dot_dimension_numbers<[1], [0], [0], [1], [0, 0, 1, 1], [], []>} : vector<8x32xf32>, vector<32x32xf32>, vector<8x32xf32> -> vector<8x32xf32>
    %cst_44 = arith.constant dense<0.000000e+00> : vector<8x8xf32>
    %52 = tpu.matmul %51, %50, %cst_44 {dimension_numbers = #tpu.dot_dimension_numbers<[1], [1], [0], [0], [0, 0, 1, 0], [], []>} : vector<8x32xf32>, vector<8x32xf32>, vector<8x8xf32> -> vector<8x8xf32>
    %53 = arith.addf %48, %52 : vector<8x8xf32>
    %c10 = arith.constant 10 : index
    %c0_45 = arith.constant 0 : index
    %c0_46 = arith.constant 0 : index
    %54 = vector.load %arg0[%c10, %c0_45, %c0_46] : memref<16x8x32xf32, #tpu.memory_space<vmem>>, vector<1x8x32xf32>
    %55 = vector.shape_cast %54 : vector<1x8x32xf32> to vector<8x32xf32>
    %cst_47 = arith.constant dense<0.000000e+00> : vector<8x32xf32>
    %56 = tpu.matmul %55, %2, %cst_47 {dimension_numbers = #tpu.dot_dimension_numbers<[1], [0], [0], [1], [0, 0, 1, 1], [], []>} : vector<8x32xf32>, vector<32x32xf32>, vector<8x32xf32> -> vector<8x32xf32>
    %cst_48 = arith.constant dense<0.000000e+00> : vector<8x8xf32>
    %57 = tpu.matmul %56, %55, %cst_48 {dimension_numbers = #tpu.dot_dimension_numbers<[1], [1], [0], [0], [0, 0, 1, 0], [], []>} : vector<8x32xf32>, vector<8x32xf32>, vector<8x8xf32> -> vector<8x8xf32>
    %58 = arith.addf %53, %57 : vector<8x8xf32>
    %c11 = arith.constant 11 : index
    %c0_49 = arith.constant 0 : index
    %c0_50 = arith.constant 0 : index
    %59 = vector.load %arg0[%c11, %c0_49, %c0_50] : memref<16x8x32xf32, #tpu.memory_space<vmem>>, vector<1x8x32xf32>
    %60 = vector.shape_cast %59 : vector<1x8x32xf32> to vector<8x32xf32>
    %cst_51 = arith.constant dense<0.000000e+00> : vector<8x32xf32>
    %61 = tpu.matmul %60, %2, %cst_51 {dimension_numbers = #tpu.dot_dimension_numbers<[1], [0], [0], [1], [0, 0, 1, 1], [], []>} : vector<8x32xf32>, vector<32x32xf32>, vector<8x32xf32> -> vector<8x32xf32>
    %cst_52 = arith.constant dense<0.000000e+00> : vector<8x8xf32>
    %62 = tpu.matmul %61, %60, %cst_52 {dimension_numbers = #tpu.dot_dimension_numbers<[1], [1], [0], [0], [0, 0, 1, 0], [], []>} : vector<8x32xf32>, vector<8x32xf32>, vector<8x8xf32> -> vector<8x8xf32>
    %63 = arith.addf %58, %62 : vector<8x8xf32>
    %c12 = arith.constant 12 : index
    %c0_53 = arith.constant 0 : index
    %c0_54 = arith.constant 0 : index
    %64 = vector.load %arg0[%c12, %c0_53, %c0_54] : memref<16x8x32xf32, #tpu.memory_space<vmem>>, vector<1x8x32xf32>
    %65 = vector.shape_cast %64 : vector<1x8x32xf32> to vector<8x32xf32>
    %cst_55 = arith.constant dense<0.000000e+00> : vector<8x32xf32>
    %66 = tpu.matmul %65, %2, %cst_55 {dimension_numbers = #tpu.dot_dimension_numbers<[1], [0], [0], [1], [0, 0, 1, 1], [], []>} : vector<8x32xf32>, vector<32x32xf32>, vector<8x32xf32> -> vector<8x32xf32>
    %cst_56 = arith.constant dense<0.000000e+00> : vector<8x8xf32>
    %67 = tpu.matmul %66, %65, %cst_56 {dimension_numbers = #tpu.dot_dimension_numbers<[1], [1], [0], [0], [0, 0, 1, 0], [], []>} : vector<8x32xf32>, vector<8x32xf32>, vector<8x8xf32> -> vector<8x8xf32>
    %68 = arith.addf %63, %67 : vector<8x8xf32>
    %c13 = arith.constant 13 : index
    %c0_57 = arith.constant 0 : index
    %c0_58 = arith.constant 0 : index
    %69 = vector.load %arg0[%c13, %c0_57, %c0_58] : memref<16x8x32xf32, #tpu.memory_space<vmem>>, vector<1x8x32xf32>
    %70 = vector.shape_cast %69 : vector<1x8x32xf32> to vector<8x32xf32>
    %cst_59 = arith.constant dense<0.000000e+00> : vector<8x32xf32>
    %71 = tpu.matmul %70, %2, %cst_59 {dimension_numbers = #tpu.dot_dimension_numbers<[1], [0], [0], [1], [0, 0, 1, 1], [], []>} : vector<8x32xf32>, vector<32x32xf32>, vector<8x32xf32> -> vector<8x32xf32>
    %cst_60 = arith.constant dense<0.000000e+00> : vector<8x8xf32>
    %72 = tpu.matmul %71, %70, %cst_60 {dimension_numbers = #tpu.dot_dimension_numbers<[1], [1], [0], [0], [0, 0, 1, 0], [], []>} : vector<8x32xf32>, vector<8x32xf32>, vector<8x8xf32> -> vector<8x8xf32>
    %73 = arith.addf %68, %72 : vector<8x8xf32>
    %c14 = arith.constant 14 : index
    %c0_61 = arith.constant 0 : index
    %c0_62 = arith.constant 0 : index
    %74 = vector.load %arg0[%c14, %c0_61, %c0_62] : memref<16x8x32xf32, #tpu.memory_space<vmem>>, vector<1x8x32xf32>
    %75 = vector.shape_cast %74 : vector<1x8x32xf32> to vector<8x32xf32>
    %cst_63 = arith.constant dense<0.000000e+00> : vector<8x32xf32>
    %76 = tpu.matmul %75, %2, %cst_63 {dimension_numbers = #tpu.dot_dimension_numbers<[1], [0], [0], [1], [0, 0, 1, 1], [], []>} : vector<8x32xf32>, vector<32x32xf32>, vector<8x32xf32> -> vector<8x32xf32>
    %cst_64 = arith.constant dense<0.000000e+00> : vector<8x8xf32>
    %77 = tpu.matmul %76, %75, %cst_64 {dimension_numbers = #tpu.dot_dimension_numbers<[1], [1], [0], [0], [0, 0, 1, 0], [], []>} : vector<8x32xf32>, vector<8x32xf32>, vector<8x8xf32> -> vector<8x8xf32>
    %78 = arith.addf %73, %77 : vector<8x8xf32>
    %c15 = arith.constant 15 : index
    %c0_65 = arith.constant 0 : index
    %c0_66 = arith.constant 0 : index
    %79 = vector.load %arg0[%c15, %c0_65, %c0_66] : memref<16x8x32xf32, #tpu.memory_space<vmem>>, vector<1x8x32xf32>
    %80 = vector.shape_cast %79 : vector<1x8x32xf32> to vector<8x32xf32>
    %cst_67 = arith.constant dense<0.000000e+00> : vector<8x32xf32>
    %81 = tpu.matmul %80, %2, %cst_67 {dimension_numbers = #tpu.dot_dimension_numbers<[1], [0], [0], [1], [0, 0, 1, 1], [], []>} : vector<8x32xf32>, vector<32x32xf32>, vector<8x32xf32> -> vector<8x32xf32>
    %cst_68 = arith.constant dense<0.000000e+00> : vector<8x8xf32>
    %82 = tpu.matmul %81, %80, %cst_68 {dimension_numbers = #tpu.dot_dimension_numbers<[1], [1], [0], [0], [0, 0, 1, 0], [], []>} : vector<8x32xf32>, vector<8x32xf32>, vector<8x8xf32> -> vector<8x8xf32>
    %83 = arith.addf %78, %82 : vector<8x8xf32>
    %cst_69 = arith.constant 0.0441941731 : f32
    %84 = vector.broadcast %cst_69 : f32 to vector<8x8xf32>
    %85 = arith.mulf %83, %84 : vector<8x8xf32>
    %cst_70 = arith.constant dense<0xFF800000> : vector<8xf32>
    %86 = vector.multi_reduction <maximumf>, %85, %cst_70 [1] : vector<8x8xf32> to vector<8xf32>
    %87 = vector.shape_cast %86 : vector<8xf32> to vector<8x1xf32>
    %88 = vector.broadcast %87 : vector<8x1xf32> to vector<8x8xf32>
    %89 = arith.subf %85, %88 : vector<8x8xf32>
    %90 = math.exp %89 : vector<8x8xf32>
    %cst_71 = arith.constant dense<0.000000e+00> : vector<8xf32>
    %91 = vector.multi_reduction <add>, %90, %cst_71 [1] : vector<8x8xf32> to vector<8xf32>
    %92 = vector.shape_cast %91 : vector<8xf32> to vector<8x1xf32>
    %93 = vector.broadcast %92 : vector<8x1xf32> to vector<8x8xf32>
    %94 = arith.divf %90, %93 : vector<8x8xf32>
    %c0_72 = arith.constant 0 : index
    %c0_73 = arith.constant 0 : index
    %95 = vector.load %arg3[%c0_72, %c0_73] : memref<8x8xf32, #tpu.memory_space<vmem>>, vector<8x8xf32>
    tpu.vector_store %arg3[%c0_72, %c0_73], %94 {strides = array<i32>} : memref<8x8xf32, #tpu.memory_space<vmem>>, vector<8x8xf32>,
    return
  }
}

module attributes {stable_mosaic.version = 11 : i64} {
  func.func @_fused_mix_project_kernel(%arg0: i32, %arg1: memref<8x8xf32, #tpu.memory_space<smem>>, %arg2: memref<32x32xf32, #tpu.memory_space<vmem>>, %arg3: memref<8x32x128xf32, #tpu.memory_space<vmem>>, %arg4: memref<8x32x128xf32, #tpu.memory_space<vmem>>) attributes {dimension_semantics = [#tpu.dimension_semantics<parallel>], iteration_bounds = array<i64: 2>, scalar_prefetch = 0 : i64, scratch_operands = 0 : i64, tpu.core_type = #tpu.core_type<tc>, window_params = [{transform_indices = @transform_0, window_bounds = array<i64: 8, 8>}, {pipeline_mode = #tpu.pipeline_mode<synchronous>, transform_indices = @transform_1, window_bounds = array<i64: 32, 32>}, {transform_indices = @transform_2, window_bounds = array<i64: 8, 32, 128>}, {transform_indices = @transform_3, window_bounds = array<i64: 8, 32, 128>}]} {
    %c0 = arith.constant 0 : index
    %c0_0 = arith.constant 0 : index
    %0 = vector.load %arg2[%c0, %c0_0] : memref<32x32xf32, #tpu.memory_space<vmem>>, vector<32x32xf32>
    %c0_1 = arith.constant 0 : index
    %c0_2 = arith.constant 0 : index
    %1 = memref.load %arg1[%c0_1, %c0_2] : memref<8x8xf32, #tpu.memory_space<smem>>
    %c0_3 = arith.constant 0 : index
    %c0_4 = arith.constant 0 : index
    %c0_5 = arith.constant 0 : index
    %2 = vector.load %arg3[%c0_3, %c0_4, %c0_5] : memref<8x32x128xf32, #tpu.memory_space<vmem>>, vector<1x32x128xf32>
    %3 = vector.shape_cast %2 : vector<1x32x128xf32> to vector<32x128xf32>
    %4 = vector.broadcast %1 : f32 to vector<32x128xf32>
    %5 = arith.mulf %4, %3 : vector<32x128xf32>
    %c0_6 = arith.constant 0 : index
    %c1 = arith.constant 1 : index
    %6 = memref.load %arg1[%c0_6, %c1] : memref<8x8xf32, #tpu.memory_space<smem>>
    %c1_7 = arith.constant 1 : index
    %c0_8 = arith.constant 0 : index
    %c0_9 = arith.constant 0 : index
    %7 = vector.load %arg3[%c1_7, %c0_8, %c0_9] : memref<8x32x128xf32, #tpu.memory_space<vmem>>, vector<1x32x128xf32>
    %8 = vector.shape_cast %7 : vector<1x32x128xf32> to vector<32x128xf32>
    %9 = vector.broadcast %6 : f32 to vector<32x128xf32>
    %10 = arith.mulf %9, %8 : vector<32x128xf32>
    %11 = arith.addf %5, %10 : vector<32x128xf32>
    %c0_10 = arith.constant 0 : index
    %c2 = arith.constant 2 : index
    %12 = memref.load %arg1[%c0_10, %c2] : memref<8x8xf32, #tpu.memory_space<smem>>
    %c2_11 = arith.constant 2 : index
    %c0_12 = arith.constant 0 : index
    %c0_13 = arith.constant 0 : index
    %13 = vector.load %arg3[%c2_11, %c0_12, %c0_13] : memref<8x32x128xf32, #tpu.memory_space<vmem>>, vector<1x32x128xf32>
    %14 = vector.shape_cast %13 : vector<1x32x128xf32> to vector<32x128xf32>
    %15 = vector.broadcast %12 : f32 to vector<32x128xf32>
    %16 = arith.mulf %15, %14 : vector<32x128xf32>
    %17 = arith.addf %11, %16 : vector<32x128xf32>
    %c0_14 = arith.constant 0 : index
    %c3 = arith.constant 3 : index
    %18 = memref.load %arg1[%c0_14, %c3] : memref<8x8xf32, #tpu.memory_space<smem>>
    %c3_15 = arith.constant 3 : index
    %c0_16 = arith.constant 0 : index
    %c0_17 = arith.constant 0 : index
    %19 = vector.load %arg3[%c3_15, %c0_16, %c0_17] : memref<8x32x128xf32, #tpu.memory_space<vmem>>, vector<1x32x128xf32>
    %20 = vector.shape_cast %19 : vector<1x32x128xf32> to vector<32x128xf32>
    %21 = vector.broadcast %18 : f32 to vector<32x128xf32>
    %22 = arith.mulf %21, %20 : vector<32x128xf32>
    %23 = arith.addf %17, %22 : vector<32x128xf32>
    %c0_18 = arith.constant 0 : index
    %c4 = arith.constant 4 : index
    %24 = memref.load %arg1[%c0_18, %c4] : memref<8x8xf32, #tpu.memory_space<smem>>
    %c4_19 = arith.constant 4 : index
    %c0_20 = arith.constant 0 : index
    %c0_21 = arith.constant 0 : index
    %25 = vector.load %arg3[%c4_19, %c0_20, %c0_21] : memref<8x32x128xf32, #tpu.memory_space<vmem>>, vector<1x32x128xf32>
    %26 = vector.shape_cast %25 : vector<1x32x128xf32> to vector<32x128xf32>
    %27 = vector.broadcast %24 : f32 to vector<32x128xf32>
    %28 = arith.mulf %27, %26 : vector<32x128xf32>
    %29 = arith.addf %23, %28 : vector<32x128xf32>
    %c0_22 = arith.constant 0 : index
    %c5 = arith.constant 5 : index
    %30 = memref.load %arg1[%c0_22, %c5] : memref<8x8xf32, #tpu.memory_space<smem>>
    %c5_23 = arith.constant 5 : index
    %c0_24 = arith.constant 0 : index
    %c0_25 = arith.constant 0 : index
    %31 = vector.load %arg3[%c5_23, %c0_24, %c0_25] : memref<8x32x128xf32, #tpu.memory_space<vmem>>, vector<1x32x128xf32>
    %32 = vector.shape_cast %31 : vector<1x32x128xf32> to vector<32x128xf32>
    %33 = vector.broadcast %30 : f32 to vector<32x128xf32>
    %34 = arith.mulf %33, %32 : vector<32x128xf32>
    %35 = arith.addf %29, %34 : vector<32x128xf32>
    %c0_26 = arith.constant 0 : index
    %c6 = arith.constant 6 : index
    %36 = memref.load %arg1[%c0_26, %c6] : memref<8x8xf32, #tpu.memory_space<smem>>
    %c6_27 = arith.constant 6 : index
    %c0_28 = arith.constant 0 : index
    %c0_29 = arith.constant 0 : index
    %37 = vector.load %arg3[%c6_27, %c0_28, %c0_29] : memref<8x32x128xf32, #tpu.memory_space<vmem>>, vector<1x32x128xf32>
    %38 = vector.shape_cast %37 : vector<1x32x128xf32> to vector<32x128xf32>
    %39 = vector.broadcast %36 : f32 to vector<32x128xf32>
    %40 = arith.mulf %39, %38 : vector<32x128xf32>
    %41 = arith.addf %35, %40 : vector<32x128xf32>
    %c0_30 = arith.constant 0 : index
    %c7 = arith.constant 7 : index
    %42 = memref.load %arg1[%c0_30, %c7] : memref<8x8xf32, #tpu.memory_space<smem>>
    %c7_31 = arith.constant 7 : index
    %c0_32 = arith.constant 0 : index
    %c0_33 = arith.constant 0 : index
    %43 = vector.load %arg3[%c7_31, %c0_32, %c0_33] : memref<8x32x128xf32, #tpu.memory_space<vmem>>, vector<1x32x128xf32>
    %44 = vector.shape_cast %43 : vector<1x32x128xf32> to vector<32x128xf32>
    %45 = vector.broadcast %42 : f32 to vector<32x128xf32>
    %46 = arith.mulf %45, %44 : vector<32x128xf32>
    %47 = arith.addf %41, %46 : vector<32x128xf32>
    %cst = arith.constant dense<0.000000e+00> : vector<32x128xf32>
    %48 = tpu.matmul %0, %47, %cst {dimension_numbers = #tpu.dot_dimension_numbers<[1], [0], [0], [1], [0, 0, 1, 1], [], []>} : vector<32x32xf32>, vector<32x128xf32>, vector<32x128xf32> -> vector<32x128xf32>
    %c0_34 = arith.constant 0 : index
    %c0_35 = arith.constant 0 : index
    %c0_36 = arith.constant 0 : index
    %49 = vector.load %arg4[%c0_34, %c0_35, %c0_36] : memref<8x32x128xf32, #tpu.memory_space<vmem>>, vector<1x32x128xf32>
    %50 = vector.shape_cast %49 : vector<1x32x128xf32> to vector<32x128xf32>
    %51 = vector.shape_cast %48 : vector<32x128xf32> to vector<1x32x128xf32>
    tpu.vector_store %arg4[%c0_34, %c0_35, %c0_36], %51 {strides = array<i32>} : memref<8x32x128xf32, #tpu.memory_space<vmem>>, vector<1x32x128xf32>,
    %c1_37 = arith.constant 1 : index
    %c0_38 = arith.constant 0 : index
    %52 = memref.load %arg1[%c1_37, %c0_38] : memref<8x8xf32, #tpu.memory_space<smem>>
    %c0_39 = arith.constant 0 : index
    %c0_40 = arith.constant 0 : index
    %c0_41 = arith.constant 0 : index
    %53 = vector.load %arg3[%c0_39, %c0_40, %c0_41] : memref<8x32x128xf32, #tpu.memory_space<vmem>>, vector<1x32x128xf32>
    %54 = vector.shape_cast %53 : vector<1x32x128xf32> to vector<32x128xf32>
    %55 = vector.broadcast %52 : f32 to vector<32x128xf32>
    %56 = arith.mulf %55, %54 : vector<32x128xf32>
    %c1_42 = arith.constant 1 : index
    %c1_43 = arith.constant 1 : index
    %57 = memref.load %arg1[%c1_42, %c1_43] : memref<8x8xf32, #tpu.memory_space<smem>>
    %c1_44 = arith.constant 1 : index
    %c0_45 = arith.constant 0 : index
    %c0_46 = arith.constant 0 : index
    %58 = vector.load %arg3[%c1_44, %c0_45, %c0_46] : memref<8x32x128xf32, #tpu.memory_space<vmem>>, vector<1x32x128xf32>
    %59 = vector.shape_cast %58 : vector<1x32x128xf32> to vector<32x128xf32>
    %60 = vector.broadcast %57 : f32 to vector<32x128xf32>
    %61 = arith.mulf %60, %59 : vector<32x128xf32>
    %62 = arith.addf %56, %61 : vector<32x128xf32>
    %c1_47 = arith.constant 1 : index
    %c2_48 = arith.constant 2 : index
    %63 = memref.load %arg1[%c1_47, %c2_48] : memref<8x8xf32, #tpu.memory_space<smem>>
    %c2_49 = arith.constant 2 : index
    %c0_50 = arith.constant 0 : index
    %c0_51 = arith.constant 0 : index
    %64 = vector.load %arg3[%c2_49, %c0_50, %c0_51] : memref<8x32x128xf32, #tpu.memory_space<vmem>>, vector<1x32x128xf32>
    %65 = vector.shape_cast %64 : vector<1x32x128xf32> to vector<32x128xf32>
    %66 = vector.broadcast %63 : f32 to vector<32x128xf32>
    %67 = arith.mulf %66, %65 : vector<32x128xf32>
    %68 = arith.addf %62, %67 : vector<32x128xf32>
    %c1_52 = arith.constant 1 : index
    %c3_53 = arith.constant 3 : index
    %69 = memref.load %arg1[%c1_52, %c3_53] : memref<8x8xf32, #tpu.memory_space<smem>>
    %c3_54 = arith.constant 3 : index
    %c0_55 = arith.constant 0 : index
    %c0_56 = arith.constant 0 : index
    %70 = vector.load %arg3[%c3_54, %c0_55, %c0_56] : memref<8x32x128xf32, #tpu.memory_space<vmem>>, vector<1x32x128xf32>
    %71 = vector.shape_cast %70 : vector<1x32x128xf32> to vector<32x128xf32>
    %72 = vector.broadcast %69 : f32 to vector<32x128xf32>
    %73 = arith.mulf %72, %71 : vector<32x128xf32>
    %74 = arith.addf %68, %73 : vector<32x128xf32>
    %c1_57 = arith.constant 1 : index
    %c4_58 = arith.constant 4 : index
    %75 = memref.load %arg1[%c1_57, %c4_58] : memref<8x8xf32, #tpu.memory_space<smem>>
    %c4_59 = arith.constant 4 : index
    %c0_60 = arith.constant 0 : index
    %c0_61 = arith.constant 0 : index
    %76 = vector.load %arg3[%c4_59, %c0_60, %c0_61] : memref<8x32x128xf32, #tpu.memory_space<vmem>>, vector<1x32x128xf32>
    %77 = vector.shape_cast %76 : vector<1x32x128xf32> to vector<32x128xf32>
    %78 = vector.broadcast %75 : f32 to vector<32x128xf32>
    %79 = arith.mulf %78, %77 : vector<32x128xf32>
    %80 = arith.addf %74, %79 : vector<32x128xf32>
    %c1_62 = arith.constant 1 : index
    %c5_63 = arith.constant 5 : index
    %81 = memref.load %arg1[%c1_62, %c5_63] : memref<8x8xf32, #tpu.memory_space<smem>>
    %c5_64 = arith.constant 5 : index
    %c0_65 = arith.constant 0 : index
    %c0_66 = arith.constant 0 : index
    %82 = vector.load %arg3[%c5_64, %c0_65, %c0_66] : memref<8x32x128xf32, #tpu.memory_space<vmem>>, vector<1x32x128xf32>
    %83 = vector.shape_cast %82 : vector<1x32x128xf32> to vector<32x128xf32>
    %84 = vector.broadcast %81 : f32 to vector<32x128xf32>
    %85 = arith.mulf %84, %83 : vector<32x128xf32>
    %86 = arith.addf %80, %85 : vector<32x128xf32>
    %c1_67 = arith.constant 1 : index
    %c6_68 = arith.constant 6 : index
    %87 = memref.load %arg1[%c1_67, %c6_68] : memref<8x8xf32, #tpu.memory_space<smem>>
    %c6_69 = arith.constant 6 : index
    %c0_70 = arith.constant 0 : index
    %c0_71 = arith.constant 0 : index
    %88 = vector.load %arg3[%c6_69, %c0_70, %c0_71] : memref<8x32x128xf32, #tpu.memory_space<vmem>>, vector<1x32x128xf32>
    %89 = vector.shape_cast %88 : vector<1x32x128xf32> to vector<32x128xf32>
    %90 = vector.broadcast %87 : f32 to vector<32x128xf32>
    %91 = arith.mulf %90, %89 : vector<32x128xf32>
    %92 = arith.addf %86, %91 : vector<32x128xf32>
    %c1_72 = arith.constant 1 : index
    %c7_73 = arith.constant 7 : index
    %93 = memref.load %arg1[%c1_72, %c7_73] : memref<8x8xf32, #tpu.memory_space<smem>>
    %c7_74 = arith.constant 7 : index
    %c0_75 = arith.constant 0 : index
    %c0_76 = arith.constant 0 : index
    %94 = vector.load %arg3[%c7_74, %c0_75, %c0_76] : memref<8x32x128xf32, #tpu.memory_space<vmem>>, vector<1x32x128xf32>
    %95 = vector.shape_cast %94 : vector<1x32x128xf32> to vector<32x128xf32>
    %96 = vector.broadcast %93 : f32 to vector<32x128xf32>
    %97 = arith.mulf %96, %95 : vector<32x128xf32>
    %98 = arith.addf %92, %97 : vector<32x128xf32>
    %cst_77 = arith.constant dense<0.000000e+00> : vector<32x128xf32>
    %99 = tpu.matmul %0, %98, %cst_77 {dimension_numbers = #tpu.dot_dimension_numbers<[1], [0], [0], [1], [0, 0, 1, 1], [], []>} : vector<32x32xf32>, vector<32x128xf32>, vector<32x128xf32> -> vector<32x128xf32>
    %c1_78 = arith.constant 1 : index
    %c0_79 = arith.constant 0 : index
    %c0_80 = arith.constant 0 : index
    %100 = vector.load %arg4[%c1_78, %c0_79, %c0_80] : memref<8x32x128xf32, #tpu.memory_space<vmem>>, vector<1x32x128xf32>
    %101 = vector.shape_cast %100 : vector<1x32x128xf32> to vector<32x128xf32>
    %102 = vector.shape_cast %99 : vector<32x128xf32> to vector<1x32x128xf32>
    tpu.vector_store %arg4[%c1_78, %c0_79, %c0_80], %102 {strides = array<i32>} : memref<8x32x128xf32, #tpu.memory_space<vmem>>, vector<1x32x128xf32>,
    %c2_81 = arith.constant 2 : index
    %c0_82 = arith.constant 0 : index
    %103 = memref.load %arg1[%c2_81, %c0_82] : memref<8x8xf32, #tpu.memory_space<smem>>
    %c0_83 = arith.constant 0 : index
    %c0_84 = arith.constant 0 : index
    %c0_85 = arith.constant 0 : index
    %104 = vector.load %arg3[%c0_83, %c0_84, %c0_85] : memref<8x32x128xf32, #tpu.memory_space<vmem>>, vector<1x32x128xf32>
    %105 = vector.shape_cast %104 : vector<1x32x128xf32> to vector<32x128xf32>
    %106 = vector.broadcast %103 : f32 to vector<32x128xf32>
    %107 = arith.mulf %106, %105 : vector<32x128xf32>
    %c2_86 = arith.constant 2 : index
    %c1_87 = arith.constant 1 : index
    %108 = memref.load %arg1[%c2_86, %c1_87] : memref<8x8xf32, #tpu.memory_space<smem>>
    %c1_88 = arith.constant 1 : index
    %c0_89 = arith.constant 0 : index
    %c0_90 = arith.constant 0 : index
    %109 = vector.load %arg3[%c1_88, %c0_89, %c0_90] : memref<8x32x128xf32, #tpu.memory_space<vmem>>, vector<1x32x128xf32>
    %110 = vector.shape_cast %109 : vector<1x32x128xf32> to vector<32x128xf32>
    %111 = vector.broadcast %108 : f32 to vector<32x128xf32>
    %112 = arith.mulf %111, %110 : vector<32x128xf32>
    %113 = arith.addf %107, %112 : vector<32x128xf32>
    %c2_91 = arith.constant 2 : index
    %c2_92 = arith.constant 2 : index
    %114 = memref.load %arg1[%c2_91, %c2_92] : memref<8x8xf32, #tpu.memory_space<smem>>
    %c2_93 = arith.constant 2 : index
    %c0_94 = arith.constant 0 : index
    %c0_95 = arith.constant 0 : index
    %115 = vector.load %arg3[%c2_93, %c0_94, %c0_95] : memref<8x32x128xf32, #tpu.memory_space<vmem>>, vector<1x32x128xf32>
    %116 = vector.shape_cast %115 : vector<1x32x128xf32> to vector<32x128xf32>
    %117 = vector.broadcast %114 : f32 to vector<32x128xf32>
    %118 = arith.mulf %117, %116 : vector<32x128xf32>
    %119 = arith.addf %113, %118 : vector<32x128xf32>
    %c2_96 = arith.constant 2 : index
    %c3_97 = arith.constant 3 : index
    %120 = memref.load %arg1[%c2_96, %c3_97] : memref<8x8xf32, #tpu.memory_space<smem>>
    %c3_98 = arith.constant 3 : index
    %c0_99 = arith.constant 0 : index
    %c0_100 = arith.constant 0 : index
    %121 = vector.load %arg3[%c3_98, %c0_99, %c0_100] : memref<8x32x128xf32, #tpu.memory_space<vmem>>, vector<1x32x128xf32>
    %122 = vector.shape_cast %121 : vector<1x32x128xf32> to vector<32x128xf32>
    %123 = vector.broadcast %120 : f32 to vector<32x128xf32>
    %124 = arith.mulf %123, %122 : vector<32x128xf32>
    %125 = arith.addf %119, %124 : vector<32x128xf32>
    %c2_101 = arith.constant 2 : index
    %c4_102 = arith.constant 4 : index
    %126 = memref.load %arg1[%c2_101, %c4_102] : memref<8x8xf32, #tpu.memory_space<smem>>
    %c4_103 = arith.constant 4 : index
    %c0_104 = arith.constant 0 : index
    %c0_105 = arith.constant 0 : index
    %127 = vector.load %arg3[%c4_103, %c0_104, %c0_105] : memref<8x32x128xf32, #tpu.memory_space<vmem>>, vector<1x32x128xf32>
    %128 = vector.shape_cast %127 : vector<1x32x128xf32> to vector<32x128xf32>
    %129 = vector.broadcast %126 : f32 to vector<32x128xf32>
    %130 = arith.mulf %129, %128 : vector<32x128xf32>
    %131 = arith.addf %125, %130 : vector<32x128xf32>
    %c2_106 = arith.constant 2 : index
    %c5_107 = arith.constant 5 : index
    %132 = memref.load %arg1[%c2_106, %c5_107] : memref<8x8xf32, #tpu.memory_space<smem>>
    %c5_108 = arith.constant 5 : index
    %c0_109 = arith.constant 0 : index
    %c0_110 = arith.constant 0 : index
    %133 = vector.load %arg3[%c5_108, %c0_109, %c0_110] : memref<8x32x128xf32, #tpu.memory_space<vmem>>, vector<1x32x128xf32>
    %134 = vector.shape_cast %133 : vector<1x32x128xf32> to vector<32x128xf32>
    %135 = vector.broadcast %132 : f32 to vector<32x128xf32>
    %136 = arith.mulf %135, %134 : vector<32x128xf32>
    %137 = arith.addf %131, %136 : vector<32x128xf32>
    %c2_111 = arith.constant 2 : index
    %c6_112 = arith.constant 6 : index
    %138 = memref.load %arg1[%c2_111, %c6_112] : memref<8x8xf32, #tpu.memory_space<smem>>
    %c6_113 = arith.constant 6 : index
    %c0_114 = arith.constant 0 : index
    %c0_115 = arith.constant 0 : index
    %139 = vector.load %arg3[%c6_113, %c0_114, %c0_115] : memref<8x32x128xf32, #tpu.memory_space<vmem>>, vector<1x32x128xf32>
    %140 = vector.shape_cast %139 : vector<1x32x128xf32> to vector<32x128xf32>
    %141 = vector.broadcast %138 : f32 to vector<32x128xf32>
    %142 = arith.mulf %141, %140 : vector<32x128xf32>
    %143 = arith.addf %137, %142 : vector<32x128xf32>
    %c2_116 = arith.constant 2 : index
    %c7_117 = arith.constant 7 : index
    %144 = memref.load %arg1[%c2_116, %c7_117] : memref<8x8xf32, #tpu.memory_space<smem>>
    %c7_118 = arith.constant 7 : index
    %c0_119 = arith.constant 0 : index
    %c0_120 = arith.constant 0 : index
    %145 = vector.load %arg3[%c7_118, %c0_119, %c0_120] : memref<8x32x128xf32, #tpu.memory_space<vmem>>, vector<1x32x128xf32>
    %146 = vector.shape_cast %145 : vector<1x32x128xf32> to vector<32x128xf32>
    %147 = vector.broadcast %144 : f32 to vector<32x128xf32>
    %148 = arith.mulf %147, %146 : vector<32x128xf32>
    %149 = arith.addf %143, %148 : vector<32x128xf32>
    %cst_121 = arith.constant dense<0.000000e+00> : vector<32x128xf32>
    %150 = tpu.matmul %0, %149, %cst_121 {dimension_numbers = #tpu.dot_dimension_numbers<[1], [0], [0], [1], [0, 0, 1, 1], [], []>} : vector<32x32xf32>, vector<32x128xf32>, vector<32x128xf32> -> vector<32x128xf32>
    %c2_122 = arith.constant 2 : index
    %c0_123 = arith.constant 0 : index
    %c0_124 = arith.constant 0 : index
    %151 = vector.load %arg4[%c2_122, %c0_123, %c0_124] : memref<8x32x128xf32, #tpu.memory_space<vmem>>, vector<1x32x128xf32>
    %152 = vector.shape_cast %151 : vector<1x32x128xf32> to vector<32x128xf32>
    %153 = vector.shape_cast %150 : vector<32x128xf32> to vector<1x32x128xf32>
    tpu.vector_store %arg4[%c2_122, %c0_123, %c0_124], %153 {strides = array<i32>} : memref<8x32x128xf32, #tpu.memory_space<vmem>>, vector<1x32x128xf32>,
    %c3_125 = arith.constant 3 : index
    %c0_126 = arith.constant 0 : index
    %154 = memref.load %arg1[%c3_125, %c0_126] : memref<8x8xf32, #tpu.memory_space<smem>>
    %c0_127 = arith.constant 0 : index
    %c0_128 = arith.constant 0 : index
    %c0_129 = arith.constant 0 : index
    %155 = vector.load %arg3[%c0_127, %c0_128, %c0_129] : memref<8x32x128xf32, #tpu.memory_space<vmem>>, vector<1x32x128xf32>
    %156 = vector.shape_cast %155 : vector<1x32x128xf32> to vector<32x128xf32>
    %157 = vector.broadcast %154 : f32 to vector<32x128xf32>
    %158 = arith.mulf %157, %156 : vector<32x128xf32>
    %c3_130 = arith.constant 3 : index
    %c1_131 = arith.constant 1 : index
    %159 = memref.load %arg1[%c3_130, %c1_131] : memref<8x8xf32, #tpu.memory_space<smem>>
    %c1_132 = arith.constant 1 : index
    %c0_133 = arith.constant 0 : index
    %c0_134 = arith.constant 0 : index
    %160 = vector.load %arg3[%c1_132, %c0_133, %c0_134] : memref<8x32x128xf32, #tpu.memory_space<vmem>>, vector<1x32x128xf32>
    %161 = vector.shape_cast %160 : vector<1x32x128xf32> to vector<32x128xf32>
    %162 = vector.broadcast %159 : f32 to vector<32x128xf32>
    %163 = arith.mulf %162, %161 : vector<32x128xf32>
    %164 = arith.addf %158, %163 : vector<32x128xf32>
    %c3_135 = arith.constant 3 : index
    %c2_136 = arith.constant 2 : index
    %165 = memref.load %arg1[%c3_135, %c2_136] : memref<8x8xf32, #tpu.memory_space<smem>>
    %c2_137 = arith.constant 2 : index
    %c0_138 = arith.constant 0 : index
    %c0_139 = arith.constant 0 : index
    %166 = vector.load %arg3[%c2_137, %c0_138, %c0_139] : memref<8x32x128xf32, #tpu.memory_space<vmem>>, vector<1x32x128xf32>
    %167 = vector.shape_cast %166 : vector<1x32x128xf32> to vector<32x128xf32>
    %168 = vector.broadcast %165 : f32 to vector<32x128xf32>
    %169 = arith.mulf %168, %167 : vector<32x128xf32>
    %170 = arith.addf %164, %169 : vector<32x128xf32>
    %c3_140 = arith.constant 3 : index
    %c3_141 = arith.constant 3 : index
    %171 = memref.load %arg1[%c3_140, %c3_141] : memref<8x8xf32, #tpu.memory_space<smem>>
    %c3_142 = arith.constant 3 : index
    %c0_143 = arith.constant 0 : index
    %c0_144 = arith.constant 0 : index
    %172 = vector.load %arg3[%c3_142, %c0_143, %c0_144] : memref<8x32x128xf32, #tpu.memory_space<vmem>>, vector<1x32x128xf32>
    %173 = vector.shape_cast %172 : vector<1x32x128xf32> to vector<32x128xf32>
    %174 = vector.broadcast %171 : f32 to vector<32x128xf32>
    %175 = arith.mulf %174, %173 : vector<32x128xf32>
    %176 = arith.addf %170, %175 : vector<32x128xf32>
    %c3_145 = arith.constant 3 : index
    %c4_146 = arith.constant 4 : index
    %177 = memref.load %arg1[%c3_145, %c4_146] : memref<8x8xf32, #tpu.memory_space<smem>>
    %c4_147 = arith.constant 4 : index
    %c0_148 = arith.constant 0 : index
    %c0_149 = arith.constant 0 : index
    %178 = vector.load %arg3[%c4_147, %c0_148, %c0_149] : memref<8x32x128xf32, #tpu.memory_space<vmem>>, vector<1x32x128xf32>
    %179 = vector.shape_cast %178 : vector<1x32x128xf32> to vector<32x128xf32>
    %180 = vector.broadcast %177 : f32 to vector<32x128xf32>
    %181 = arith.mulf %180, %179 : vector<32x128xf32>
    %182 = arith.addf %176, %181 : vector<32x128xf32>
    %c3_150 = arith.constant 3 : index
    %c5_151 = arith.constant 5 : index
    %183 = memref.load %arg1[%c3_150, %c5_151] : memref<8x8xf32, #tpu.memory_space<smem>>
    %c5_152 = arith.constant 5 : index
    %c0_153 = arith.constant 0 : index
    %c0_154 = arith.constant 0 : index
    %184 = vector.load %arg3[%c5_152, %c0_153, %c0_154] : memref<8x32x128xf32, #tpu.memory_space<vmem>>, vector<1x32x128xf32>
    %185 = vector.shape_cast %184 : vector<1x32x128xf32> to vector<32x128xf32>
    %186 = vector.broadcast %183 : f32 to vector<32x128xf32>
    %187 = arith.mulf %186, %185 : vector<32x128xf32>
    %188 = arith.addf %182, %187 : vector<32x128xf32>
    %c3_155 = arith.constant 3 : index
    %c6_156 = arith.constant 6 : index
    %189 = memref.load %arg1[%c3_155, %c6_156] : memref<8x8xf32, #tpu.memory_space<smem>>
    %c6_157 = arith.constant 6 : index
    %c0_158 = arith.constant 0 : index
    %c0_159 = arith.constant 0 : index
    %190 = vector.load %arg3[%c6_157, %c0_158, %c0_159] : memref<8x32x128xf32, #tpu.memory_space<vmem>>, vector<1x32x128xf32>
    %191 = vector.shape_cast %190 : vector<1x32x128xf32> to vector<32x128xf32>
    %192 = vector.broadcast %189 : f32 to vector<32x128xf32>
    %193 = arith.mulf %192, %191 : vector<32x128xf32>
    %194 = arith.addf %188, %193 : vector<32x128xf32>
    %c3_160 = arith.constant 3 : index
    %c7_161 = arith.constant 7 : index
    %195 = memref.load %arg1[%c3_160, %c7_161] : memref<8x8xf32, #tpu.memory_space<smem>>
    %c7_162 = arith.constant 7 : index
    %c0_163 = arith.constant 0 : index
    %c0_164 = arith.constant 0 : index
    %196 = vector.load %arg3[%c7_162, %c0_163, %c0_164] : memref<8x32x128xf32, #tpu.memory_space<vmem>>, vector<1x32x128xf32>
    %197 = vector.shape_cast %196 : vector<1x32x128xf32> to vector<32x128xf32>
    %198 = vector.broadcast %195 : f32 to vector<32x128xf32>
    %199 = arith.mulf %198, %197 : vector<32x128xf32>
    %200 = arith.addf %194, %199 : vector<32x128xf32>
    %cst_165 = arith.constant dense<0.000000e+00> : vector<32x128xf32>
    %201 = tpu.matmul %0, %200, %cst_165 {dimension_numbers = #tpu.dot_dimension_numbers<[1], [0], [0], [1], [0, 0, 1, 1], [], []>} : vector<32x32xf32>, vector<32x128xf32>, vector<32x128xf32> -> vector<32x128xf32>
    %c3_166 = arith.constant 3 : index
    %c0_167 = arith.constant 0 : index
    %c0_168 = arith.constant 0 : index
    %202 = vector.load %arg4[%c3_166, %c0_167, %c0_168] : memref<8x32x128xf32, #tpu.memory_space<vmem>>, vector<1x32x128xf32>
    %203 = vector.shape_cast %202 : vector<1x32x128xf32> to vector<32x128xf32>
    %204 = vector.shape_cast %201 : vector<32x128xf32> to vector<1x32x128xf32>
    tpu.vector_store %arg4[%c3_166, %c0_167, %c0_168], %204 {strides = array<i32>} : memref<8x32x128xf32, #tpu.memory_space<vmem>>, vector<1x32x128xf32>,
    %c4_169 = arith.constant 4 : index
    %c0_170 = arith.constant 0 : index
    %205 = memref.load %arg1[%c4_169, %c0_170] : memref<8x8xf32, #tpu.memory_space<smem>>
    %c0_171 = arith.constant 0 : index
    %c0_172 = arith.constant 0 : index
    %c0_173 = arith.constant 0 : index
    %206 = vector.load %arg3[%c0_171, %c0_172, %c0_173] : memref<8x32x128xf32, #tpu.memory_space<vmem>>, vector<1x32x128xf32>
    %207 = vector.shape_cast %206 : vector<1x32x128xf32> to vector<32x128xf32>
    %208 = vector.broadcast %205 : f32 to vector<32x128xf32>
    %209 = arith.mulf %208, %207 : vector<32x128xf32>
    %c4_174 = arith.constant 4 : index
    %c1_175 = arith.constant 1 : index
    %210 = memref.load %arg1[%c4_174, %c1_175] : memref<8x8xf32, #tpu.memory_space<smem>>
    %c1_176 = arith.constant 1 : index
    %c0_177 = arith.constant 0 : index
    %c0_178 = arith.constant 0 : index
    %211 = vector.load %arg3[%c1_176, %c0_177, %c0_178] : memref<8x32x128xf32, #tpu.memory_space<vmem>>, vector<1x32x128xf32>
    %212 = vector.shape_cast %211 : vector<1x32x128xf32> to vector<32x128xf32>
    %213 = vector.broadcast %210 : f32 to vector<32x128xf32>
    %214 = arith.mulf %213, %212 : vector<32x128xf32>
    %215 = arith.addf %209, %214 : vector<32x128xf32>
    %c4_179 = arith.constant 4 : index
    %c2_180 = arith.constant 2 : index
    %216 = memref.load %arg1[%c4_179, %c2_180] : memref<8x8xf32, #tpu.memory_space<smem>>
    %c2_181 = arith.constant 2 : index
    %c0_182 = arith.constant 0 : index
    %c0_183 = arith.constant 0 : index
    %217 = vector.load %arg3[%c2_181, %c0_182, %c0_183] : memref<8x32x128xf32, #tpu.memory_space<vmem>>, vector<1x32x128xf32>
    %218 = vector.shape_cast %217 : vector<1x32x128xf32> to vector<32x128xf32>
    %219 = vector.broadcast %216 : f32 to vector<32x128xf32>
    %220 = arith.mulf %219, %218 : vector<32x128xf32>
    %221 = arith.addf %215, %220 : vector<32x128xf32>
    %c4_184 = arith.constant 4 : index
    %c3_185 = arith.constant 3 : index
    %222 = memref.load %arg1[%c4_184, %c3_185] : memref<8x8xf32, #tpu.memory_space<smem>>
    %c3_186 = arith.constant 3 : index
    %c0_187 = arith.constant 0 : index
    %c0_188 = arith.constant 0 : index
    %223 = vector.load %arg3[%c3_186, %c0_187, %c0_188] : memref<8x32x128xf32, #tpu.memory_space<vmem>>, vector<1x32x128xf32>
    %224 = vector.shape_cast %223 : vector<1x32x128xf32> to vector<32x128xf32>
    %225 = vector.broadcast %222 : f32 to vector<32x128xf32>
    %226 = arith.mulf %225, %224 : vector<32x128xf32>
    %227 = arith.addf %221, %226 : vector<32x128xf32>
    %c4_189 = arith.constant 4 : index
    %c4_190 = arith.constant 4 : index
    %228 = memref.load %arg1[%c4_189, %c4_190] : memref<8x8xf32, #tpu.memory_space<smem>>
    %c4_191 = arith.constant 4 : index
    %c0_192 = arith.constant 0 : index
    %c0_193 = arith.constant 0 : index
    %229 = vector.load %arg3[%c4_191, %c0_192, %c0_193] : memref<8x32x128xf32, #tpu.memory_space<vmem>>, vector<1x32x128xf32>
    %230 = vector.shape_cast %229 : vector<1x32x128xf32> to vector<32x128xf32>
    %231 = vector.broadcast %228 : f32 to vector<32x128xf32>
    %232 = arith.mulf %231, %230 : vector<32x128xf32>
    %233 = arith.addf %227, %232 : vector<32x128xf32>
    %c4_194 = arith.constant 4 : index
    %c5_195 = arith.constant 5 : index
    %234 = memref.load %arg1[%c4_194, %c5_195] : memref<8x8xf32, #tpu.memory_space<smem>>
    %c5_196 = arith.constant 5 : index
    %c0_197 = arith.constant 0 : index
    %c0_198 = arith.constant 0 : index
    %235 = vector.load %arg3[%c5_196, %c0_197, %c0_198] : memref<8x32x128xf32, #tpu.memory_space<vmem>>, vector<1x32x128xf32>
    %236 = vector.shape_cast %235 : vector<1x32x128xf32> to vector<32x128xf32>
    %237 = vector.broadcast %234 : f32 to vector<32x128xf32>
    %238 = arith.mulf %237, %236 : vector<32x128xf32>
    %239 = arith.addf %233, %238 : vector<32x128xf32>
    %c4_199 = arith.constant 4 : index
    %c6_200 = arith.constant 6 : index
    %240 = memref.load %arg1[%c4_199, %c6_200] : memref<8x8xf32, #tpu.memory_space<smem>>
    %c6_201 = arith.constant 6 : index
    %c0_202 = arith.constant 0 : index
    %c0_203 = arith.constant 0 : index
    %241 = vector.load %arg3[%c6_201, %c0_202, %c0_203] : memref<8x32x128xf32, #tpu.memory_space<vmem>>, vector<1x32x128xf32>
    %242 = vector.shape_cast %241 : vector<1x32x128xf32> to vector<32x128xf32>
    %243 = vector.broadcast %240 : f32 to vector<32x128xf32>
    %244 = arith.mulf %243, %242 : vector<32x128xf32>
    %245 = arith.addf %239, %244 : vector<32x128xf32>
    %c4_204 = arith.constant 4 : index
    %c7_205 = arith.constant 7 : index
    %246 = memref.load %arg1[%c4_204, %c7_205] : memref<8x8xf32, #tpu.memory_space<smem>>
    %c7_206 = arith.constant 7 : index
    %c0_207 = arith.constant 0 : index
    %c0_208 = arith.constant 0 : index
    %247 = vector.load %arg3[%c7_206, %c0_207, %c0_208] : memref<8x32x128xf32, #tpu.memory_space<vmem>>, vector<1x32x128xf32>
    %248 = vector.shape_cast %247 : vector<1x32x128xf32> to vector<32x128xf32>
    %249 = vector.broadcast %246 : f32 to vector<32x128xf32>
    %250 = arith.mulf %249, %248 : vector<32x128xf32>
    %251 = arith.addf %245, %250 : vector<32x128xf32>
    %cst_209 = arith.constant dense<0.000000e+00> : vector<32x128xf32>
    %252 = tpu.matmul %0, %251, %cst_209 {dimension_numbers = #tpu.dot_dimension_numbers<[1], [0], [0], [1], [0, 0, 1, 1], [], []>} : vector<32x32xf32>, vector<32x128xf32>, vector<32x128xf32> -> vector<32x128xf32>
    %c4_210 = arith.constant 4 : index
    %c0_211 = arith.constant 0 : index
    %c0_212 = arith.constant 0 : index
    %253 = vector.load %arg4[%c4_210, %c0_211, %c0_212] : memref<8x32x128xf32, #tpu.memory_space<vmem>>, vector<1x32x128xf32>
    %254 = vector.shape_cast %253 : vector<1x32x128xf32> to vector<32x128xf32>
    %255 = vector.shape_cast %252 : vector<32x128xf32> to vector<1x32x128xf32>
    tpu.vector_store %arg4[%c4_210, %c0_211, %c0_212], %255 {strides = array<i32>} : memref<8x32x128xf32, #tpu.memory_space<vmem>>, vector<1x32x128xf32>,
    %c5_213 = arith.constant 5 : index
    %c0_214 = arith.constant 0 : index
    %256 = memref.load %arg1[%c5_213, %c0_214] : memref<8x8xf32, #tpu.memory_space<smem>>
    %c0_215 = arith.constant 0 : index
    %c0_216 = arith.constant 0 : index
    %c0_217 = arith.constant 0 : index
    %257 = vector.load %arg3[%c0_215, %c0_216, %c0_217] : memref<8x32x128xf32, #tpu.memory_space<vmem>>, vector<1x32x128xf32>
    %258 = vector.shape_cast %257 : vector<1x32x128xf32> to vector<32x128xf32>
    %259 = vector.broadcast %256 : f32 to vector<32x128xf32>
    %260 = arith.mulf %259, %258 : vector<32x128xf32>
    %c5_218 = arith.constant 5 : index
    %c1_219 = arith.constant 1 : index
    %261 = memref.load %arg1[%c5_218, %c1_219] : memref<8x8xf32, #tpu.memory_space<smem>>
    %c1_220 = arith.constant 1 : index
    %c0_221 = arith.constant 0 : index
    %c0_222 = arith.constant 0 : index
    %262 = vector.load %arg3[%c1_220, %c0_221, %c0_222] : memref<8x32x128xf32, #tpu.memory_space<vmem>>, vector<1x32x128xf32>
    %263 = vector.shape_cast %262 : vector<1x32x128xf32> to vector<32x128xf32>
    %264 = vector.broadcast %261 : f32 to vector<32x128xf32>
    %265 = arith.mulf %264, %263 : vector<32x128xf32>
    %266 = arith.addf %260, %265 : vector<32x128xf32>
    %c5_223 = arith.constant 5 : index
    %c2_224 = arith.constant 2 : index
    %267 = memref.load %arg1[%c5_223, %c2_224] : memref<8x8xf32, #tpu.memory_space<smem>>
    %c2_225 = arith.constant 2 : index
    %c0_226 = arith.constant 0 : index
    %c0_227 = arith.constant 0 : index
    %268 = vector.load %arg3[%c2_225, %c0_226, %c0_227] : memref<8x32x128xf32, #tpu.memory_space<vmem>>, vector<1x32x128xf32>
    %269 = vector.shape_cast %268 : vector<1x32x128xf32> to vector<32x128xf32>
    %270 = vector.broadcast %267 : f32 to vector<32x128xf32>
    %271 = arith.mulf %270, %269 : vector<32x128xf32>
    %272 = arith.addf %266, %271 : vector<32x128xf32>
    %c5_228 = arith.constant 5 : index
    %c3_229 = arith.constant 3 : index
    %273 = memref.load %arg1[%c5_228, %c3_229] : memref<8x8xf32, #tpu.memory_space<smem>>
    %c3_230 = arith.constant 3 : index
    %c0_231 = arith.constant 0 : index
    %c0_232 = arith.constant 0 : index
    %274 = vector.load %arg3[%c3_230, %c0_231, %c0_232] : memref<8x32x128xf32, #tpu.memory_space<vmem>>, vector<1x32x128xf32>
    %275 = vector.shape_cast %274 : vector<1x32x128xf32> to vector<32x128xf32>
    %276 = vector.broadcast %273 : f32 to vector<32x128xf32>
    %277 = arith.mulf %276, %275 : vector<32x128xf32>
    %278 = arith.addf %272, %277 : vector<32x128xf32>
    %c5_233 = arith.constant 5 : index
    %c4_234 = arith.constant 4 : index
    %279 = memref.load %arg1[%c5_233, %c4_234] : memref<8x8xf32, #tpu.memory_space<smem>>
    %c4_235 = arith.constant 4 : index
    %c0_236 = arith.constant 0 : index
    %c0_237 = arith.constant 0 : index
    %280 = vector.load %arg3[%c4_235, %c0_236, %c0_237] : memref<8x32x128xf32, #tpu.memory_space<vmem>>, vector<1x32x128xf32>
    %281 = vector.shape_cast %280 : vector<1x32x128xf32> to vector<32x128xf32>
    %282 = vector.broadcast %279 : f32 to vector<32x128xf32>
    %283 = arith.mulf %282, %281 : vector<32x128xf32>
    %284 = arith.addf %278, %283 : vector<32x128xf32>
    %c5_238 = arith.constant 5 : index
    %c5_239 = arith.constant 5 : index
    %285 = memref.load %arg1[%c5_238, %c5_239] : memref<8x8xf32, #tpu.memory_space<smem>>
    %c5_240 = arith.constant 5 : index
    %c0_241 = arith.constant 0 : index
    %c0_242 = arith.constant 0 : index
    %286 = vector.load %arg3[%c5_240, %c0_241, %c0_242] : memref<8x32x128xf32, #tpu.memory_space<vmem>>, vector<1x32x128xf32>
    %287 = vector.shape_cast %286 : vector<1x32x128xf32> to vector<32x128xf32>
    %288 = vector.broadcast %285 : f32 to vector<32x128xf32>
    %289 = arith.mulf %288, %287 : vector<32x128xf32>
    %290 = arith.addf %284, %289 : vector<32x128xf32>
    %c5_243 = arith.constant 5 : index
    %c6_244 = arith.constant 6 : index
    %291 = memref.load %arg1[%c5_243, %c6_244] : memref<8x8xf32, #tpu.memory_space<smem>>
    %c6_245 = arith.constant 6 : index
    %c0_246 = arith.constant 0 : index
    %c0_247 = arith.constant 0 : index
    %292 = vector.load %arg3[%c6_245, %c0_246, %c0_247] : memref<8x32x128xf32, #tpu.memory_space<vmem>>, vector<1x32x128xf32>
    %293 = vector.shape_cast %292 : vector<1x32x128xf32> to vector<32x128xf32>
    %294 = vector.broadcast %291 : f32 to vector<32x128xf32>
    %295 = arith.mulf %294, %293 : vector<32x128xf32>
    %296 = arith.addf %290, %295 : vector<32x128xf32>
    %c5_248 = arith.constant 5 : index
    %c7_249 = arith.constant 7 : index
    %297 = memref.load %arg1[%c5_248, %c7_249] : memref<8x8xf32, #tpu.memory_space<smem>>
    %c7_250 = arith.constant 7 : index
    %c0_251 = arith.constant 0 : index
    %c0_252 = arith.constant 0 : index
    %298 = vector.load %arg3[%c7_250, %c0_251, %c0_252] : memref<8x32x128xf32, #tpu.memory_space<vmem>>, vector<1x32x128xf32>
    %299 = vector.shape_cast %298 : vector<1x32x128xf32> to vector<32x128xf32>
    %300 = vector.broadcast %297 : f32 to vector<32x128xf32>
    %301 = arith.mulf %300, %299 : vector<32x128xf32>
    %302 = arith.addf %296, %301 : vector<32x128xf32>
    %cst_253 = arith.constant dense<0.000000e+00> : vector<32x128xf32>
    %303 = tpu.matmul %0, %302, %cst_253 {dimension_numbers = #tpu.dot_dimension_numbers<[1], [0], [0], [1], [0, 0, 1, 1], [], []>} : vector<32x32xf32>, vector<32x128xf32>, vector<32x128xf32> -> vector<32x128xf32>
    %c5_254 = arith.constant 5 : index
    %c0_255 = arith.constant 0 : index
    %c0_256 = arith.constant 0 : index
    %304 = vector.load %arg4[%c5_254, %c0_255, %c0_256] : memref<8x32x128xf32, #tpu.memory_space<vmem>>, vector<1x32x128xf32>
    %305 = vector.shape_cast %304 : vector<1x32x128xf32> to vector<32x128xf32>
    %306 = vector.shape_cast %303 : vector<32x128xf32> to vector<1x32x128xf32>
    tpu.vector_store %arg4[%c5_254, %c0_255, %c0_256], %306 {strides = array<i32>} : memref<8x32x128xf32, #tpu.memory_space<vmem>>, vector<1x32x128xf32>,
    %c6_257 = arith.constant 6 : index
    %c0_258 = arith.constant 0 : index
    %307 = memref.load %arg1[%c6_257, %c0_258] : memref<8x8xf32, #tpu.memory_space<smem>>
    %c0_259 = arith.constant 0 : index
    %c0_260 = arith.constant 0 : index
    %c0_261 = arith.constant 0 : index
    %308 = vector.load %arg3[%c0_259, %c0_260, %c0_261] : memref<8x32x128xf32, #tpu.memory_space<vmem>>, vector<1x32x128xf32>
    %309 = vector.shape_cast %308 : vector<1x32x128xf32> to vector<32x128xf32>
    %310 = vector.broadcast %307 : f32 to vector<32x128xf32>
    %311 = arith.mulf %310, %309 : vector<32x128xf32>
    %c6_262 = arith.constant 6 : index
    %c1_263 = arith.constant 1 : index
    %312 = memref.load %arg1[%c6_262, %c1_263] : memref<8x8xf32, #tpu.memory_space<smem>>
    %c1_264 = arith.constant 1 : index
    %c0_265 = arith.constant 0 : index
    %c0_266 = arith.constant 0 : index
    %313 = vector.load %arg3[%c1_264, %c0_265, %c0_266] : memref<8x32x128xf32, #tpu.memory_space<vmem>>, vector<1x32x128xf32>
    %314 = vector.shape_cast %313 : vector<1x32x128xf32> to vector<32x128xf32>
    %315 = vector.broadcast %312 : f32 to vector<32x128xf32>
    %316 = arith.mulf %315, %314 : vector<32x128xf32>
    %317 = arith.addf %311, %316 : vector<32x128xf32>
    %c6_267 = arith.constant 6 : index
    %c2_268 = arith.constant 2 : index
    %318 = memref.load %arg1[%c6_267, %c2_268] : memref<8x8xf32, #tpu.memory_space<smem>>
    %c2_269 = arith.constant 2 : index
    %c0_270 = arith.constant 0 : index
    %c0_271 = arith.constant 0 : index
    %319 = vector.load %arg3[%c2_269, %c0_270, %c0_271] : memref<8x32x128xf32, #tpu.memory_space<vmem>>, vector<1x32x128xf32>
    %320 = vector.shape_cast %319 : vector<1x32x128xf32> to vector<32x128xf32>
    %321 = vector.broadcast %318 : f32 to vector<32x128xf32>
    %322 = arith.mulf %321, %320 : vector<32x128xf32>
    %323 = arith.addf %317, %322 : vector<32x128xf32>
    %c6_272 = arith.constant 6 : index
    %c3_273 = arith.constant 3 : index
    %324 = memref.load %arg1[%c6_272, %c3_273] : memref<8x8xf32, #tpu.memory_space<smem>>
    %c3_274 = arith.constant 3 : index
    %c0_275 = arith.constant 0 : index
    %c0_276 = arith.constant 0 : index
    %325 = vector.load %arg3[%c3_274, %c0_275, %c0_276] : memref<8x32x128xf32, #tpu.memory_space<vmem>>, vector<1x32x128xf32>
    %326 = vector.shape_cast %325 : vector<1x32x128xf32> to vector<32x128xf32>
    %327 = vector.broadcast %324 : f32 to vector<32x128xf32>
    %328 = arith.mulf %327, %326 : vector<32x128xf32>
    %329 = arith.addf %323, %328 : vector<32x128xf32>
    %c6_277 = arith.constant 6 : index
    %c4_278 = arith.constant 4 : index
    %330 = memref.load %arg1[%c6_277, %c4_278] : memref<8x8xf32, #tpu.memory_space<smem>>
    %c4_279 = arith.constant 4 : index
    %c0_280 = arith.constant 0 : index
    %c0_281 = arith.constant 0 : index
    %331 = vector.load %arg3[%c4_279, %c0_280, %c0_281] : memref<8x32x128xf32, #tpu.memory_space<vmem>>, vector<1x32x128xf32>
    %332 = vector.shape_cast %331 : vector<1x32x128xf32> to vector<32x128xf32>
    %333 = vector.broadcast %330 : f32 to vector<32x128xf32>
    %334 = arith.mulf %333, %332 : vector<32x128xf32>
    %335 = arith.addf %329, %334 : vector<32x128xf32>
    %c6_282 = arith.constant 6 : index
    %c5_283 = arith.constant 5 : index
    %336 = memref.load %arg1[%c6_282, %c5_283] : memref<8x8xf32, #tpu.memory_space<smem>>
    %c5_284 = arith.constant 5 : index
    %c0_285 = arith.constant 0 : index
    %c0_286 = arith.constant 0 : index
    %337 = vector.load %arg3[%c5_284, %c0_285, %c0_286] : memref<8x32x128xf32, #tpu.memory_space<vmem>>, vector<1x32x128xf32>
    %338 = vector.shape_cast %337 : vector<1x32x128xf32> to vector<32x128xf32>
    %339 = vector.broadcast %336 : f32 to vector<32x128xf32>
    %340 = arith.mulf %339, %338 : vector<32x128xf32>
    %341 = arith.addf %335, %340 : vector<32x128xf32>
    %c6_287 = arith.constant 6 : index
    %c6_288 = arith.constant 6 : index
    %342 = memref.load %arg1[%c6_287, %c6_288] : memref<8x8xf32, #tpu.memory_space<smem>>
    %c6_289 = arith.constant 6 : index
    %c0_290 = arith.constant 0 : index
    %c0_291 = arith.constant 0 : index
    %343 = vector.load %arg3[%c6_289, %c0_290, %c0_291] : memref<8x32x128xf32, #tpu.memory_space<vmem>>, vector<1x32x128xf32>
    %344 = vector.shape_cast %343 : vector<1x32x128xf32> to vector<32x128xf32>
    %345 = vector.broadcast %342 : f32 to vector<32x128xf32>
    %346 = arith.mulf %345, %344 : vector<32x128xf32>
    %347 = arith.addf %341, %346 : vector<32x128xf32>
    %c6_292 = arith.constant 6 : index
    %c7_293 = arith.constant 7 : index
    %348 = memref.load %arg1[%c6_292, %c7_293] : memref<8x8xf32, #tpu.memory_space<smem>>
    %c7_294 = arith.constant 7 : index
    %c0_295 = arith.constant 0 : index
    %c0_296 = arith.constant 0 : index
    %349 = vector.load %arg3[%c7_294, %c0_295, %c0_296] : memref<8x32x128xf32, #tpu.memory_space<vmem>>, vector<1x32x128xf32>
    %350 = vector.shape_cast %349 : vector<1x32x128xf32> to vector<32x128xf32>
    %351 = vector.broadcast %348 : f32 to vector<32x128xf32>
    %352 = arith.mulf %351, %350 : vector<32x128xf32>
    %353 = arith.addf %347, %352 : vector<32x128xf32>
    %cst_297 = arith.constant dense<0.000000e+00> : vector<32x128xf32>
    %354 = tpu.matmul %0, %353, %cst_297 {dimension_numbers = #tpu.dot_dimension_numbers<[1], [0], [0], [1], [0, 0, 1, 1], [], []>} : vector<32x32xf32>, vector<32x128xf32>, vector<32x128xf32> -> vector<32x128xf32>
    %c6_298 = arith.constant 6 : index
    %c0_299 = arith.constant 0 : index
    %c0_300 = arith.constant 0 : index
    %355 = vector.load %arg4[%c6_298, %c0_299, %c0_300] : memref<8x32x128xf32, #tpu.memory_space<vmem>>, vector<1x32x128xf32>
    %356 = vector.shape_cast %355 : vector<1x32x128xf32> to vector<32x128xf32>
    %357 = vector.shape_cast %354 : vector<32x128xf32> to vector<1x32x128xf32>
    tpu.vector_store %arg4[%c6_298, %c0_299, %c0_300], %357 {strides = array<i32>} : memref<8x32x128xf32, #tpu.memory_space<vmem>>, vector<1x32x128xf32>,
    %c7_301 = arith.constant 7 : index
    %c0_302 = arith.constant 0 : index
    %358 = memref.load %arg1[%c7_301, %c0_302] : memref<8x8xf32, #tpu.memory_space<smem>>
    %c0_303 = arith.constant 0 : index
    %c0_304 = arith.constant 0 : index
    %c0_305 = arith.constant 0 : index
    %359 = vector.load %arg3[%c0_303, %c0_304, %c0_305] : memref<8x32x128xf32, #tpu.memory_space<vmem>>, vector<1x32x128xf32>
    %360 = vector.shape_cast %359 : vector<1x32x128xf32> to vector<32x128xf32>
    %361 = vector.broadcast %358 : f32 to vector<32x128xf32>
    %362 = arith.mulf %361, %360 : vector<32x128xf32>
    %c7_306 = arith.constant 7 : index
    %c1_307 = arith.constant 1 : index
    %363 = memref.load %arg1[%c7_306, %c1_307] : memref<8x8xf32, #tpu.memory_space<smem>>
    %c1_308 = arith.constant 1 : index
    %c0_309 = arith.constant 0 : index
    %c0_310 = arith.constant 0 : index
    %364 = vector.load %arg3[%c1_308, %c0_309, %c0_310] : memref<8x32x128xf32, #tpu.memory_space<vmem>>, vector<1x32x128xf32>
    %365 = vector.shape_cast %364 : vector<1x32x128xf32> to vector<32x128xf32>
    %366 = vector.broadcast %363 : f32 to vector<32x128xf32>
    %367 = arith.mulf %366, %365 : vector<32x128xf32>
    %368 = arith.addf %362, %367 : vector<32x128xf32>
    %c7_311 = arith.constant 7 : index
    %c2_312 = arith.constant 2 : index
    %369 = memref.load %arg1[%c7_311, %c2_312] : memref<8x8xf32, #tpu.memory_space<smem>>
    %c2_313 = arith.constant 2 : index
    %c0_314 = arith.constant 0 : index
    %c0_315 = arith.constant 0 : index
    %370 = vector.load %arg3[%c2_313, %c0_314, %c0_315] : memref<8x32x128xf32, #tpu.memory_space<vmem>>, vector<1x32x128xf32>
    %371 = vector.shape_cast %370 : vector<1x32x128xf32> to vector<32x128xf32>
    %372 = vector.broadcast %369 : f32 to vector<32x128xf32>
    %373 = arith.mulf %372, %371 : vector<32x128xf32>
    %374 = arith.addf %368, %373 : vector<32x128xf32>
    %c7_316 = arith.constant 7 : index
    %c3_317 = arith.constant 3 : index
    %375 = memref.load %arg1[%c7_316, %c3_317] : memref<8x8xf32, #tpu.memory_space<smem>>
    %c3_318 = arith.constant 3 : index
    %c0_319 = arith.constant 0 : index
    %c0_320 = arith.constant 0 : index
    %376 = vector.load %arg3[%c3_318, %c0_319, %c0_320] : memref<8x32x128xf32, #tpu.memory_space<vmem>>, vector<1x32x128xf32>
    %377 = vector.shape_cast %376 : vector<1x32x128xf32> to vector<32x128xf32>
    %378 = vector.broadcast %375 : f32 to vector<32x128xf32>
    %379 = arith.mulf %378, %377 : vector<32x128xf32>
    %380 = arith.addf %374, %379 : vector<32x128xf32>
    %c7_321 = arith.constant 7 : index
    %c4_322 = arith.constant 4 : index
    %381 = memref.load %arg1[%c7_321, %c4_322] : memref<8x8xf32, #tpu.memory_space<smem>>
    %c4_323 = arith.constant 4 : index
    %c0_324 = arith.constant 0 : index
    %c0_325 = arith.constant 0 : index
    %382 = vector.load %arg3[%c4_323, %c0_324, %c0_325] : memref<8x32x128xf32, #tpu.memory_space<vmem>>, vector<1x32x128xf32>
    %383 = vector.shape_cast %382 : vector<1x32x128xf32> to vector<32x128xf32>
    %384 = vector.broadcast %381 : f32 to vector<32x128xf32>
    %385 = arith.mulf %384, %383 : vector<32x128xf32>
    %386 = arith.addf %380, %385 : vector<32x128xf32>
    %c7_326 = arith.constant 7 : index
    %c5_327 = arith.constant 5 : index
    %387 = memref.load %arg1[%c7_326, %c5_327] : memref<8x8xf32, #tpu.memory_space<smem>>
    %c5_328 = arith.constant 5 : index
    %c0_329 = arith.constant 0 : index
    %c0_330 = arith.constant 0 : index
    %388 = vector.load %arg3[%c5_328, %c0_329, %c0_330] : memref<8x32x128xf32, #tpu.memory_space<vmem>>, vector<1x32x128xf32>
    %389 = vector.shape_cast %388 : vector<1x32x128xf32> to vector<32x128xf32>
    %390 = vector.broadcast %387 : f32 to vector<32x128xf32>
    %391 = arith.mulf %390, %389 : vector<32x128xf32>
    %392 = arith.addf %386, %391 : vector<32x128xf32>
    %c7_331 = arith.constant 7 : index
    %c6_332 = arith.constant 6 : index
    %393 = memref.load %arg1[%c7_331, %c6_332] : memref<8x8xf32, #tpu.memory_space<smem>>
    %c6_333 = arith.constant 6 : index
    %c0_334 = arith.constant 0 : index
    %c0_335 = arith.constant 0 : index
    %394 = vector.load %arg3[%c6_333, %c0_334, %c0_335] : memref<8x32x128xf32, #tpu.memory_space<vmem>>, vector<1x32x128xf32>
    %395 = vector.shape_cast %394 : vector<1x32x128xf32> to vector<32x128xf32>
    %396 = vector.broadcast %393 : f32 to vector<32x128xf32>
    %397 = arith.mulf %396, %395 : vector<32x128xf32>
    %398 = arith.addf %392, %397 : vector<32x128xf32>
    %c7_336 = arith.constant 7 : index
    %c7_337 = arith.constant 7 : index
    %399 = memref.load %arg1[%c7_336, %c7_337] : memref<8x8xf32, #tpu.memory_space<smem>>
    %c7_338 = arith.constant 7 : index
    %c0_339 = arith.constant 0 : index
    %c0_340 = arith.constant 0 : index
    %400 = vector.load %arg3[%c7_338, %c0_339, %c0_340] : memref<8x32x128xf32, #tpu.memory_space<vmem>>, vector<1x32x128xf32>
    %401 = vector.shape_cast %400 : vector<1x32x128xf32> to vector<32x128xf32>
    %402 = vector.broadcast %399 : f32 to vector<32x128xf32>
    %403 = arith.mulf %402, %401 : vector<32x128xf32>
    %404 = arith.addf %398, %403 : vector<32x128xf32>
    %cst_341 = arith.constant dense<0.000000e+00> : vector<32x128xf32>
    %405 = tpu.matmul %0, %404, %cst_341 {dimension_numbers = #tpu.dot_dimension_numbers<[1], [0], [0], [1], [0, 0, 1, 1], [], []>} : vector<32x32xf32>, vector<32x128xf32>, vector<32x128xf32> -> vector<32x128xf32>
    %c7_342 = arith.constant 7 : index
    %c0_343 = arith.constant 0 : index
    %c0_344 = arith.constant 0 : index
    %406 = vector.load %arg4[%c7_342, %c0_343, %c0_344] : memref<8x32x128xf32, #tpu.memory_space<vmem>>, vector<1x32x128xf32>
    %407 = vector.shape_cast %406 : vector<1x32x128xf32> to vector<32x128xf32>
    %408 = vector.shape_cast %405 : vector<32x128xf32> to vector<1x32x128xf32>
    tpu.vector_store %arg4[%c7_342, %c0_343, %c0_344], %408 {strides = array<i32>} : memref<8x32x128xf32, #tpu.memory_space<vmem>>, vector<1x32x128xf32>,
    return
  }
  func.func @transform_0(%arg0: i32) -> (i32, i32) {
    %c0_i32 = arith.constant 0 : i32
    %c0_i32_0 = arith.constant 0 : i32
    %c0_i32_1 = arith.constant 0 : i32
    return %c0_i32, %c0_i32_0 : i32, i32
  }
  func.func @transform_1(%arg0: i32) -> (i32, i32) {
    %c0_i32 = arith.constant 0 : i32
    %c0_i32_0 = arith.constant 0 : i32
    %c0_i32_1 = arith.constant 0 : i32
    return %c0_i32, %c0_i32_0 : i32, i32
  }
  func.func @transform_2(%arg0: i32) -> (i32, i32, i32) {
    %c0_i32 = arith.constant 0 : i32
    %c0_i32_0 = arith.constant 0 : i32
    %c0_i32_1 = arith.constant 0 : i32
    return %c0_i32, %c0_i32_0, %arg0 : i32, i32, i32
  }
  func.func @transform_3(%arg0: i32) -> (i32, i32, i32) {
    %c0_i32 = arith.constant 0 : i32
    %c0_i32_0 = arith.constant 0 : i32
    %c0_i32_1 = arith.constant 0 : i32
    return %c0_i32, %c0_i32_0, %arg0 : i32, i32, i32
  }
}

</mosaic_0001>

<llo_original>
// kernel: cross_slice_attention.2
$region0: #{cross_slice_attention.2}
  #allocation0 [shape = 'u32[]', space=smem, size = 0x4, offset = 0x4, fixed_abs, tag = 'smem constant byte address 0x4 - core index']
  #allocation1 [shape = 'u32[144,128]{1,0:T(1,128)}', space=vmem, size = 0x12000, scoped, tag = 'internal scratch']
  %s0 = inlined_call_operand.vmem [shape: f32[16,8,32], index: 0, kind: input, shape index: {}]
  %s1 = inlined_call_operand.vmem [shape: f32[32,32], index: 1, kind: input, shape index: {}]
  %s2 = inlined_call_operand.vmem [shape: f32[32,32], index: 2, kind: input, shape index: {}]
  %s3 = inlined_call_operand.vmem [shape: f32[8,8], index: 3, kind: output, shape index: {}]
  %s4 = sld [smem:[#allocation0]]
  $region22: #{cross_slice_attention.2} parent=0
    _
  %s6 = ssub.s32 1, %s4
  %s7 = scalar_select 0, %s6, %s4
  // Predicated region
  $region2: #{cross_slice_attention.2} parent=0 // pred_check
    _
  $region3: #{cross_slice_attention.2} parent=0 // pred_check_branch
    %9 = sbr.rel (0) target = $region5
  $region4: #{cross_slice_attention.2} parent=0 // pred_region
    _
  $region5: #{cross_slice_attention.2} parent=0 // pred_fallthru
    _
  // Predicated region
  $region6: #{cross_slice_attention.2} parent=0 // pred_check
    _
  $region7: #{cross_slice_attention.2} parent=0 // pred_check_branch
    %11 = sbr.rel (0) target = $region9
  $region8: #{cross_slice_attention.2} parent=0 // pred_region
    _
  $region9: #{cross_slice_attention.2} parent=0 // pred_fallthru
    _
  // Predicated region
  $region10: #{cross_slice_attention.2} parent=0 // pred_check
    _
  $region11: #{cross_slice_attention.2} parent=0 // pred_check_branch
    %13 = sbr.rel (0) target = $region13
  $region12: #{cross_slice_attention.2} parent=0 // pred_region
    _
  $region13: #{cross_slice_attention.2} parent=0 // pred_fallthru
    _
  %v14 = vld [vmem:[%s1] sm:$0xff]
  %v15 = vld [vmem:[%s1 + $0x8] sm:$0xff]
  %v16 = vld [vmem:[%s1 + $0x10] sm:$0xff]
  %v17 = vld [vmem:[%s1 + $0x18] sm:$0xff]
  %v18 = vld [vmem:[%s2] sm:$0xff]
  %v19 = vld [vmem:[%s2 + $0x8] sm:$0xff]
  %v20 = vld [vmem:[%s2 + $0x10] sm:$0xff]
  %v21 = vld [vmem:[%s2 + $0x18] sm:$0xff]
  %vm22 = vcmask 261120
  %v24 = vsel %vm22, %v14, 0
  %v27 = vsel %vm22, %v15, 0
  %v30 = vsel %vm22, %v16, 0
  %v33 = vsel %vm22, %v17, 0
  %35 = vmatprep.subr.mxu0 0.0
  %36 = vmatpush1.msra.mxu0 %v18
  %37 = vmatprep.subr.mxu0 0.0
  %38 = vmatpush1.msra.mxu0 %v19
  %39 = vmatprep.subr.mxu0 0.0
  %40 = vmatpush1.msra.mxu0 %v20
  %41 = vmatprep.subr.mxu0 0.0
  %42 = vmatpush1.msra.mxu0 %v21
  %43 = vmatprep.subr.mxu0 0.0
  %44 = vmatpush1.msra.mxu0 0.0
  %45 = vmatprep.subr.mxu0 0.0
  %46 = vmatpush1.msra.mxu0 0.0
  %47 = vmatprep.subr.mxu0 0.0
  %48 = vmatpush1.msra.mxu0 0.0
  %49 = vmatprep.subr.mxu0 0.0
  %50 = vmatpush1.msra.mxu0 0.0
  %51 = vmatprep.subr.mxu0 0.0
  %52 = vmatpush1.msra.mxu0 0.0
  %53 = vmatprep.subr.mxu0 0.0
  %54 = vmatpush1.msra.mxu0 0.0
  %55 = vmatprep.subr.mxu0 0.0
  %56 = vmatpush1.msra.mxu0 0.0
  %57 = vmatprep.subr.mxu0 0.0
  %58 = vmatpush1.msra.mxu0 0.0
  %59 = vmatprep.subr.mxu0 0.0
  %60 = vmatpush1.msra.mxu0 0.0
  %61 = vmatprep.subr.mxu0 0.0
  %62 = vmatpush1.msra.mxu0 0.0
  %63 = vmatprep.subr.mxu0 0.0
  %64 = vmatpush1.msra.mxu0 0.0
  %65 = vmatprep.subr.mxu0 0.0
  %66 = vmatpush1.msra.mxu0 0.0
  %67 = vmatprep.subr.mxu0 0.0
  %68 = vmatpush1.msra.mxu0 0.0
  %69 = vmatprep.subr.mxu0 0.0
  %70 = vmatpush1.msra.mxu0 0.0
  %71 = vmatprep.subr.mxu0 0.0
  %72 = vmatpush1.msra.mxu0 0.0
  %73 = vmatprep.subr.mxu0 0.0
  %74 = vmatpush1.msra.mxu0 0.0
  %75 = vmatprep.subr.mxu0 0.0
  %76 = vmatpush1.msra.mxu0 0.0
  %77 = vmatprep.subr.mxu0 0.0
  %78 = vmatpush1.msra.mxu0 0.0
  %79 = vmatprep.subr.mxu0 0.0
  %80 = vmatpush1.msra.mxu0 0.0
  %81 = vmatprep.subr.mxu0 0.0
  %82 = vmatpush1.msra.mxu0 0.0
  %83 = vmatprep.subr.mxu0 0.0
  %84 = vmatpush1.msra.mxu0 0.0
  %85 = vmatprep.subr.mxu0 0.0
  %86 = vmatpush1.msra.mxu0 0.0
  %87 = vmatprep.subr.mxu0 0.0
  %88 = vmatpush1.msra.mxu0 0.0
  %89 = vmatprep.subr.mxu0 0.0
  %90 = vmatpush1.msra.mxu0 0.0
  %91 = vmatprep.subr.mxu0 0.0
  %92 = vmatpush1.msra.mxu0 0.0
  %93 = vmatprep.subr.mxu0 0.0
  %94 = vmatpush1.msra.mxu0 0.0
  %95 = vmatprep.subr.mxu0 0.0
  %96 = vmatpush1.msra.mxu0 0.0
  %97 = vmatprep.subr.mxu0 0.0
  %98 = vmatpush1.msra.mxu0 0.0
  %99 = vmatprep.mubr.f32.mxu0 0.0
  %100 = vmatmul.mubr.f32.gmra.mrb[0].mxu0 %v24
  %v101 = vpop.f32.mrb[0].mxu0
  %v102 = vadd.f32 0.0, %v101
  %v103 = vpop.f32.mrb[0].mxu0
  %104 = vmatprep.mubr.f32.mxu0 0.0
  %105 = vmatmul.mubr.f32.gmra.mrb[0].mxu0 %v27
  %v106 = vpop.f32.mrb[0].mxu0
  %v107 = vadd.f32 0.0, %v106
  %v108 = vpop.f32.mrb[0].mxu0
  %109 = vmatprep.mubr.f32.mxu0 0.0
  %110 = vmatmul.mubr.f32.gmra.mrb[0].mxu0 %v30
  %v111 = vpop.f32.mrb[0].mxu0
  %v112 = vadd.f32 0.0, %v111
  %v113 = vpop.f32.mrb[0].mxu0
  %114 = vmatprep.mubr.f32.mxu0 0.0
  %115 = vmatmul.mubr.f32.gmra.mrb[0].mxu0 %v33
  %v116 = vpop.f32.mrb[0].mxu0
  %v117 = vadd.f32 0.0, %v116
  %v118 = vpop.f32.mrb[0].mxu0
  %119 = vdwg.mxu0
  %v120 = vld [vmem:[%s0] sm:$0xff]
  %v122 = vsel %vm22, %v120, 0
  %124 = vmatprep.subr.mxu0 0.0
  %125 = vmatpush1.msra.mxu0 %v102
  %126 = vmatprep.subr.mxu0 0.0
  %127 = vmatpush1.msra.mxu0 %v107
  %128 = vmatprep.subr.mxu0 0.0
  %129 = vmatpush1.msra.mxu0 %v112
  %130 = vmatprep.subr.mxu0 0.0
  %131 = vmatpush1.msra.mxu0 %v117
  %132 = vmatprep.subr.mxu0 0.0
  %133 = vmatpush1.msra.mxu0 0.0
  %134 = vmatprep.subr.mxu0 0.0
  %135 = vmatpush1.msra.mxu0 0.0
  %136 = vmatprep.subr.mxu0 0.0
  %137 = vmatpush1.msra.mxu0 0.0
  %138 = vmatprep.subr.mxu0 0.0
  %139 = vmatpush1.msra.mxu0 0.0
  %140 = vmatprep.subr.mxu0 0.0
  %141 = vmatpush1.msra.mxu0 0.0
  %142 = vmatprep.subr.mxu0 0.0
  %143 = vmatpush1.msra.mxu0 0.0
  %144 = vmatprep.subr.mxu0 0.0
  %145 = vmatpush1.msra.mxu0 0.0
  %146 = vmatprep.subr.mxu0 0.0
  %147 = vmatpush1.msra.mxu0 0.0
  %148 = vmatprep.subr.mxu0 0.0
  %149 = vmatpush1.msra.mxu0 0.0
  %150 = vmatprep.subr.mxu0 0.0
  %151 = vmatpush1.msra.mxu0 0.0
  %152 = vmatprep.subr.mxu0 0.0
  %153 = vmatpush1.msra.mxu0 0.0
  %154 = vmatprep.subr.mxu0 0.0
  %155 = vmatpush1.msra.mxu0 0.0
  %156 = vmatprep.subr.mxu0 0.0
  %157 = vmatpush1.msra.mxu0 0.0
  %158 = vmatprep.subr.mxu0 0.0
  %159 = vmatpush1.msra.mxu0 0.0
  %160 = vmatprep.subr.mxu0 0.0
  %161 = vmatpush1.msra.mxu0 0.0
  %162 = vmatprep.subr.mxu0 0.0
  %163 = vmatpush1.msra.mxu0 0.0
  %164 = vmatprep.subr.mxu0 0.0
  %165 = vmatpush1.msra.mxu0 0.0
  %166 = vmatprep.subr.mxu0 0.0
  %167 = vmatpush1.msra.mxu0 0.0
  %168 = vmatprep.subr.mxu0 0.0
  %169 = vmatpush1.msra.mxu0 0.0
  %170 = vmatprep.subr.mxu0 0.0
  %171 = vmatpush1.msra.mxu0 0.0
  %172 = vmatprep.subr.mxu0 0.0
  %173 = vmatpush1.msra.mxu0 0.0
  %174 = vmatprep.subr.mxu0 0.0
  %175 = vmatpush1.msra.mxu0 0.0
  %176 = vmatprep.subr.mxu0 0.0
  %177 = vmatpush1.msra.mxu0 0.0
  %178 = vmatprep.subr.mxu0 0.0
  %179 = vmatpush1.msra.mxu0 0.0
  %180 = vmatprep.subr.mxu0 0.0
  %181 = vmatpush1.msra.mxu0 0.0
  %182 = vmatprep.subr.mxu0 0.0
  %183 = vmatpush1.msra.mxu0 0.0
  %184 = vmatprep.subr.mxu0 0.0
  %185 = vmatpush1.msra.mxu0 0.0
  %186 = vmatprep.subr.mxu0 0.0
  %187 = vmatpush1.msra.mxu0 0.0
  %188 = vmatprep.mubr.f32.mxu0 0.0
  %189 = vmatmul.mubr.f32.gmra.mrb[0].mxu0 %v122
  %v190 = vpop.f32.mrb[0].mxu0
  %v191 = vadd.f32 0.0, %v190
  %v192 = vpop.f32.mrb[0].mxu0
  %193 = vdwg.mxu0
  %s194 = scalar_lea.vmem %s0, 8
  %v195 = vld [vmem:[%s194] sm:$0xff]
  %v197 = vsel %vm22, %v195, 0
  %199 = vmatprep.subr.mxu0 0.0
  %200 = vmatpush1.msra.mxu0 %v102
  %201 = vmatprep.subr.mxu0 0.0
  %202 = vmatpush1.msra.mxu0 %v107
  %203 = vmatprep.subr.mxu0 0.0
  %204 = vmatpush1.msra.mxu0 %v112
  %205 = vmatprep.subr.mxu0 0.0
  %206 = vmatpush1.msra.mxu0 %v117
  %207 = vmatprep.subr.mxu0 0.0
  %208 = vmatpush1.msra.mxu0 0.0
  %209 = vmatprep.subr.mxu0 0.0
  %210 = vmatpush1.msra.mxu0 0.0
  %211 = vmatprep.subr.mxu0 0.0
  %212 = vmatpush1.msra.mxu0 0.0
  %213 = vmatprep.subr.mxu0 0.0
  %214 = vmatpush1.msra.mxu0 0.0
  %215 = vmatprep.subr.mxu0 0.0
  %216 = vmatpush1.msra.mxu0 0.0
  %217 = vmatprep.subr.mxu0 0.0
  %218 = vmatpush1.msra.mxu0 0.0
  %219 = vmatprep.subr.mxu0 0.0
  %220 = vmatpush1.msra.mxu0 0.0
  %221 = vmatprep.subr.mxu0 0.0
  %222 = vmatpush1.msra.mxu0 0.0
  %223 = vmatprep.subr.mxu0 0.0
  %224 = vmatpush1.msra.mxu0 0.0
  %225 = vmatprep.subr.mxu0 0.0
  %226 = vmatpush1.msra.mxu0 0.0
  %227 = vmatprep.subr.mxu0 0.0
  %228 = vmatpush1.msra.mxu0 0.0
  %229 = vmatprep.subr.mxu0 0.0
  %230 = vmatpush1.msra.mxu0 0.0
  %231 = vmatprep.subr.mxu0 0.0
  %232 = vmatpush1.msra.mxu0 0.0
  %233 = vmatprep.subr.mxu0 0.0
  %234 = vmatpush1.msra.mxu0 0.0
  %235 = vmatprep.subr.mxu0 0.0
  %236 = vmatpush1.msra.mxu0 0.0
  %237 = vmatprep.subr.mxu0 0.0
  %238 = vmatpush1.msra.mxu0 0.0
  %239 = vmatprep.subr.mxu0 0.0
  %240 = vmatpush1.msra.mxu0 0.0
  %241 = vmatprep.subr.mxu0 0.0
  %242 = vmatpush1.msra.mxu0 0.0
  %243 = vmatprep.subr.mxu0 0.0
  %244 = vmatpush1.msra.mxu0 0.0
  %245 = vmatprep.subr.mxu0 0.0
  %246 = vmatpush1.msra.mxu0 0.0
  %247 = vmatprep.subr.mxu0 0.0
  %248 = vmatpush1.msra.mxu0 0.0
  %249 = vmatprep.subr.mxu0 0.0
  %250 = vmatpush1.msra.mxu0 0.0
  %251 = vmatprep.subr.mxu0 0.0
  %252 = vmatpush1.msra.mxu0 0.0
  %253 = vmatprep.subr.mxu0 0.0
  %254 = vmatpush1.msra.mxu0 0.0
  %255 = vmatprep.subr.mxu0 0.0
  %256 = vmatpush1.msra.mxu0 0.0
  %257 = vmatprep.subr.mxu0 0.0
  %258 = vmatpush1.msra.mxu0 0.0
  %259 = vmatprep.subr.mxu0 0.0
  %260 = vmatpush1.msra.mxu0 0.0
  %261 = vmatprep.subr.mxu0 0.0
  %262 = vmatpush1.msra.mxu0 0.0
  %263 = vmatprep.mubr.f32.mxu0 0.0
  %264 = vmatmul.mubr.f32.gmra.mrb[0].mxu0 %v197
  %v265 = vpop.f32.mrb[0].mxu0
  %v266 = vadd.f32 0.0, %v265
  %v267 = vpop.f32.mrb[0].mxu0
  %268 = vdwg.mxu0
  %v270 = vsel %vm22, %v266, 0
  %272 = vmatprep.subr.mxu0 0.0
  %273 = vmatpush1.xpose.msra.mxu0 %v197
  %274 = vmatprep.subr.mxu0 0.0
  %275 = vmatpush1.xpose.msra.mxu0 0.0
  %276 = vmatprep.subr.mxu0 0.0
  %277 = vmatpush1.xpose.msra.mxu0 0.0
  %278 = vmatprep.subr.mxu0 0.0
  %279 = vmatpush1.xpose.msra.mxu0 0.0
  %280 = vmatprep.subr.mxu0 0.0
  %281 = vmatpush1.xpose.msra.mxu0 0.0
  %282 = vmatprep.subr.mxu0 0.0
  %283 = vmatpush1.xpose.msra.mxu0 0.0
  %284 = vmatprep.subr.mxu0 0.0
  %285 = vmatpush1.xpose.msra.mxu0 0.0
  %286 = vmatprep.subr.mxu0 0.0
  %287 = vmatpush1.xpose.msra.mxu0 0.0
  %288 = vmatprep.subr.mxu0 0.0
  %289 = vmatpush1.xpose.msra.mxu0 0.0
  %290 = vmatprep.subr.mxu0 0.0
  %291 = vmatpush1.xpose.msra.mxu0 0.0
  %292 = vmatprep.subr.mxu0 0.0
  %293 = vmatpush1.xpose.msra.mxu0 0.0
  %294 = vmatprep.subr.mxu0 0.0
  %295 = vmatpush1.xpose.msra.mxu0 0.0
  %296 = vmatprep.subr.mxu0 0.0
  %297 = vmatpush1.xpose.msra.mxu0 0.0
  %298 = vmatprep.subr.mxu0 0.0
  %299 = vmatpush1.xpose.msra.mxu0 0.0
  %300 = vmatprep.subr.mxu0 0.0
  %301 = vmatpush1.xpose.msra.mxu0 0.0
  %302 = vmatprep.subr.mxu0 0.0
  %303 = vmatpush1.xpose.msra.mxu0 0.0
  %304 = vmatprep.subr.mxu0 0.0
  %305 = vmatpush1.xpose.msra.mxu0 0.0
  %306 = vmatprep.subr.mxu0 0.0
  %307 = vmatpush1.xpose.msra.mxu0 0.0
  %308 = vmatprep.subr.mxu0 0.0
  %309 = vmatpush1.xpose.msra.mxu0 0.0
  %310 = vmatprep.subr.mxu0 0.0
  %311 = vmatpush1.xpose.msra.mxu0 0.0
  %312 = vmatprep.subr.mxu0 0.0
  %313 = vmatpush1.xpose.msra.mxu0 0.0
  %314 = vmatprep.subr.mxu0 0.0
  %315 = vmatpush1.xpose.msra.mxu0 0.0
  %316 = vmatprep.subr.mxu0 0.0
  %317 = vmatpush1.xpose.msra.mxu0 0.0
  %318 = vmatprep.subr.mxu0 0.0
  %319 = vmatpush1.xpose.msra.mxu0 0.0
  %320 = vmatprep.subr.mxu0 0.0
  %321 = vmatpush1.xpose.msra.mxu0 0.0
  %322 = vmatprep.subr.mxu0 0.0
  %323 = vmatpush1.xpose.msra.mxu0 0.0
  %324 = vmatprep.subr.mxu0 0.0
  %325 = vmatpush1.xpose.msra.mxu0 0.0
  %326 = vmatprep.subr.mxu0 0.0
  %327 = vmatpush1.xpose.msra.mxu0 0.0
  %328 = vmatprep.subr.mxu0 0.0
  %329 = vmatpush1.xpose.msra.mxu0 0.0
  %330 = vmatprep.subr.mxu0 0.0
  %331 = vmatpush1.xpose.msra.mxu0 0.0
  %332 = vmatprep.subr.mxu0 0.0
  %333 = vmatpush1.xpose.msra.mxu0 0.0
  %334 = vmatprep.subr.mxu0 0.0
  %335 = vmatpush1.xpose.msra.mxu0 0.0
  %336 = vmatprep.mubr.f32.mxu0 0.0
  %337 = vmatmul.mubr.f32.gmra.mrb[0].mxu0 %v270
  %v338 = vpop.f32.mrb[0].mxu0
  %v339 = vadd.f32 0.0, %v338
  %v340 = vpop.f32.mrb[0].mxu0
  %341 = vdwg.mxu0
  %v343 = vsel %vm22, %v191, 0
  %345 = vmatprep.subr.mxu0 0.0
  %346 = vmatpush1.xpose.msra.mxu0 %v122
  %347 = vmatprep.subr.mxu0 0.0
  %348 = vmatpush1.xpose.msra.mxu0 0.0
  %349 = vmatprep.subr.mxu0 0.0
  %350 = vmatpush1.xpose.msra.mxu0 0.0
  %351 = vmatprep.subr.mxu0 0.0
  %352 = vmatpush1.xpose.msra.mxu0 0.0
  %353 = vmatprep.subr.mxu0 0.0
  %354 = vmatpush1.xpose.msra.mxu0 0.0
  %355 = vmatprep.subr.mxu0 0.0
  %356 = vmatpush1.xpose.msra.mxu0 0.0
  %357 = vmatprep.subr.mxu0 0.0
  %358 = vmatpush1.xpose.msra.mxu0 0.0
  %359 = vmatprep.subr.mxu0 0.0
  %360 = vmatpush1.xpose.msra.mxu0 0.0
  %361 = vmatprep.subr.mxu0 0.0
  %362 = vmatpush1.xpose.msra.mxu0 0.0
  %363 = vmatprep.subr.mxu0 0.0
  %364 = vmatpush1.xpose.msra.mxu0 0.0
  %365 = vmatprep.subr.mxu0 0.0
  %366 = vmatpush1.xpose.msra.mxu0 0.0
  %367 = vmatprep.subr.mxu0 0.0
  %368 = vmatpush1.xpose.msra.mxu0 0.0
  %369 = vmatprep.subr.mxu0 0.0
  %370 = vmatpush1.xpose.msra.mxu0 0.0
  %371 = vmatprep.subr.mxu0 0.0
  %372 = vmatpush1.xpose.msra.mxu0 0.0
  %373 = vmatprep.subr.mxu0 0.0
  %374 = vmatpush1.xpose.msra.mxu0 0.0
  %375 = vmatprep.subr.mxu0 0.0
  %376 = vmatpush1.xpose.msra.mxu0 0.0
  %377 = vmatprep.subr.mxu0 0.0
  %378 = vmatpush1.xpose.msra.mxu0 0.0
  %379 = vmatprep.subr.mxu0 0.0
  %380 = vmatpush1.xpose.msra.mxu0 0.0
  %381 = vmatprep.subr.mxu0 0.0
  %382 = vmatpush1.xpose.msra.mxu0 0.0
  %383 = vmatprep.subr.mxu0 0.0
  %384 = vmatpush1.xpose.msra.mxu0 0.0
  %385 = vmatprep.subr.mxu0 0.0
  %386 = vmatpush1.xpose.msra.mxu0 0.0
  %387 = vmatprep.subr.mxu0 0.0
  %388 = vmatpush1.xpose.msra.mxu0 0.0
  %389 = vmatprep.subr.mxu0 0.0
  %390 = vmatpush1.xpose.msra.mxu0 0.0
  %391 = vmatprep.subr.mxu0 0.0
  %392 = vmatpush1.xpose.msra.mxu0 0.0
  %393 = vmatprep.subr.mxu0 0.0
  %394 = vmatpush1.xpose.msra.mxu0 0.0
  %395 = vmatprep.subr.mxu0 0.0
  %396 = vmatpush1.xpose.msra.mxu0 0.0
  %397 = vmatprep.subr.mxu0 0.0
  %398 = vmatpush1.xpose.msra.mxu0 0.0
  %399 = vmatprep.subr.mxu0 0.0
  %400 = vmatpush1.xpose.msra.mxu0 0.0
  %401 = vmatprep.subr.mxu0 0.0
  %402 = vmatpush1.xpose.msra.mxu0 0.0
  %403 = vmatprep.subr.mxu0 0.0
  %404 = vmatpush1.xpose.msra.mxu0 0.0
  %405 = vmatprep.subr.mxu0 0.0
  %406 = vmatpush1.xpose.msra.mxu0 0.0
  %407 = vmatprep.subr.mxu0 0.0
  %408 = vmatpush1.xpose.msra.mxu0 0.0
  %409 = vmatprep.mubr.f32.mxu0 0.0
  %410 = vmatmul.mubr.f32.gmra.mrb[0].mxu0 %v343
  %v411 = vpop.f32.mrb[0].mxu0
  %v412 = vadd.f32 %v339, %v411
  %v413 = vpop.f32.mrb[0].mxu0
  %414 = vdwg.mxu0
  %s415 = scalar_lea.vmem %s0, 16
  %v416 = vld [vmem:[%s415] sm:$0xff]
  %v418 = vsel %vm22, %v416, 0
  %420 = vmatprep.subr.mxu0 0.0
  %421 = vmatpush1.msra.mxu0 %v102
  %422 = vmatprep.subr.mxu0 0.0
  %423 = vmatpush1.msra.mxu0 %v107
  %424 = vmatprep.subr.mxu0 0.0
  %425 = vmatpush1.msra.mxu0 %v112
  %426 = vmatprep.subr.mxu0 0.0
  %427 = vmatpush1.msra.mxu0 %v117
  %428 = vmatprep.subr.mxu0 0.0
  %429 = vmatpush1.msra.mxu0 0.0
  %430 = vmatprep.subr.mxu0 0.0
  %431 = vmatpush1.msra.mxu0 0.0
  %432 = vmatprep.subr.mxu0 0.0
  %433 = vmatpush1.msra.mxu0 0.0
  %434 = vmatprep.subr.mxu0 0.0
  %435 = vmatpush1.msra.mxu0 0.0
  %436 = vmatprep.subr.mxu0 0.0
  %437 = vmatpush1.msra.mxu0 0.0
  %438 = vmatprep.subr.mxu0 0.0
  %439 = vmatpush1.msra.mxu0 0.0
  %440 = vmatprep.subr.mxu0 0.0
  %441 = vmatpush1.msra.mxu0 0.0
  %442 = vmatprep.subr.mxu0 0.0
  %443 = vmatpush1.msra.mxu0 0.0
  %444 = vmatprep.subr.mxu0 0.0
  %445 = vmatpush1.msra.mxu0 0.0
  %446 = vmatprep.subr.mxu0 0.0
  %447 = vmatpush1.msra.mxu0 0.0
  %448 = vmatprep.subr.mxu0 0.0
  %449 = vmatpush1.msra.mxu0 0.0
  %450 = vmatprep.subr.mxu0 0.0
  %451 = vmatpush1.msra.mxu0 0.0
  %452 = vmatprep.subr.mxu0 0.0
  %453 = vmatpush1.msra.mxu0 0.0
  %454 = vmatprep.subr.mxu0 0.0
  %455 = vmatpush1.msra.mxu0 0.0
  %456 = vmatprep.subr.mxu0 0.0
  %457 = vmatpush1.msra.mxu0 0.0
  %458 = vmatprep.subr.mxu0 0.0
  %459 = vmatpush1.msra.mxu0 0.0
  %460 = vmatprep.subr.mxu0 0.0
  %461 = vmatpush1.msra.mxu0 0.0
  %462 = vmatprep.subr.mxu0 0.0
  %463 = vmatpush1.msra.mxu0 0.0
  %464 = vmatprep.subr.mxu0 0.0
  %465 = vmatpush1.msra.mxu0 0.0
  %466 = vmatprep.subr.mxu0 0.0
  %467 = vmatpush1.msra.mxu0 0.0
  %468 = vmatprep.subr.mxu0 0.0
  %469 = vmatpush1.msra.mxu0 0.0
  %470 = vmatprep.subr.mxu0 0.0
  %471 = vmatpush1.msra.mxu0 0.0
  %472 = vmatprep.subr.mxu0 0.0
  %473 = vmatpush1.msra.mxu0 0.0
  %474 = vmatprep.subr.mxu0 0.0
  %475 = vmatpush1.msra.mxu0 0.0
  %476 = vmatprep.subr.mxu0 0.0
  %477 = vmatpush1.msra.mxu0 0.0
  %478 = vmatprep.subr.mxu0 0.0
  %479 = vmatpush1.msra.mxu0 0.0
  %480 = vmatprep.subr.mxu0 0.0
  %481 = vmatpush1.msra.mxu0 0.0
  %482 = vmatprep.subr.mxu0 0.0
  %483 = vmatpush1.msra.mxu0 0.0
  %484 = vmatprep.mubr.f32.mxu0 0.0
  %485 = vmatmul.mubr.f32.gmra.mrb[0].mxu0 %v418
  %v486 = vpop.f32.mrb[0].mxu0
  %v487 = vadd.f32 0.0, %v486
  %v488 = vpop.f32.mrb[0].mxu0
  %489 = vdwg.mxu0
  %v491 = vsel %vm22, %v487, 0
  %493 = vmatprep.subr.mxu0 0.0
  %494 = vmatpush1.xpose.msra.mxu0 %v418
  %495 = vmatprep.subr.mxu0 0.0
  %496 = vmatpush1.xpose.msra.mxu0 0.0
  %497 = vmatprep.subr.mxu0 0.0
  %498 = vmatpush1.xpose.msra.mxu0 0.0
  %499 = vmatprep.subr.mxu0 0.0
  %500 = vmatpush1.xpose.msra.mxu0 0.0
  %501 = vmatprep.subr.mxu0 0.0
  %502 = vmatpush1.xpose.msra.mxu0 0.0
  %503 = vmatprep.subr.mxu0 0.0
  %504 = vmatpush1.xpose.msra.mxu0 0.0
  %505 = vmatprep.subr.mxu0 0.0
  %506 = vmatpush1.xpose.msra.mxu0 0.0
  %507 = vmatprep.subr.mxu0 0.0
  %508 = vmatpush1.xpose.msra.mxu0 0.0
  %509 = vmatprep.subr.mxu0 0.0
  %510 = vmatpush1.xpose.msra.mxu0 0.0
  %511 = vmatprep.subr.mxu0 0.0
  %512 = vmatpush1.xpose.msra.mxu0 0.0
  %513 = vmatprep.subr.mxu0 0.0
  %514 = vmatpush1.xpose.msra.mxu0 0.0
  %515 = vmatprep.subr.mxu0 0.0
  %516 = vmatpush1.xpose.msra.mxu0 0.0
  %517 = vmatprep.subr.mxu0 0.0
  %518 = vmatpush1.xpose.msra.mxu0 0.0
  %519 = vmatprep.subr.mxu0 0.0
  %520 = vmatpush1.xpose.msra.mxu0 0.0
  %521 = vmatprep.subr.mxu0 0.0
  %522 = vmatpush1.xpose.msra.mxu0 0.0
  %523 = vmatprep.subr.mxu0 0.0
  %524 = vmatpush1.xpose.msra.mxu0 0.0
  %525 = vmatprep.subr.mxu0 0.0
  %526 = vmatpush1.xpose.msra.mxu0 0.0
  %527 = vmatprep.subr.mxu0 0.0
  %528 = vmatpush1.xpose.msra.mxu0 0.0
  %529 = vmatprep.subr.mxu0 0.0
  %530 = vmatpush1.xpose.msra.mxu0 0.0
  %531 = vmatprep.subr.mxu0 0.0
  %532 = vmatpush1.xpose.msra.mxu0 0.0
  %533 = vmatprep.subr.mxu0 0.0
  %534 = vmatpush1.xpose.msra.mxu0 0.0
  %535 = vmatprep.subr.mxu0 0.0
  %536 = vmatpush1.xpose.msra.mxu0 0.0
  %537 = vmatprep.subr.mxu0 0.0
  %538 = vmatpush1.xpose.msra.mxu0 0.0
  %539 = vmatprep.subr.mxu0 0.0
  %540 = vmatpush1.xpose.msra.mxu0 0.0
  %541 = vmatprep.subr.mxu0 0.0
  %542 = vmatpush1.xpose.msra.mxu0 0.0
  %543 = vmatprep.subr.mxu0 0.0
  %544 = vmatpush1.xpose.msra.mxu0 0.0
  %545 = vmatprep.subr.mxu0 0.0
  %546 = vmatpush1.xpose.msra.mxu0 0.0
  %547 = vmatprep.subr.mxu0 0.0
  %548 = vmatpush1.xpose.msra.mxu0 0.0
  %549 = vmatprep.subr.mxu0 0.0
  %550 = vmatpush1.xpose.msra.mxu0 0.0
  %551 = vmatprep.subr.mxu0 0.0
  %552 = vmatpush1.xpose.msra.mxu0 0.0
  %553 = vmatprep.subr.mxu0 0.0
  %554 = vmatpush1.xpose.msra.mxu0 0.0
  %555 = vmatprep.subr.mxu0 0.0
  %556 = vmatpush1.xpose.msra.mxu0 0.0
  %557 = vmatprep.mubr.f32.mxu0 0.0
  %558 = vmatmul.mubr.f32.gmra.mrb[0].mxu0 %v491
  %v559 = vpop.f32.mrb[0].mxu0
  %v560 = vadd.f32 0.0, %v559
  %v561 = vpop.f32.mrb[0].mxu0
  %562 = vdwg.mxu0
  %v563 = vadd.f32 %v412, %v560
  %s564 = scalar_lea.vmem %s0, 24
  %v565 = vld [vmem:[%s564] sm:$0xff]
  %v567 = vsel %vm22, %v565, 0
  %569 = vmatprep.subr.mxu0 0.0
  %570 = vmatpush1.msra.mxu0 %v102
  %571 = vmatprep.subr.mxu0 0.0
  %572 = vmatpush1.msra.mxu0 %v107
  %573 = vmatprep.subr.mxu0 0.0
  %574 = vmatpush1.msra.mxu0 %v112
  %575 = vmatprep.subr.mxu0 0.0
  %576 = vmatpush1.msra.mxu0 %v117
  %577 = vmatprep.subr.mxu0 0.0
  %578 = vmatpush1.msra.mxu0 0.0
  %579 = vmatprep.subr.mxu0 0.0
  %580 = vmatpush1.msra.mxu0 0.0
  %581 = vmatprep.subr.mxu0 0.0
  %582 = vmatpush1.msra.mxu0 0.0
  %583 = vmatprep.subr.mxu0 0.0
  %584 = vmatpush1.msra.mxu0 0.0
  %585 = vmatprep.subr.mxu0 0.0
  %586 = vmatpush1.msra.mxu0 0.0
  %587 = vmatprep.subr.mxu0 0.0
  %588 = vmatpush1.msra.mxu0 0.0
  %589 = vmatprep.subr.mxu0 0.0
  %590 = vmatpush1.msra.mxu0 0.0
  %591 = vmatprep.subr.mxu0 0.0
  %592 = vmatpush1.msra.mxu0 0.0
  %593 = vmatprep.subr.mxu0 0.0
  %594 = vmatpush1.msra.mxu0 0.0
  %595 = vmatprep.subr.mxu0 0.0
  %596 = vmatpush1.msra.mxu0 0.0
  %597 = vmatprep.subr.mxu0 0.0
  %598 = vmatpush1.msra.mxu0 0.0
  %599 = vmatprep.subr.mxu0 0.0
  %600 = vmatpush1.msra.mxu0 0.0
  %601 = vmatprep.subr.mxu0 0.0
  %602 = vmatpush1.msra.mxu0 0.0
  %603 = vmatprep.subr.mxu0 0.0
  %604 = vmatpush1.msra.mxu0 0.0
  %605 = vmatprep.subr.mxu0 0.0
  %606 = vmatpush1.msra.mxu0 0.0
  %607 = vmatprep.subr.mxu0 0.0
  %608 = vmatpush1.msra.mxu0 0.0
  %609 = vmatprep.subr.mxu0 0.0
  %610 = vmatpush1.msra.mxu0 0.0
  %611 = vmatprep.subr.mxu0 0.0
  %612 = vmatpush1.msra.mxu0 0.0
  %613 = vmatprep.subr.mxu0 0.0
  %614 = vmatpush1.msra.mxu0 0.0
  %615 = vmatprep.subr.mxu0 0.0
  %616 = vmatpush1.msra.mxu0 0.0
  %617 = vmatprep.subr.mxu0 0.0
  %618 = vmatpush1.msra.mxu0 0.0
  %619 = vmatprep.subr.mxu0 0.0
  %620 = vmatpush1.msra.mxu0 0.0
  %621 = vmatprep.subr.mxu0 0.0
  %622 = vmatpush1.msra.mxu0 0.0
  %623 = vmatprep.subr.mxu0 0.0
  %624 = vmatpush1.msra.mxu0 0.0
  %625 = vmatprep.subr.mxu0 0.0
  %626 = vmatpush1.msra.mxu0 0.0
  %627 = vmatprep.subr.mxu0 0.0
  %628 = vmatpush1.msra.mxu0 0.0
  %629 = vmatprep.subr.mxu0 0.0
  %630 = vmatpush1.msra.mxu0 0.0
  %631 = vmatprep.subr.mxu0 0.0
  %632 = vmatpush1.msra.mxu0 0.0
  %633 = vmatprep.mubr.f32.mxu0 0.0
  %634 = vmatmul.mubr.f32.gmra.mrb[0].mxu0 %v567
  %v635 = vpop.f32.mrb[0].mxu0
  %v636 = vadd.f32 0.0, %v635
  %v637 = vpop.f32.mrb[0].mxu0
  %638 = vdwg.mxu0
  %v640 = vsel %vm22, %v636, 0
  %642 = vmatprep.subr.mxu0 0.0
  %643 = vmatpush1.xpose.msra.mxu0 %v567
  %644 = vmatprep.subr.mxu0 0.0
  %645 = vmatpush1.xpose.msra.mxu0 0.0
  %646 = vmatprep.subr.mxu0 0.0
  %647 = vmatpush1.xpose.msra.mxu0 0.0
  %648 = vmatprep.subr.mxu0 0.0
  %649 = vmatpush1.xpose.msra.mxu0 0.0
  %650 = vmatprep.subr.mxu0 0.0
  %651 = vmatpush1.xpose.msra.mxu0 0.0
  %652 = vmatprep.subr.mxu0 0.0
  %653 = vmatpush1.xpose.msra.mxu0 0.0
  %654 = vmatprep.subr.mxu0 0.0
  %655 = vmatpush1.xpose.msra.mxu0 0.0
  %656 = vmatprep.subr.mxu0 0.0
  %657 = vmatpush1.xpose.msra.mxu0 0.0
  %658 = vmatprep.subr.mxu0 0.0
  %659 = vmatpush1.xpose.msra.mxu0 0.0
  %660 = vmatprep.subr.mxu0 0.0
  %661 = vmatpush1.xpose.msra.mxu0 0.0
  %662 = vmatprep.subr.mxu0 0.0
  %663 = vmatpush1.xpose.msra.mxu0 0.0
  %664 = vmatprep.subr.mxu0 0.0
  %665 = vmatpush1.xpose.msra.mxu0 0.0
  %666 = vmatprep.subr.mxu0 0.0
  %667 = vmatpush1.xpose.msra.mxu0 0.0
  %668 = vmatprep.subr.mxu0 0.0
  %669 = vmatpush1.xpose.msra.mxu0 0.0
  %670 = vmatprep.subr.mxu0 0.0
  %671 = vmatpush1.xpose.msra.mxu0 0.0
  %672 = vmatprep.subr.mxu0 0.0
  %673 = vmatpush1.xpose.msra.mxu0 0.0
  %674 = vmatprep.subr.mxu0 0.0
  %675 = vmatpush1.xpose.msra.mxu0 0.0
  %676 = vmatprep.subr.mxu0 0.0
  %677 = vmatpush1.xpose.msra.mxu0 0.0
  %678 = vmatprep.subr.mxu0 0.0
  %679 = vmatpush1.xpose.msra.mxu0 0.0
  %680 = vmatprep.subr.mxu0 0.0
  %681 = vmatpush1.xpose.msra.mxu0 0.0
  %682 = vmatprep.subr.mxu0 0.0
  %683 = vmatpush1.xpose.msra.mxu0 0.0
  %684 = vmatprep.subr.mxu0 0.0
  %685 = vmatpush1.xpose.msra.mxu0 0.0
  %686 = vmatprep.subr.mxu0 0.0
  %687 = vmatpush1.xpose.msra.mxu0 0.0
  %688 = vmatprep.subr.mxu0 0.0
  %689 = vmatpush1.xpose.msra.mxu0 0.0
  %690 = vmatprep.subr.mxu0 0.0
  %691 = vmatpush1.xpose.msra.mxu0 0.0
  %692 = vmatprep.subr.mxu0 0.0
  %693 = vmatpush1.xpose.msra.mxu0 0.0
  %694 = vmatprep.subr.mxu0 0.0
  %695 = vmatpush1.xpose.msra.mxu0 0.0
  %696 = vmatprep.subr.mxu0 0.0
  %697 = vmatpush1.xpose.msra.mxu0 0.0
  %698 = vmatprep.subr.mxu0 0.0
  %699 = vmatpush1.xpose.msra.mxu0 0.0
  %700 = vmatprep.subr.mxu0 0.0
  %701 = vmatpush1.xpose.msra.mxu0 0.0
  %702 = vmatprep.subr.mxu0 0.0
  %703 = vmatpush1.xpose.msra.mxu0 0.0
  %704 = vmatprep.subr.mxu0 0.0
  %705 = vmatpush1.xpose.msra.mxu0 0.0
  %706 = vmatprep.mubr.f32.mxu0 0.0
  %707 = vmatmul.mubr.f32.gmra.mrb[0].mxu0 %v640
  %v708 = vpop.f32.mrb[0].mxu0
  %v709 = vadd.f32 0.0, %v708
  %v710 = vpop.f32.mrb[0].mxu0
  %711 = vdwg.mxu0
  %v712 = vadd.f32 %v563, %v709
  %s713 = scalar_lea.vmem %s0, 32
  %v714 = vld [vmem:[%s713] sm:$0xff]
  %v716 = vsel %vm22, %v714, 0
  %718 = vmatprep.subr.mxu0 0.0
  %719 = vmatpush1.msra.mxu0 %v102
  %720 = vmatprep.subr.mxu0 0.0
  %721 = vmatpush1.msra.mxu0 %v107
  %722 = vmatprep.subr.mxu0 0.0
  %723 = vmatpush1.msra.mxu0 %v112
  %724 = vmatprep.subr.mxu0 0.0
  %725 = vmatpush1.msra.mxu0 %v117
  %726 = vmatprep.subr.mxu0 0.0
  %727 = vmatpush1.msra.mxu0 0.0
  %728 = vmatprep.subr.mxu0 0.0
  %729 = vmatpush1.msra.mxu0 0.0
  %730 = vmatprep.subr.mxu0 0.0
  %731 = vmatpush1.msra.mxu0 0.0
  %732 = vmatprep.subr.mxu0 0.0
  %733 = vmatpush1.msra.mxu0 0.0
  %734 = vmatprep.subr.mxu0 0.0
  %735 = vmatpush1.msra.mxu0 0.0
  %736 = vmatprep.subr.mxu0 0.0
  %737 = vmatpush1.msra.mxu0 0.0
  %738 = vmatprep.subr.mxu0 0.0
  %739 = vmatpush1.msra.mxu0 0.0
  %740 = vmatprep.subr.mxu0 0.0
  %741 = vmatpush1.msra.mxu0 0.0
  %742 = vmatprep.subr.mxu0 0.0
  %743 = vmatpush1.msra.mxu0 0.0
  %744 = vmatprep.subr.mxu0 0.0
  %745 = vmatpush1.msra.mxu0 0.0
  %746 = vmatprep.subr.mxu0 0.0
  %747 = vmatpush1.msra.mxu0 0.0
  %748 = vmatprep.subr.mxu0 0.0
  %749 = vmatpush1.msra.mxu0 0.0
  %750 = vmatprep.subr.mxu0 0.0
  %751 = vmatpush1.msra.mxu0 0.0
  %752 = vmatprep.subr.mxu0 0.0
  %753 = vmatpush1.msra.mxu0 0.0
  %754 = vmatprep.subr.mxu0 0.0
  %755 = vmatpush1.msra.mxu0 0.0
  %756 = vmatprep.subr.mxu0 0.0
  %757 = vmatpush1.msra.mxu0 0.0
  %758 = vmatprep.subr.mxu0 0.0
  %759 = vmatpush1.msra.mxu0 0.0
  %760 = vmatprep.subr.mxu0 0.0
  %761 = vmatpush1.msra.mxu0 0.0
  %762 = vmatprep.subr.mxu0 0.0
  %763 = vmatpush1.msra.mxu0 0.0
  %764 = vmatprep.subr.mxu0 0.0
  %765 = vmatpush1.msra.mxu0 0.0
  %766 = vmatprep.subr.mxu0 0.0
  %767 = vmatpush1.msra.mxu0 0.0
  %768 = vmatprep.subr.mxu0 0.0
  %769 = vmatpush1.msra.mxu0 0.0
  %770 = vmatprep.subr.mxu0 0.0
  %771 = vmatpush1.msra.mxu0 0.0
  %772 = vmatprep.subr.mxu0 0.0
  %773 = vmatpush1.msra.mxu0 0.0
  %774 = vmatprep.subr.mxu0 0.0
  %775 = vmatpush1.msra.mxu0 0.0
  %776 = vmatprep.subr.mxu0 0.0
  %777 = vmatpush1.msra.mxu0 0.0
  %778 = vmatprep.subr.mxu0 0.0
  %779 = vmatpush1.msra.mxu0 0.0
  %780 = vmatprep.subr.mxu0 0.0
  %781 = vmatpush1.msra.mxu0 0.0
  %782 = vmatprep.mubr.f32.mxu0 0.0
  %783 = vmatmul.mubr.f32.gmra.mrb[0].mxu0 %v716
  %v784 = vpop.f32.mrb[0].mxu0
  %v785 = vadd.f32 0.0, %v784
  %v786 = vpop.f32.mrb[0].mxu0
  %787 = vdwg.mxu0
  %v789 = vsel %vm22, %v785, 0
  %791 = vmatprep.subr.mxu0 0.0
  %792 = vmatpush1.xpose.msra.mxu0 %v716
  %793 = vmatprep.subr.mxu0 0.0
  %794 = vmatpush1.xpose.msra.mxu0 0.0
  %795 = vmatprep.subr.mxu0 0.0
  %796 = vmatpush1.xpose.msra.mxu0 0.0
  %797 = vmatprep.subr.mxu0 0.0
  %798 = vmatpush1.xpose.msra.mxu0 0.0
  %799 = vmatprep.subr.mxu0 0.0
  %800 = vmatpush1.xpose.msra.mxu0 0.0
  %801 = vmatprep.subr.mxu0 0.0
  %802 = vmatpush1.xpose.msra.mxu0 0.0
  %803 = vmatprep.subr.mxu0 0.0
  %804 = vmatpush1.xpose.msra.mxu0 0.0
  %805 = vmatprep.subr.mxu0 0.0
  %806 = vmatpush1.xpose.msra.mxu0 0.0
  %807 = vmatprep.subr.mxu0 0.0
  %808 = vmatpush1.xpose.msra.mxu0 0.0
  %809 = vmatprep.subr.mxu0 0.0
  %810 = vmatpush1.xpose.msra.mxu0 0.0
  %811 = vmatprep.subr.mxu0 0.0
  %812 = vmatpush1.xpose.msra.mxu0 0.0
  %813 = vmatprep.subr.mxu0 0.0
  %814 = vmatpush1.xpose.msra.mxu0 0.0
  %815 = vmatprep.subr.mxu0 0.0
  %816 = vmatpush1.xpose.msra.mxu0 0.0
  %817 = vmatprep.subr.mxu0 0.0
  %818 = vmatpush1.xpose.msra.mxu0 0.0
  %819 = vmatprep.subr.mxu0 0.0
  %820 = vmatpush1.xpose.msra.mxu0 0.0
  %821 = vmatprep.subr.mxu0 0.0
  %822 = vmatpush1.xpose.msra.mxu0 0.0
  %823 = vmatprep.subr.mxu0 0.0
  %824 = vmatpush1.xpose.msra.mxu0 0.0
  %825 = vmatprep.subr.mxu0 0.0
  %826 = vmatpush1.xpose.msra.mxu0 0.0
  %827 = vmatprep.subr.mxu0 0.0
  %828 = vmatpush1.xpose.msra.mxu0 0.0
  %829 = vmatprep.subr.mxu0 0.0
  %830 = vmatpush1.xpose.msra.mxu0 0.0
  %831 = vmatprep.subr.mxu0 0.0
  %832 = vmatpush1.xpose.msra.mxu0 0.0
  %833 = vmatprep.subr.mxu0 0.0
  %834 = vmatpush1.xpose.msra.mxu0 0.0
  %835 = vmatprep.subr.mxu0 0.0
  %836 = vmatpush1.xpose.msra.mxu0 0.0
  %837 = vmatprep.subr.mxu0 0.0
  %838 = vmatpush1.xpose.msra.mxu0 0.0
  %839 = vmatprep.subr.mxu0 0.0
  %840 = vmatpush1.xpose.msra.mxu0 0.0
  %841 = vmatprep.subr.mxu0 0.0
  %842 = vmatpush1.xpose.msra.mxu0 0.0
  %843 = vmatprep.subr.mxu0 0.0
  %844 = vmatpush1.xpose.msra.mxu0 0.0
  %845 = vmatprep.subr.mxu0 0.0
  %846 = vmatpush1.xpose.msra.mxu0 0.0
  %847 = vmatprep.subr.mxu0 0.0
  %848 = vmatpush1.xpose.msra.mxu0 0.0
  %849 = vmatprep.subr.mxu0 0.0
  %850 = vmatpush1.xpose.msra.mxu0 0.0
  %851 = vmatprep.subr.mxu0 0.0
  %852 = vmatpush1.xpose.msra.mxu0 0.0
  %853 = vmatprep.subr.mxu0 0.0
  %854 = vmatpush1.xpose.msra.mxu0 0.0
  %855 = vmatprep.mubr.f32.mxu0 0.0
  %856 = vmatmul.mubr.f32.gmra.mrb[0].mxu0 %v789
  %v857 = vpop.f32.mrb[0].mxu0
  %v858 = vadd.f32 0.0, %v857
  %v859 = vpop.f32.mrb[0].mxu0
  %860 = vdwg.mxu0
  %v861 = vadd.f32 %v712, %v858
  %s862 = scalar_lea.vmem %s0, 40
  %v863 = vld [vmem:[%s862] sm:$0xff]
  %v865 = vsel %vm22, %v863, 0
  %867 = vmatprep.subr.mxu0 0.0
  %868 = vmatpush1.msra.mxu0 %v102
  %869 = vmatprep.subr.mxu0 0.0
  %870 = vmatpush1.msra.mxu0 %v107
  %871 = vmatprep.subr.mxu0 0.0
  %872 = vmatpush1.msra.mxu0 %v112
  %873 = vmatprep.subr.mxu0 0.0
  %874 = vmatpush1.msra.mxu0 %v117
  %875 = vmatprep.subr.mxu0 0.0
  %876 = vmatpush1.msra.mxu0 0.0
  %877 = vmatprep.subr.mxu0 0.0
  %878 = vmatpush1.msra.mxu0 0.0
  %879 = vmatprep.subr.mxu0 0.0
  %880 = vmatpush1.msra.mxu0 0.0
  %881 = vmatprep.subr.mxu0 0.0
  %882 = vmatpush1.msra.mxu0 0.0
  %883 = vmatprep.subr.mxu0 0.0
  %884 = vmatpush1.msra.mxu0 0.0
  %885 = vmatprep.subr.mxu0 0.0
  %886 = vmatpush1.msra.mxu0 0.0
  %887 = vmatprep.subr.mxu0 0.0
  %888 = vmatpush1.msra.mxu0 0.0
  %889 = vmatprep.subr.mxu0 0.0
  %890 = vmatpush1.msra.mxu0 0.0
  %891 = vmatprep.subr.mxu0 0.0
  %892 = vmatpush1.msra.mxu0 0.0
  %893 = vmatprep.subr.mxu0 0.0
  %894 = vmatpush1.msra.mxu0 0.0
  %895 = vmatprep.subr.mxu0 0.0
  %896 = vmatpush1.msra.mxu0 0.0
  %897 = vmatprep.subr.mxu0 0.0
  %898 = vmatpush1.msra.mxu0 0.0
  %899 = vmatprep.subr.mxu0 0.0
  %900 = vmatpush1.msra.mxu0 0.0
  %901 = vmatprep.subr.mxu0 0.0
  %902 = vmatpush1.msra.mxu0 0.0
  %903 = vmatprep.subr.mxu0 0.0
  %904 = vmatpush1.msra.mxu0 0.0
  %905 = vmatprep.subr.mxu0 0.0
  %906 = vmatpush1.msra.mxu0 0.0
  %907 = vmatprep.subr.mxu0 0.0
  %908 = vmatpush1.msra.mxu0 0.0
  %909 = vmatprep.subr.mxu0 0.0
  %910 = vmatpush1.msra.mxu0 0.0
  %911 = vmatprep.subr.mxu0 0.0
  %912 = vmatpush1.msra.mxu0 0.0
  %913 = vmatprep.subr.mxu0 0.0
  %914 = vmatpush1.msra.mxu0 0.0
  %915 = vmatprep.subr.mxu0 0.0
  %916 = vmatpush1.msra.mxu0 0.0
  %917 = vmatprep.subr.mxu0 0.0
  %918 = vmatpush1.msra.mxu0 0.0
  %919 = vmatprep.subr.mxu0 0.0
  %920 = vmatpush1.msra.mxu0 0.0
  %921 = vmatprep.subr.mxu0 0.0
  %922 = vmatpush1.msra.mxu0 0.0
  %923 = vmatprep.subr.mxu0 0.0
  %924 = vmatpush1.msra.mxu0 0.0
  %925 = vmatprep.subr.mxu0 0.0
  %926 = vmatpush1.msra.mxu0 0.0
  %927 = vmatprep.subr.mxu0 0.0
  %928 = vmatpush1.msra.mxu0 0.0
  %929 = vmatprep.subr.mxu0 0.0
  %930 = vmatpush1.msra.mxu0 0.0
  %931 = vmatprep.mubr.f32.mxu0 0.0
  %932 = vmatmul.mubr.f32.gmra.mrb[0].mxu0 %v865
  %v933 = vpop.f32.mrb[0].mxu0
  %v934 = vadd.f32 0.0, %v933
  %v935 = vpop.f32.mrb[0].mxu0
  %936 = vdwg.mxu0
  %v938 = vsel %vm22, %v934, 0
  %940 = vmatprep.subr.mxu0 0.0
  %941 = vmatpush1.xpose.msra.mxu0 %v865
  %942 = vmatprep.subr.mxu0 0.0
  %943 = vmatpush1.xpose.msra.mxu0 0.0
  %944 = vmatprep.subr.mxu0 0.0
  %945 = vmatpush1.xpose.msra.mxu0 0.0
  %946 = vmatprep.subr.mxu0 0.0
  %947 = vmatpush1.xpose.msra.mxu0 0.0
  %948 = vmatprep.subr.mxu0 0.0
  %949 = vmatpush1.xpose.msra.mxu0 0.0
  %950 = vmatprep.subr.mxu0 0.0
  %951 = vmatpush1.xpose.msra.mxu0 0.0
  %952 = vmatprep.subr.mxu0 0.0
  %953 = vmatpush1.xpose.msra.mxu0 0.0
  %954 = vmatprep.subr.mxu0 0.0
  %955 = vmatpush1.xpose.msra.mxu0 0.0
  %956 = vmatprep.subr.mxu0 0.0
  %957 = vmatpush1.xpose.msra.mxu0 0.0
  %958 = vmatprep.subr.mxu0 0.0
  %959 = vmatpush1.xpose.msra.mxu0 0.0
  %960 = vmatprep.subr.mxu0 0.0
  %961 = vmatpush1.xpose.msra.mxu0 0.0
  %962 = vmatprep.subr.mxu0 0.0
  %963 = vmatpush1.xpose.msra.mxu0 0.0
  %964 = vmatprep.subr.mxu0 0.0
  %965 = vmatpush1.xpose.msra.mxu0 0.0
  %966 = vmatprep.subr.mxu0 0.0
  %967 = vmatpush1.xpose.msra.mxu0 0.0
  %968 = vmatprep.subr.mxu0 0.0
  %969 = vmatpush1.xpose.msra.mxu0 0.0
  %970 = vmatprep.subr.mxu0 0.0
  %971 = vmatpush1.xpose.msra.mxu0 0.0
  %972 = vmatprep.subr.mxu0 0.0
  %973 = vmatpush1.xpose.msra.mxu0 0.0
  %974 = vmatprep.subr.mxu0 0.0
  %975 = vmatpush1.xpose.msra.mxu0 0.0
  %976 = vmatprep.subr.mxu0 0.0
  %977 = vmatpush1.xpose.msra.mxu0 0.0
  %978 = vmatprep.subr.mxu0 0.0
  %979 = vmatpush1.xpose.msra.mxu0 0.0
  %980 = vmatprep.subr.mxu0 0.0
  %981 = vmatpush1.xpose.msra.mxu0 0.0
  %982 = vmatprep.subr.mxu0 0.0
  %983 = vmatpush1.xpose.msra.mxu0 0.0
  %984 = vmatprep.subr.mxu0 0.0
  %985 = vmatpush1.xpose.msra.mxu0 0.0
  %986 = vmatprep.subr.mxu0 0.0
  %987 = vmatpush1.xpose.msra.mxu0 0.0
  %988 = vmatprep.subr.mxu0 0.0
  %989 = vmatpush1.xpose.msra.mxu0 0.0
  %990 = vmatprep.subr.mxu0 0.0
  %991 = vmatpush1.xpose.msra.mxu0 0.0
  %992 = vmatprep.subr.mxu0 0.0
  %993 = vmatpush1.xpose.msra.mxu0 0.0
  %994 = vmatprep.subr.mxu0 0.0
  %995 = vmatpush1.xpose.msra.mxu0 0.0
  %996 = vmatprep.subr.mxu0 0.0
  %997 = vmatpush1.xpose.msra.mxu0 0.0
  %998 = vmatprep.subr.mxu0 0.0
  %999 = vmatpush1.xpose.msra.mxu0 0.0
  %1000 = vmatprep.subr.mxu0 0.0
  %1001 = vmatpush1.xpose.msra.mxu0 0.0
  %1002 = vmatprep.subr.mxu0 0.0
  %1003 = vmatpush1.xpose.msra.mxu0 0.0
  %1004 = vmatprep.mubr.f32.mxu0 0.0
  %1005 = vmatmul.mubr.f32.gmra.mrb[0].mxu0 %v938
  %v1006 = vpop.f32.mrb[0].mxu0
  %v1007 = vadd.f32 0.0, %v1006
  %v1008 = vpop.f32.mrb[0].mxu0
  %1009 = vdwg.mxu0
  %v1010 = vadd.f32 %v861, %v1007
  %s1011 = scalar_lea.vmem %s0, 48
  %v1012 = vld [vmem:[%s1011] sm:$0xff]
  %v1014 = vsel %vm22, %v1012, 0
  %1016 = vmatprep.subr.mxu0 0.0
  %1017 = vmatpush1.msra.mxu0 %v102
  %1018 = vmatprep.subr.mxu0 0.0
  %1019 = vmatpush1.msra.mxu0 %v107
  %1020 = vmatprep.subr.mxu0 0.0
  %1021 = vmatpush1.msra.mxu0 %v112
  %1022 = vmatprep.subr.mxu0 0.0
  %1023 = vmatpush1.msra.mxu0 %v117
  %1024 = vmatprep.subr.mxu0 0.0
  %1025 = vmatpush1.msra.mxu0 0.0
  %1026 = vmatprep.subr.mxu0 0.0
  %1027 = vmatpush1.msra.mxu0 0.0
  %1028 = vmatprep.subr.mxu0 0.0
  %1029 = vmatpush1.msra.mxu0 0.0
  %1030 = vmatprep.subr.mxu0 0.0
  %1031 = vmatpush1.msra.mxu0 0.0
  %1032 = vmatprep.subr.mxu0 0.0
  %1033 = vmatpush1.msra.mxu0 0.0
  %1034 = vmatprep.subr.mxu0 0.0
  %1035 = vmatpush1.msra.mxu0 0.0
  %1036 = vmatprep.subr.mxu0 0.0
  %1037 = vmatpush1.msra.mxu0 0.0
  %1038 = vmatprep.subr.mxu0 0.0
  %1039 = vmatpush1.msra.mxu0 0.0
  %1040 = vmatprep.subr.mxu0 0.0
  %1041 = vmatpush1.msra.mxu0 0.0
  %1042 = vmatprep.subr.mxu0 0.0
  %1043 = vmatpush1.msra.mxu0 0.0
  %1044 = vmatprep.subr.mxu0 0.0
  %1045 = vmatpush1.msra.mxu0 0.0
  %1046 = vmatprep.subr.mxu0 0.0
  %1047 = vmatpush1.msra.mxu0 0.0
  %1048 = vmatprep.subr.mxu0 0.0
  %1049 = vmatpush1.msra.mxu0 0.0
  %1050 = vmatprep.subr.mxu0 0.0
  %1051 = vmatpush1.msra.mxu0 0.0
  %1052 = vmatprep.subr.mxu0 0.0
  %1053 = vmatpush1.msra.mxu0 0.0
  %1054 = vmatprep.subr.mxu0 0.0
  %1055 = vmatpush1.msra.mxu0 0.0
  %1056 = vmatprep.subr.mxu0 0.0
  %1057 = vmatpush1.msra.mxu0 0.0
  %1058 = vmatprep.subr.mxu0 0.0
  %1059 = vmatpush1.msra.mxu0 0.0
  %1060 = vmatprep.subr.mxu0 0.0
  %1061 = vmatpush1.msra.mxu0 0.0
  %1062 = vmatprep.subr.mxu0 0.0
  %1063 = vmatpush1.msra.mxu0 0.0
  %1064 = vmatprep.subr.mxu0 0.0
  %1065 = vmatpush1.msra.mxu0 0.0
  %1066 = vmatprep.subr.mxu0 0.0
  %1067 = vmatpush1.msra.mxu0 0.0
  %1068 = vmatprep.subr.mxu0 0.0
  %1069 = vmatpush1.msra.mxu0 0.0
  %1070 = vmatprep.subr.mxu0 0.0
  %1071 = vmatpush1.msra.mxu0 0.0
  %1072 = vmatprep.subr.mxu0 0.0
  %1073 = vmatpush1.msra.mxu0 0.0
  %1074 = vmatprep.subr.mxu0 0.0
  %1075 = vmatpush1.msra.mxu0 0.0
  %1076 = vmatprep.subr.mxu0 0.0
  %1077 = vmatpush1.msra.mxu0 0.0
  %1078 = vmatprep.subr.mxu0 0.0
  %1079 = vmatpush1.msra.mxu0 0.0
  %1080 = vmatprep.mubr.f32.mxu0 0.0
  %1081 = vmatmul.mubr.f32.gmra.mrb[0].mxu0 %v1014
  %v1082 = vpop.f32.mrb[0].mxu0
  %v1083 = vadd.f32 0.0, %v1082
  %v1084 = vpop.f32.mrb[0].mxu0
  %1085 = vdwg.mxu0
  %v1087 = vsel %vm22, %v1083, 0
  %1089 = vmatprep.subr.mxu0 0.0
  %1090 = vmatpush1.xpose.msra.mxu0 %v1014
  %1091 = vmatprep.subr.mxu0 0.0
  %1092 = vmatpush1.xpose.msra.mxu0 0.0
  %1093 = vmatprep.subr.mxu0 0.0
  %1094 = vmatpush1.xpose.msra.mxu0 0.0
  %1095 = vmatprep.subr.mxu0 0.0
  %1096 = vmatpush1.xpose.msra.mxu0 0.0
  %1097 = vmatprep.subr.mxu0 0.0
  %1098 = vmatpush1.xpose.msra.mxu0 0.0
  %1099 = vmatprep.subr.mxu0 0.0
  %1100 = vmatpush1.xpose.msra.mxu0 0.0
  %1101 = vmatprep.subr.mxu0 0.0
  %1102 = vmatpush1.xpose.msra.mxu0 0.0
  %1103 = vmatprep.subr.mxu0 0.0
  %1104 = vmatpush1.xpose.msra.mxu0 0.0
  %1105 = vmatprep.subr.mxu0 0.0
  %1106 = vmatpush1.xpose.msra.mxu0 0.0
  %1107 = vmatprep.subr.mxu0 0.0
  %1108 = vmatpush1.xpose.msra.mxu0 0.0
  %1109 = vmatprep.subr.mxu0 0.0
  %1110 = vmatpush1.xpose.msra.mxu0 0.0
  %1111 = vmatprep.subr.mxu0 0.0
  %1112 = vmatpush1.xpose.msra.mxu0 0.0
  %1113 = vmatprep.subr.mxu0 0.0
  %1114 = vmatpush1.xpose.msra.mxu0 0.0
  %1115 = vmatprep.subr.mxu0 0.0
  %1116 = vmatpush1.xpose.msra.mxu0 0.0
  %1117 = vmatprep.subr.mxu0 0.0
  %1118 = vmatpush1.xpose.msra.mxu0 0.0
  %1119 = vmatprep.subr.mxu0 0.0
  %1120 = vmatpush1.xpose.msra.mxu0 0.0
  %1121 = vmatprep.subr.mxu0 0.0
  %1122 = vmatpush1.xpose.msra.mxu0 0.0
  %1123 = vmatprep.subr.mxu0 0.0
  %1124 = vmatpush1.xpose.msra.mxu0 0.0
  %1125 = vmatprep.subr.mxu0 0.0
  %1126 = vmatpush1.xpose.msra.mxu0 0.0
  %1127 = vmatprep.subr.mxu0 0.0
  %1128 = vmatpush1.xpose.msra.mxu0 0.0
  %1129 = vmatprep.subr.mxu0 0.0
  %1130 = vmatpush1.xpose.msra.mxu0 0.0
  %1131 = vmatprep.subr.mxu0 0.0
  %1132 = vmatpush1.xpose.msra.mxu0 0.0
  %1133 = vmatprep.subr.mxu0 0.0
  %1134 = vmatpush1.xpose.msra.mxu0 0.0
  %1135 = vmatprep.subr.mxu0 0.0
  %1136 = vmatpush1.xpose.msra.mxu0 0.0
  %1137 = vmatprep.subr.mxu0 0.0
  %1138 = vmatpush1.xpose.msra.mxu0 0.0
  %1139 = vmatprep.subr.mxu0 0.0
  %1140 = vmatpush1.xpose.msra.mxu0 0.0
  %1141 = vmatprep.subr.mxu0 0.0
  %1142 = vmatpush1.xpose.msra.mxu0 0.0
  %1143 = vmatprep.subr.mxu0 0.0
  %1144 = vmatpush1.xpose.msra.mxu0 0.0
  %1145 = vmatprep.subr.mxu0 0.0
  %1146 = vmatpush1.xpose.msra.mxu0 0.0
  %1147 = vmatprep.subr.mxu0 0.0
  %1148 = vmatpush1.xpose.msra.mxu0 0.0
  %1149 = vmatprep.subr.mxu0 0.0
  %1150 = vmatpush1.xpose.msra.mxu0 0.0
  %1151 = vmatprep.subr.mxu0 0.0
  %1152 = vmatpush1.xpose.msra.mxu0 0.0
  %1153 = vmatprep.mubr.f32.mxu0 0.0
  %1154 = vmatmul.mubr.f32.gmra.mrb[0].mxu0 %v1087
  %v1155 = vpop.f32.mrb[0].mxu0
  %v1156 = vadd.f32 0.0, %v1155
  %v1157 = vpop.f32.mrb[0].mxu0
  %1158 = vdwg.mxu0
  %v1159 = vadd.f32 %v1010, %v1156
  %s1160 = scalar_lea.vmem %s0, 56
  %v1161 = vld [vmem:[%s1160] sm:$0xff]
  %v1163 = vsel %vm22, %v1161, 0
  %1165 = vmatprep.subr.mxu0 0.0
  %1166 = vmatpush1.msra.mxu0 %v102
  %1167 = vmatprep.subr.mxu0 0.0
  %1168 = vmatpush1.msra.mxu0 %v107
  %1169 = vmatprep.subr.mxu0 0.0
  %1170 = vmatpush1.msra.mxu0 %v112
  %1171 = vmatprep.subr.mxu0 0.0
  %1172 = vmatpush1.msra.mxu0 %v117
  %1173 = vmatprep.subr.mxu0 0.0
  %1174 = vmatpush1.msra.mxu0 0.0
  %1175 = vmatprep.subr.mxu0 0.0
  %1176 = vmatpush1.msra.mxu0 0.0
  %1177 = vmatprep.subr.mxu0 0.0
  %1178 = vmatpush1.msra.mxu0 0.0
  %1179 = vmatprep.subr.mxu0 0.0
  %1180 = vmatpush1.msra.mxu0 0.0
  %1181 = vmatprep.subr.mxu0 0.0
  %1182 = vmatpush1.msra.mxu0 0.0
  %1183 = vmatprep.subr.mxu0 0.0
  %1184 = vmatpush1.msra.mxu0 0.0
  %1185 = vmatprep.subr.mxu0 0.0
  %1186 = vmatpush1.msra.mxu0 0.0
  %1187 = vmatprep.subr.mxu0 0.0
  %1188 = vmatpush1.msra.mxu0 0.0
  %1189 = vmatprep.subr.mxu0 0.0
  %1190 = vmatpush1.msra.mxu0 0.0
  %1191 = vmatprep.subr.mxu0 0.0
  %1192 = vmatpush1.msra.mxu0 0.0
  %1193 = vmatprep.subr.mxu0 0.0
  %1194 = vmatpush1.msra.mxu0 0.0
  %1195 = vmatprep.subr.mxu0 0.0
  %1196 = vmatpush1.msra.mxu0 0.0
  %1197 = vmatprep.subr.mxu0 0.0
  %1198 = vmatpush1.msra.mxu0 0.0
  %1199 = vmatprep.subr.mxu0 0.0
  %1200 = vmatpush1.msra.mxu0 0.0
  %1201 = vmatprep.subr.mxu0 0.0
  %1202 = vmatpush1.msra.mxu0 0.0
  %1203 = vmatprep.subr.mxu0 0.0
  %1204 = vmatpush1.msra.mxu0 0.0
  %1205 = vmatprep.subr.mxu0 0.0
  %1206 = vmatpush1.msra.mxu0 0.0
  %1207 = vmatprep.subr.mxu0 0.0
  %1208 = vmatpush1.msra.mxu0 0.0
  %1209 = vmatprep.subr.mxu0 0.0
  %1210 = vmatpush1.msra.mxu0 0.0
  %1211 = vmatprep.subr.mxu0 0.0
  %1212 = vmatpush1.msra.mxu0 0.0
  %1213 = vmatprep.subr.mxu0 0.0
  %1214 = vmatpush1.msra.mxu0 0.0
  %1215 = vmatprep.subr.mxu0 0.0
  %1216 = vmatpush1.msra.mxu0 0.0
  %1217 = vmatprep.subr.mxu0 0.0
  %1218 = vmatpush1.msra.mxu0 0.0
  %1219 = vmatprep.subr.mxu0 0.0
  %1220 = vmatpush1.msra.mxu0 0.0
  %1221 = vmatprep.subr.mxu0 0.0
  %1222 = vmatpush1.msra.mxu0 0.0
  %1223 = vmatprep.subr.mxu0 0.0
  %1224 = vmatpush1.msra.mxu0 0.0
  %1225 = vmatprep.subr.mxu0 0.0
  %1226 = vmatpush1.msra.mxu0 0.0
  %1227 = vmatprep.subr.mxu0 0.0
  %1228 = vmatpush1.msra.mxu0 0.0
  %1229 = vmatprep.mubr.f32.mxu0 0.0
  %1230 = vmatmul.mubr.f32.gmra.mrb[0].mxu0 %v1163
  %v1231 = vpop.f32.mrb[0].mxu0
  %v1232 = vadd.f32 0.0, %v1231
  %v1233 = vpop.f32.mrb[0].mxu0
  %1234 = vdwg.mxu0
  %v1236 = vsel %vm22, %v1232, 0
  %1238 = vmatprep.subr.mxu0 0.0
  %1239 = vmatpush1.xpose.msra.mxu0 %v1163
  %1240 = vmatprep.subr.mxu0 0.0
  %1241 = vmatpush1.xpose.msra.mxu0 0.0
  %1242 = vmatprep.subr.mxu0 0.0
  %1243 = vmatpush1.xpose.msra.mxu0 0.0
  %1244 = vmatprep.subr.mxu0 0.0
  %1245 = vmatpush1.xpose.msra.mxu0 0.0
  %1246 = vmatprep.subr.mxu0 0.0
  %1247 = vmatpush1.xpose.msra.mxu0 0.0
  %1248 = vmatprep.subr.mxu0 0.0
  %1249 = vmatpush1.xpose.msra.mxu0 0.0
  %1250 = vmatprep.subr.mxu0 0.0
  %1251 = vmatpush1.xpose.msra.mxu0 0.0
  %1252 = vmatprep.subr.mxu0 0.0
  %1253 = vmatpush1.xpose.msra.mxu0 0.0
  %1254 = vmatprep.subr.mxu0 0.0
  %1255 = vmatpush1.xpose.msra.mxu0 0.0
  %1256 = vmatprep.subr.mxu0 0.0
  %1257 = vmatpush1.xpose.msra.mxu0 0.0
  %1258 = vmatprep.subr.mxu0 0.0
  %1259 = vmatpush1.xpose.msra.mxu0 0.0
  %1260 = vmatprep.subr.mxu0 0.0
  %1261 = vmatpush1.xpose.msra.mxu0 0.0
  %1262 = vmatprep.subr.mxu0 0.0
  %1263 = vmatpush1.xpose.msra.mxu0 0.0
  %1264 = vmatprep.subr.mxu0 0.0
  %1265 = vmatpush1.xpose.msra.mxu0 0.0
  %1266 = vmatprep.subr.mxu0 0.0
  %1267 = vmatpush1.xpose.msra.mxu0 0.0
  %1268 = vmatprep.subr.mxu0 0.0
  %1269 = vmatpush1.xpose.msra.mxu0 0.0
  %1270 = vmatprep.subr.mxu0 0.0
  %1271 = vmatpush1.xpose.msra.mxu0 0.0
  %1272 = vmatprep.subr.mxu0 0.0
  %1273 = vmatpush1.xpose.msra.mxu0 0.0
  %1274 = vmatprep.subr.mxu0 0.0
  %1275 = vmatpush1.xpose.msra.mxu0 0.0
  %1276 = vmatprep.subr.mxu0 0.0
  %1277 = vmatpush1.xpose.msra.mxu0 0.0
  %1278 = vmatprep.subr.mxu0 0.0
  %1279 = vmatpush1.xpose.msra.mxu0 0.0
  %1280 = vmatprep.subr.mxu0 0.0
  %1281 = vmatpush1.xpose.msra.mxu0 0.0
  %1282 = vmatprep.subr.mxu0 0.0
  %1283 = vmatpush1.xpose.msra.mxu0 0.0
  %1284 = vmatprep.subr.mxu0 0.0
  %1285 = vmatpush1.xpose.msra.mxu0 0.0
  %1286 = vmatprep.subr.mxu0 0.0
  %1287 = vmatpush1.xpose.msra.mxu0 0.0
  %1288 = vmatprep.subr.mxu0 0.0
  %1289 = vmatpush1.xpose.msra.mxu0 0.0
  %1290 = vmatprep.subr.mxu0 0.0
  %1291 = vmatpush1.xpose.msra.mxu0 0.0
  %1292 = vmatprep.subr.mxu0 0.0
  %1293 = vmatpush1.xpose.msra.mxu0 0.0
  %1294 = vmatprep.subr.mxu0 0.0
  %1295 = vmatpush1.xpose.msra.mxu0 0.0
  %1296 = vmatprep.subr.mxu0 0.0
  %1297 = vmatpush1.xpose.msra.mxu0 0.0
  %1298 = vmatprep.subr.mxu0 0.0
  %1299 = vmatpush1.xpose.msra.mxu0 0.0
  %1300 = vmatprep.subr.mxu0 0.0
  %1301 = vmatpush1.xpose.msra.mxu0 0.0
  %1302 = vmatprep.mubr.f32.mxu0 0.0
  %1303 = vmatmul.mubr.f32.gmra.mrb[0].mxu0 %v1236
  %v1304 = vpop.f32.mrb[0].mxu0
  %v1305 = vadd.f32 0.0, %v1304
  %v1306 = vpop.f32.mrb[0].mxu0
  %1307 = vdwg.mxu0
  %v1308 = vadd.f32 %v1159, %v1305
  %s1309 = scalar_lea.vmem %s0, 64
  %v1310 = vld [vmem:[%s1309] sm:$0xff]
  %v1312 = vsel %vm22, %v1310, 0
  %1314 = vmatprep.subr.mxu0 0.0
  %1315 = vmatpush1.msra.mxu0 %v102
  %1316 = vmatprep.subr.mxu0 0.0
  %1317 = vmatpush1.msra.mxu0 %v107
  %1318 = vmatprep.subr.mxu0 0.0
  %1319 = vmatpush1.msra.mxu0 %v112
  %1320 = vmatprep.subr.mxu0 0.0
  %1321 = vmatpush1.msra.mxu0 %v117
  %1322 = vmatprep.subr.mxu0 0.0
  %1323 = vmatpush1.msra.mxu0 0.0
  %1324 = vmatprep.subr.mxu0 0.0
  %1325 = vmatpush1.msra.mxu0 0.0
  %1326 = vmatprep.subr.mxu0 0.0
  %1327 = vmatpush1.msra.mxu0 0.0
  %1328 = vmatprep.subr.mxu0 0.0
  %1329 = vmatpush1.msra.mxu0 0.0
  %1330 = vmatprep.subr.mxu0 0.0
  %1331 = vmatpush1.msra.mxu0 0.0
  %1332 = vmatprep.subr.mxu0 0.0
  %1333 = vmatpush1.msra.mxu0 0.0
  %1334 = vmatprep.subr.mxu0 0.0
  %1335 = vmatpush1.msra.mxu0 0.0
  %1336 = vmatprep.subr.mxu0 0.0
  %1337 = vmatpush1.msra.mxu0 0.0
  %1338 = vmatprep.subr.mxu0 0.0
  %1339 = vmatpush1.msra.mxu0 0.0
  %1340 = vmatprep.subr.mxu0 0.0
  %1341 = vmatpush1.msra.mxu0 0.0
  %1342 = vmatprep.subr.mxu0 0.0
  %1343 = vmatpush1.msra.mxu0 0.0
  %1344 = vmatprep.subr.mxu0 0.0
  %1345 = vmatpush1.msra.mxu0 0.0
  %1346 = vmatprep.subr.mxu0 0.0
  %1347 = vmatpush1.msra.mxu0 0.0
  %1348 = vmatprep.subr.mxu0 0.0
  %1349 = vmatpush1.msra.mxu0 0.0
  %1350 = vmatprep.subr.mxu0 0.0
  %1351 = vmatpush1.msra.mxu0 0.0
  %1352 = vmatprep.subr.mxu0 0.0
  %1353 = vmatpush1.msra.mxu0 0.0
  %1354 = vmatprep.subr.mxu0 0.0
  %1355 = vmatpush1.msra.mxu0 0.0
  %1356 = vmatprep.subr.mxu0 0.0
  %1357 = vmatpush1.msra.mxu0 0.0
  %1358 = vmatprep.subr.mxu0 0.0
  %1359 = vmatpush1.msra.mxu0 0.0
  %1360 = vmatprep.subr.mxu0 0.0
  %1361 = vmatpush1.msra.mxu0 0.0
  %1362 = vmatprep.subr.mxu0 0.0
  %1363 = vmatpush1.msra.mxu0 0.0
  %1364 = vmatprep.subr.mxu0 0.0
  %1365 = vmatpush1.msra.mxu0 0.0
  %1366 = vmatprep.subr.mxu0 0.0
  %1367 = vmatpush1.msra.mxu0 0.0
  %1368 = vmatprep.subr.mxu0 0.0
  %1369 = vmatpush1.msra.mxu0 0.0
  %1370 = vmatprep.subr.mxu0 0.0
  %1371 = vmatpush1.msra.mxu0 0.0
  %1372 = vmatprep.subr.mxu0 0.0
  %1373 = vmatpush1.msra.mxu0 0.0
  %1374 = vmatprep.subr.mxu0 0.0
  %1375 = vmatpush1.msra.mxu0 0.0
  %1376 = vmatprep.subr.mxu0 0.0
  %1377 = vmatpush1.msra.mxu0 0.0
  %1378 = vmatprep.mubr.f32.mxu0 0.0
  %1379 = vmatmul.mubr.f32.gmra.mrb[0].mxu0 %v1312
  %v1380 = vpop.f32.mrb[0].mxu0
  %v1381 = vadd.f32 0.0, %v1380
  %v1382 = vpop.f32.mrb[0].mxu0
  %1383 = vdwg.mxu0
  %v1385 = vsel %vm22, %v1381, 0
  %1387 = vmatprep.subr.mxu0 0.0
  %1388 = vmatpush1.xpose.msra.mxu0 %v1312
  %1389 = vmatprep.subr.mxu0 0.0
  %1390 = vmatpush1.xpose.msra.mxu0 0.0
  %1391 = vmatprep.subr.mxu0 0.0
  %1392 = vmatpush1.xpose.msra.mxu0 0.0
  %1393 = vmatprep.subr.mxu0 0.0
  %1394 = vmatpush1.xpose.msra.mxu0 0.0
  %1395 = vmatprep.subr.mxu0 0.0
  %1396 = vmatpush1.xpose.msra.mxu0 0.0
  %1397 = vmatprep.subr.mxu0 0.0
  %1398 = vmatpush1.xpose.msra.mxu0 0.0
  %1399 = vmatprep.subr.mxu0 0.0
  %1400 = vmatpush1.xpose.msra.mxu0 0.0
  %1401 = vmatprep.subr.mxu0 0.0
  %1402 = vmatpush1.xpose.msra.mxu0 0.0
  %1403 = vmatprep.subr.mxu0 0.0
  %1404 = vmatpush1.xpose.msra.mxu0 0.0
  %1405 = vmatprep.subr.mxu0 0.0
  %1406 = vmatpush1.xpose.msra.mxu0 0.0
  %1407 = vmatprep.subr.mxu0 0.0
  %1408 = vmatpush1.xpose.msra.mxu0 0.0
  %1409 = vmatprep.subr.mxu0 0.0
  %1410 = vmatpush1.xpose.msra.mxu0 0.0
  %1411 = vmatprep.subr.mxu0 0.0
  %1412 = vmatpush1.xpose.msra.mxu0 0.0
  %1413 = vmatprep.subr.mxu0 0.0
  %1414 = vmatpush1.xpose.msra.mxu0 0.0
  %1415 = vmatprep.subr.mxu0 0.0
  %1416 = vmatpush1.xpose.msra.mxu0 0.0
  %1417 = vmatprep.subr.mxu0 0.0
  %1418 = vmatpush1.xpose.msra.mxu0 0.0
  %1419 = vmatprep.subr.mxu0 0.0
  %1420 = vmatpush1.xpose.msra.mxu0 0.0
  %1421 = vmatprep.subr.mxu0 0.0
  %1422 = vmatpush1.xpose.msra.mxu0 0.0
  %1423 = vmatprep.subr.mxu0 0.0
  %1424 = vmatpush1.xpose.msra.mxu0 0.0
  %1425 = vmatprep.subr.mxu0 0.0
  %1426 = vmatpush1.xpose.msra.mxu0 0.0
  %1427 = vmatprep.subr.mxu0 0.0
  %1428 = vmatpush1.xpose.msra.mxu0 0.0
  %1429 = vmatprep.subr.mxu0 0.0
  %1430 = vmatpush1.xpose.msra.mxu0 0.0
  %1431 = vmatprep.subr.mxu0 0.0
  %1432 = vmatpush1.xpose.msra.mxu0 0.0
  %1433 = vmatprep.subr.mxu0 0.0
  %1434 = vmatpush1.xpose.msra.mxu0 0.0
  %1435 = vmatprep.subr.mxu0 0.0
  %1436 = vmatpush1.xpose.msra.mxu0 0.0
  %1437 = vmatprep.subr.mxu0 0.0
  %1438 = vmatpush1.xpose.msra.mxu0 0.0
  %1439 = vmatprep.subr.mxu0 0.0
  %1440 = vmatpush1.xpose.msra.mxu0 0.0
  %1441 = vmatprep.subr.mxu0 0.0
  %1442 = vmatpush1.xpose.msra.mxu0 0.0
  %1443 = vmatprep.subr.mxu0 0.0
  %1444 = vmatpush1.xpose.msra.mxu0 0.0
  %1445 = vmatprep.subr.mxu0 0.0
  %1446 = vmatpush1.xpose.msra.mxu0 0.0
  %1447 = vmatprep.subr.mxu0 0.0
  %1448 = vmatpush1.xpose.msra.mxu0 0.0
  %1449 = vmatprep.subr.mxu0 0.0
  %1450 = vmatpush1.xpose.msra.mxu0 0.0
  %1451 = vmatprep.mubr.f32.mxu0 0.0
  %1452 = vmatmul.mubr.f32.gmra.mrb[0].mxu0 %v1385
  %v1453 = vpop.f32.mrb[0].mxu0
  %v1454 = vadd.f32 0.0, %v1453
  %v1455 = vpop.f32.mrb[0].mxu0
  %1456 = vdwg.mxu0
  %v1457 = vadd.f32 %v1308, %v1454
  %s1458 = scalar_lea.vmem %s0, 72
  %v1459 = vld [vmem:[%s1458] sm:$0xff]
  %v1461 = vsel %vm22, %v1459, 0
  %1463 = vmatprep.subr.mxu0 0.0
  %1464 = vmatpush1.msra.mxu0 %v102
  %1465 = vmatprep.subr.mxu0 0.0
  %1466 = vmatpush1.msra.mxu0 %v107
  %1467 = vmatprep.subr.mxu0 0.0
  %1468 = vmatpush1.msra.mxu0 %v112
  %1469 = vmatprep.subr.mxu0 0.0
  %1470 = vmatpush1.msra.mxu0 %v117
  %1471 = vmatprep.subr.mxu0 0.0
  %1472 = vmatpush1.msra.mxu0 0.0
  %1473 = vmatprep.subr.mxu0 0.0
  %1474 = vmatpush1.msra.mxu0 0.0
  %1475 = vmatprep.subr.mxu0 0.0
  %1476 = vmatpush1.msra.mxu0 0.0
  %1477 = vmatprep.subr.mxu0 0.0
  %1478 = vmatpush1.msra.mxu0 0.0
  %1479 = vmatprep.subr.mxu0 0.0
  %1480 = vmatpush1.msra.mxu0 0.0
  %1481 = vmatprep.subr.mxu0 0.0
  %1482 = vmatpush1.msra.mxu0 0.0
  %1483 = vmatprep.subr.mxu0 0.0
  %1484 = vmatpush1.msra.mxu0 0.0
  %1485 = vmatprep.subr.mxu0 0.0
  %1486 = vmatpush1.msra.mxu0 0.0
  %1487 = vmatprep.subr.mxu0 0.0
  %1488 = vmatpush1.msra.mxu0 0.0
  %1489 = vmatprep.subr.mxu0 0.0
  %1490 = vmatpush1.msra.mxu0 0.0
  %1491 = vmatprep.subr.mxu0 0.0
  %1492 = vmatpush1.msra.mxu0 0.0
  %1493 = vmatprep.subr.mxu0 0.0
  %1494 = vmatpush1.msra.mxu0 0.0
  %1495 = vmatprep.subr.mxu0 0.0
  %1496 = vmatpush1.msra.mxu0 0.0
  %1497 = vmatprep.subr.mxu0 0.0
  %1498 = vmatpush1.msra.mxu0 0.0
  %1499 = vmatprep.subr.mxu0 0.0
  %1500 = vmatpush1.msra.mxu0 0.0
  %1501 = vmatprep.subr.mxu0 0.0
  %1502 = vmatpush1.msra.mxu0 0.0
  %1503 = vmatprep.subr.mxu0 0.0
  %1504 = vmatpush1.msra.mxu0 0.0
  %1505 = vmatprep.subr.mxu0 0.0
  %1506 = vmatpush1.msra.mxu0 0.0
  %1507 = vmatprep.subr.mxu0 0.0
  %1508 = vmatpush1.msra.mxu0 0.0
  %1509 = vmatprep.subr.mxu0 0.0
  %1510 = vmatpush1.msra.mxu0 0.0
  %1511 = vmatprep.subr.mxu0 0.0
  %1512 = vmatpush1.msra.mxu0 0.0
  %1513 = vmatprep.subr.mxu0 0.0
  %1514 = vmatpush1.msra.mxu0 0.0
  %1515 = vmatprep.subr.mxu0 0.0
  %1516 = vmatpush1.msra.mxu0 0.0
  %1517 = vmatprep.subr.mxu0 0.0
  %1518 = vmatpush1.msra.mxu0 0.0
  %1519 = vmatprep.subr.mxu0 0.0
  %1520 = vmatpush1.msra.mxu0 0.0
  %1521 = vmatprep.subr.mxu0 0.0
  %1522 = vmatpush1.msra.mxu0 0.0
  %1523 = vmatprep.subr.mxu0 0.0
  %1524 = vmatpush1.msra.mxu0 0.0
  %1525 = vmatprep.subr.mxu0 0.0
  %1526 = vmatpush1.msra.mxu0 0.0
  %1527 = vmatprep.mubr.f32.mxu0 0.0
  %1528 = vmatmul.mubr.f32.gmra.mrb[0].mxu0 %v1461
  %v1529 = vpop.f32.mrb[0].mxu0
  %v1530 = vadd.f32 0.0, %v1529
  %v1531 = vpop.f32.mrb[0].mxu0
  %1532 = vdwg.mxu0
  %v1534 = vsel %vm22, %v1530, 0
  %1536 = vmatprep.subr.mxu0 0.0
  %1537 = vmatpush1.xpose.msra.mxu0 %v1461
  %1538 = vmatprep.subr.mxu0 0.0
  %1539 = vmatpush1.xpose.msra.mxu0 0.0
  %1540 = vmatprep.subr.mxu0 0.0
  %1541 = vmatpush1.xpose.msra.mxu0 0.0
  %1542 = vmatprep.subr.mxu0 0.0
  %1543 = vmatpush1.xpose.msra.mxu0 0.0
  %1544 = vmatprep.subr.mxu0 0.0
  %1545 = vmatpush1.xpose.msra.mxu0 0.0
  %1546 = vmatprep.subr.mxu0 0.0
  %1547 = vmatpush1.xpose.msra.mxu0 0.0
  %1548 = vmatprep.subr.mxu0 0.0
  %1549 = vmatpush1.xpose.msra.mxu0 0.0
  %1550 = vmatprep.subr.mxu0 0.0
  %1551 = vmatpush1.xpose.msra.mxu0 0.0
  %1552 = vmatprep.subr.mxu0 0.0
  %1553 = vmatpush1.xpose.msra.mxu0 0.0
  %1554 = vmatprep.subr.mxu0 0.0
  %1555 = vmatpush1.xpose.msra.mxu0 0.0
  %1556 = vmatprep.subr.mxu0 0.0
  %1557 = vmatpush1.xpose.msra.mxu0 0.0
  %1558 = vmatprep.subr.mxu0 0.0
  %1559 = vmatpush1.xpose.msra.mxu0 0.0
  %1560 = vmatprep.subr.mxu0 0.0
  %1561 = vmatpush1.xpose.msra.mxu0 0.0
  %1562 = vmatprep.subr.mxu0 0.0
  %1563 = vmatpush1.xpose.msra.mxu0 0.0
  %1564 = vmatprep.subr.mxu0 0.0
  %1565 = vmatpush1.xpose.msra.mxu0 0.0
  %1566 = vmatprep.subr.mxu0 0.0
  %1567 = vmatpush1.xpose.msra.mxu0 0.0
  %1568 = vmatprep.subr.mxu0 0.0
  %1569 = vmatpush1.xpose.msra.mxu0 0.0
  %1570 = vmatprep.subr.mxu0 0.0
  %1571 = vmatpush1.xpose.msra.mxu0 0.0
  %1572 = vmatprep.subr.mxu0 0.0
  %1573 = vmatpush1.xpose.msra.mxu0 0.0
  %1574 = vmatprep.subr.mxu0 0.0
  %1575 = vmatpush1.xpose.msra.mxu0 0.0
  %1576 = vmatprep.subr.mxu0 0.0
  %1577 = vmatpush1.xpose.msra.mxu0 0.0
  %1578 = vmatprep.subr.mxu0 0.0
  %1579 = vmatpush1.xpose.msra.mxu0 0.0
  %1580 = vmatprep.subr.mxu0 0.0
  %1581 = vmatpush1.xpose.msra.mxu0 0.0
  %1582 = vmatprep.subr.mxu0 0.0
  %1583 = vmatpush1.xpose.msra.mxu0 0.0
  %1584 = vmatprep.subr.mxu0 0.0
  %1585 = vmatpush1.xpose.msra.mxu0 0.0
  %1586 = vmatprep.subr.mxu0 0.0
  %1587 = vmatpush1.xpose.msra.mxu0 0.0
  %1588 = vmatprep.subr.mxu0 0.0
  %1589 = vmatpush1.xpose.msra.mxu0 0.0
  %1590 = vmatprep.subr.mxu0 0.0
  %1591 = vmatpush1.xpose.msra.mxu0 0.0
  %1592 = vmatprep.subr.mxu0 0.0
  %1593 = vmatpush1.xpose.msra.mxu0 0.0
  %1594 = vmatprep.subr.mxu0 0.0
  %1595 = vmatpush1.xpose.msra.mxu0 0.0
  %1596 = vmatprep.subr.mxu0 0.0
  %1597 = vmatpush1.xpose.msra.mxu0 0.0
  %1598 = vmatprep.subr.mxu0 0.0
  %1599 = vmatpush1.xpose.msra.mxu0 0.0
  %1600 = vmatprep.mubr.f32.mxu0 0.0
  %1601 = vmatmul.mubr.f32.gmra.mrb[0].mxu0 %v1534
  %v1602 = vpop.f32.mrb[0].mxu0
  %v1603 = vadd.f32 0.0, %v1602
  %v1604 = vpop.f32.mrb[0].mxu0
  %1605 = vdwg.mxu0
  %v1606 = vadd.f32 %v1457, %v1603
  %s1607 = scalar_lea.vmem %s0, 80
  %v1608 = vld [vmem:[%s1607] sm:$0xff]
  %v1610 = vsel %vm22, %v1608, 0
  %1612 = vmatprep.subr.mxu0 0.0
  %1613 = vmatpush1.msra.mxu0 %v102
  %1614 = vmatprep.subr.mxu0 0.0
  %1615 = vmatpush1.msra.mxu0 %v107
  %1616 = vmatprep.subr.mxu0 0.0
  %1617 = vmatpush1.msra.mxu0 %v112
  %1618 = vmatprep.subr.mxu0 0.0
  %1619 = vmatpush1.msra.mxu0 %v117
  %1620 = vmatprep.subr.mxu0 0.0
  %1621 = vmatpush1.msra.mxu0 0.0
  %1622 = vmatprep.subr.mxu0 0.0
  %1623 = vmatpush1.msra.mxu0 0.0
  %1624 = vmatprep.subr.mxu0 0.0
  %1625 = vmatpush1.msra.mxu0 0.0
  %1626 = vmatprep.subr.mxu0 0.0
  %1627 = vmatpush1.msra.mxu0 0.0
  %1628 = vmatprep.subr.mxu0 0.0
  %1629 = vmatpush1.msra.mxu0 0.0
  %1630 = vmatprep.subr.mxu0 0.0
  %1631 = vmatpush1.msra.mxu0 0.0
  %1632 = vmatprep.subr.mxu0 0.0
  %1633 = vmatpush1.msra.mxu0 0.0
  %1634 = vmatprep.subr.mxu0 0.0
  %1635 = vmatpush1.msra.mxu0 0.0
  %1636 = vmatprep.subr.mxu0 0.0
  %1637 = vmatpush1.msra.mxu0 0.0
  %1638 = vmatprep.subr.mxu0 0.0
  %1639 = vmatpush1.msra.mxu0 0.0
  %1640 = vmatprep.subr.mxu0 0.0
  %1641 = vmatpush1.msra.mxu0 0.0
  %1642 = vmatprep.subr.mxu0 0.0
  %1643 = vmatpush1.msra.mxu0 0.0
  %1644 = vmatprep.subr.mxu0 0.0
  %1645 = vmatpush1.msra.mxu0 0.0
  %1646 = vmatprep.subr.mxu0 0.0
  %1647 = vmatpush1.msra.mxu0 0.0
  %1648 = vmatprep.subr.mxu0 0.0
  %1649 = vmatpush1.msra.mxu0 0.0
  %1650 = vmatprep.subr.mxu0 0.0
  %1651 = vmatpush1.msra.mxu0 0.0
  %1652 = vmatprep.subr.mxu0 0.0
  %1653 = vmatpush1.msra.mxu0 0.0
  %1654 = vmatprep.subr.mxu0 0.0
  %1655 = vmatpush1.msra.mxu0 0.0
  %1656 = vmatprep.subr.mxu0 0.0
  %1657 = vmatpush1.msra.mxu0 0.0
  %1658 = vmatprep.subr.mxu0 0.0
  %1659 = vmatpush1.msra.mxu0 0.0
  %1660 = vmatprep.subr.mxu0 0.0
  %1661 = vmatpush1.msra.mxu0 0.0
  %1662 = vmatprep.subr.mxu0 0.0
  %1663 = vmatpush1.msra.mxu0 0.0
  %1664 = vmatprep.subr.mxu0 0.0
  %1665 = vmatpush1.msra.mxu0 0.0
  %1666 = vmatprep.subr.mxu0 0.0
  %1667 = vmatpush1.msra.mxu0 0.0
  %1668 = vmatprep.subr.mxu0 0.0
  %1669 = vmatpush1.msra.mxu0 0.0
  %1670 = vmatprep.subr.mxu0 0.0
  %1671 = vmatpush1.msra.mxu0 0.0
  %1672 = vmatprep.subr.mxu0 0.0
  %1673 = vmatpush1.msra.mxu0 0.0
  %1674 = vmatprep.subr.mxu0 0.0
  %1675 = vmatpush1.msra.mxu0 0.0
  %1676 = vmatprep.mubr.f32.mxu0 0.0
  %1677 = vmatmul.mubr.f32.gmra.mrb[0].mxu0 %v1610
  %v1678 = vpop.f32.mrb[0].mxu0
  %v1679 = vadd.f32 0.0, %v1678
  %v1680 = vpop.f32.mrb[0].mxu0
  %1681 = vdwg.mxu0
  %v1683 = vsel %vm22, %v1679, 0
  %1685 = vmatprep.subr.mxu0 0.0
  %1686 = vmatpush1.xpose.msra.mxu0 %v1610
  %1687 = vmatprep.subr.mxu0 0.0
  %1688 = vmatpush1.xpose.msra.mxu0 0.0
  %1689 = vmatprep.subr.mxu0 0.0
  %1690 = vmatpush1.xpose.msra.mxu0 0.0
  %1691 = vmatprep.subr.mxu0 0.0
  %1692 = vmatpush1.xpose.msra.mxu0 0.0
  %1693 = vmatprep.subr.mxu0 0.0
  %1694 = vmatpush1.xpose.msra.mxu0 0.0
  %1695 = vmatprep.subr.mxu0 0.0
  %1696 = vmatpush1.xpose.msra.mxu0 0.0
  %1697 = vmatprep.subr.mxu0 0.0
  %1698 = vmatpush1.xpose.msra.mxu0 0.0
  %1699 = vmatprep.subr.mxu0 0.0
  %1700 = vmatpush1.xpose.msra.mxu0 0.0
  %1701 = vmatprep.subr.mxu0 0.0
  %1702 = vmatpush1.xpose.msra.mxu0 0.0
  %1703 = vmatprep.subr.mxu0 0.0
  %1704 = vmatpush1.xpose.msra.mxu0 0.0
  %1705 = vmatprep.subr.mxu0 0.0
  %1706 = vmatpush1.xpose.msra.mxu0 0.0
  %1707 = vmatprep.subr.mxu0 0.0
  %1708 = vmatpush1.xpose.msra.mxu0 0.0
  %1709 = vmatprep.subr.mxu0 0.0
  %1710 = vmatpush1.xpose.msra.mxu0 0.0
  %1711 = vmatprep.subr.mxu0 0.0
  %1712 = vmatpush1.xpose.msra.mxu0 0.0
  %1713 = vmatprep.subr.mxu0 0.0
  %1714 = vmatpush1.xpose.msra.mxu0 0.0
  %1715 = vmatprep.subr.mxu0 0.0
  %1716 = vmatpush1.xpose.msra.mxu0 0.0
  %1717 = vmatprep.subr.mxu0 0.0
  %1718 = vmatpush1.xpose.msra.mxu0 0.0
  %1719 = vmatprep.subr.mxu0 0.0
  %1720 = vmatpush1.xpose.msra.mxu0 0.0
  %1721 = vmatprep.subr.mxu0 0.0
  %1722 = vmatpush1.xpose.msra.mxu0 0.0
  %1723 = vmatprep.subr.mxu0 0.0
  %1724 = vmatpush1.xpose.msra.mxu0 0.0
  %1725 = vmatprep.subr.mxu0 0.0
  %1726 = vmatpush1.xpose.msra.mxu0 0.0
  %1727 = vmatprep.subr.mxu0 0.0
  %1728 = vmatpush1.xpose.msra.mxu0 0.0
  %1729 = vmatprep.subr.mxu0 0.0
  %1730 = vmatpush1.xpose.msra.mxu0 0.0
  %1731 = vmatprep.subr.mxu0 0.0
  %1732 = vmatpush1.xpose.msra.mxu0 0.0
  %1733 = vmatprep.subr.mxu0 0.0
  %1734 = vmatpush1.xpose.msra.mxu0 0.0
  %1735 = vmatprep.subr.mxu0 0.0
  %1736 = vmatpush1.xpose.msra.mxu0 0.0
  %1737 = vmatprep.subr.mxu0 0.0
  %1738 = vmatpush1.xpose.msra.mxu0 0.0
  %1739 = vmatprep.subr.mxu0 0.0
  %1740 = vmatpush1.xpose.msra.mxu0 0.0
  %1741 = vmatprep.subr.mxu0 0.0
  %1742 = vmatpush1.xpose.msra.mxu0 0.0
  %1743 = vmatprep.subr.mxu0 0.0
  %1744 = vmatpush1.xpose.msra.mxu0 0.0
  %1745 = vmatprep.subr.mxu0 0.0
  %1746 = vmatpush1.xpose.msra.mxu0 0.0
  %1747 = vmatprep.subr.mxu0 0.0
  %1748 = vmatpush1.xpose.msra.mxu0 0.0
  %1749 = vmatprep.mubr.f32.mxu0 0.0
  %1750 = vmatmul.mubr.f32.gmra.mrb[0].mxu0 %v1683
  %v1751 = vpop.f32.mrb[0].mxu0
  %v1752 = vadd.f32 0.0, %v1751
  %v1753 = vpop.f32.mrb[0].mxu0
  %1754 = vdwg.mxu0
  %v1755 = vadd.f32 %v1606, %v1752
  %s1756 = scalar_lea.vmem %s0, 88
  %v1757 = vld [vmem:[%s1756] sm:$0xff]
  %v1759 = vsel %vm22, %v1757, 0
  %1761 = vmatprep.subr.mxu0 0.0
  %1762 = vmatpush1.msra.mxu0 %v102
  %1763 = vmatprep.subr.mxu0 0.0
  %1764 = vmatpush1.msra.mxu0 %v107
  %1765 = vmatprep.subr.mxu0 0.0
  %1766 = vmatpush1.msra.mxu0 %v112
  %1767 = vmatprep.subr.mxu0 0.0
  %1768 = vmatpush1.msra.mxu0 %v117
  %1769 = vmatprep.subr.mxu0 0.0
  %1770 = vmatpush1.msra.mxu0 0.0
  %1771 = vmatprep.subr.mxu0 0.0
  %1772 = vmatpush1.msra.mxu0 0.0
  %1773 = vmatprep.subr.mxu0 0.0
  %1774 = vmatpush1.msra.mxu0 0.0
  %1775 = vmatprep.subr.mxu0 0.0
  %1776 = vmatpush1.msra.mxu0 0.0
  %1777 = vmatprep.subr.mxu0 0.0
  %1778 = vmatpush1.msra.mxu0 0.0
  %1779 = vmatprep.subr.mxu0 0.0
  %1780 = vmatpush1.msra.mxu0 0.0
  %1781 = vmatprep.subr.mxu0 0.0
  %1782 = vmatpush1.msra.mxu0 0.0
  %1783 = vmatprep.subr.mxu0 0.0
  %1784 = vmatpush1.msra.mxu0 0.0
  %1785 = vmatprep.subr.mxu0 0.0
  %1786 = vmatpush1.msra.mxu0 0.0
  %1787 = vmatprep.subr.mxu0 0.0
  %1788 = vmatpush1.msra.mxu0 0.0
  %1789 = vmatprep.subr.mxu0 0.0
  %1790 = vmatpush1.msra.mxu0 0.0
  %1791 = vmatprep.subr.mxu0 0.0
  %1792 = vmatpush1.msra.mxu0 0.0
  %1793 = vmatprep.subr.mxu0 0.0
  %1794 = vmatpush1.msra.mxu0 0.0
  %1795 = vmatprep.subr.mxu0 0.0
  %1796 = vmatpush1.msra.mxu0 0.0
  %1797 = vmatprep.subr.mxu0 0.0
  %1798 = vmatpush1.msra.mxu0 0.0
  %1799 = vmatprep.subr.mxu0 0.0
  %1800 = vmatpush1.msra.mxu0 0.0
  %1801 = vmatprep.subr.mxu0 0.0
  %1802 = vmatpush1.msra.mxu0 0.0
  %1803 = vmatprep.subr.mxu0 0.0
  %1804 = vmatpush1.msra.mxu0 0.0
  %1805 = vmatprep.subr.mxu0 0.0
  %1806 = vmatpush1.msra.mxu0 0.0
  %1807 = vmatprep.subr.mxu0 0.0
  %1808 = vmatpush1.msra.mxu0 0.0
  %1809 = vmatprep.subr.mxu0 0.0
  %1810 = vmatpush1.msra.mxu0 0.0
  %1811 = vmatprep.subr.mxu0 0.0
  %1812 = vmatpush1.msra.mxu0 0.0
  %1813 = vmatprep.subr.mxu0 0.0
  %1814 = vmatpush1.msra.mxu0 0.0
  %1815 = vmatprep.subr.mxu0 0.0
  %1816 = vmatpush1.msra.mxu0 0.0
  %1817 = vmatprep.subr.mxu0 0.0
  %1818 = vmatpush1.msra.mxu0 0.0
  %1819 = vmatprep.subr.mxu0 0.0
  %1820 = vmatpush1.msra.mxu0 0.0
  %1821 = vmatprep.subr.mxu0 0.0
  %1822 = vmatpush1.msra.mxu0 0.0
  %1823 = vmatprep.subr.mxu0 0.0
  %1824 = vmatpush1.msra.mxu0 0.0
  %1825 = vmatprep.mubr.f32.mxu0 0.0
  %1826 = vmatmul.mubr.f32.gmra.mrb[0].mxu0 %v1759
  %v1827 = vpop.f32.mrb[0].mxu0
  %v1828 = vadd.f32 0.0, %v1827
  %v1829 = vpop.f32.mrb[0].mxu0
  %1830 = vdwg.mxu0
  %v1832 = vsel %vm22, %v1828, 0
  %1834 = vmatprep.subr.mxu0 0.0
  %1835 = vmatpush1.xpose.msra.mxu0 %v1759
  %1836 = vmatprep.subr.mxu0 0.0
  %1837 = vmatpush1.xpose.msra.mxu0 0.0
  %1838 = vmatprep.subr.mxu0 0.0
  %1839 = vmatpush1.xpose.msra.mxu0 0.0
  %1840 = vmatprep.subr.mxu0 0.0
  %1841 = vmatpush1.xpose.msra.mxu0 0.0
  %1842 = vmatprep.subr.mxu0 0.0
  %1843 = vmatpush1.xpose.msra.mxu0 0.0
  %1844 = vmatprep.subr.mxu0 0.0
  %1845 = vmatpush1.xpose.msra.mxu0 0.0
  %1846 = vmatprep.subr.mxu0 0.0
  %1847 = vmatpush1.xpose.msra.mxu0 0.0
  %1848 = vmatprep.subr.mxu0 0.0
  %1849 = vmatpush1.xpose.msra.mxu0 0.0
  %1850 = vmatprep.subr.mxu0 0.0
  %1851 = vmatpush1.xpose.msra.mxu0 0.0
  %1852 = vmatprep.subr.mxu0 0.0
  %1853 = vmatpush1.xpose.msra.mxu0 0.0
  %1854 = vmatprep.subr.mxu0 0.0
  %1855 = vmatpush1.xpose.msra.mxu0 0.0
  %1856 = vmatprep.subr.mxu0 0.0
  %1857 = vmatpush1.xpose.msra.mxu0 0.0
  %1858 = vmatprep.subr.mxu0 0.0
  %1859 = vmatpush1.xpose.msra.mxu0 0.0
  %1860 = vmatprep.subr.mxu0 0.0
  %1861 = vmatpush1.xpose.msra.mxu0 0.0
  %1862 = vmatprep.subr.mxu0 0.0
  %1863 = vmatpush1.xpose.msra.mxu0 0.0
  %1864 = vmatprep.subr.mxu0 0.0
  %1865 = vmatpush1.xpose.msra.mxu0 0.0
  %1866 = vmatprep.subr.mxu0 0.0
  %1867 = vmatpush1.xpose.msra.mxu0 0.0
  %1868 = vmatprep.subr.mxu0 0.0
  %1869 = vmatpush1.xpose.msra.mxu0 0.0
  %1870 = vmatprep.subr.mxu0 0.0
  %1871 = vmatpush1.xpose.msra.mxu0 0.0
  %1872 = vmatprep.subr.mxu0 0.0
  %1873 = vmatpush1.xpose.msra.mxu0 0.0
  %1874 = vmatprep.subr.mxu0 0.0
  %1875 = vmatpush1.xpose.msra.mxu0 0.0
  %1876 = vmatprep.subr.mxu0 0.0
  %1877 = vmatpush1.xpose.msra.mxu0 0.0
  %1878 = vmatprep.subr.mxu0 0.0
  %1879 = vmatpush1.xpose.msra.mxu0 0.0
  %1880 = vmatprep.subr.mxu0 0.0
  %1881 = vmatpush1.xpose.msra.mxu0 0.0
  %1882 = vmatprep.subr.mxu0 0.0
  %1883 = vmatpush1.xpose.msra.mxu0 0.0
  %1884 = vmatprep.subr.mxu0 0.0
  %1885 = vmatpush1.xpose.msra.mxu0 0.0
  %1886 = vmatprep.subr.mxu0 0.0
  %1887 = vmatpush1.xpose.msra.mxu0 0.0
  %1888 = vmatprep.subr.mxu0 0.0
  %1889 = vmatpush1.xpose.msra.mxu0 0.0
  %1890 = vmatprep.subr.mxu0 0.0
  %1891 = vmatpush1.xpose.msra.mxu0 0.0
  %1892 = vmatprep.subr.mxu0 0.0
  %1893 = vmatpush1.xpose.msra.mxu0 0.0
  %1894 = vmatprep.subr.mxu0 0.0
  %1895 = vmatpush1.xpose.msra.mxu0 0.0
  %1896 = vmatprep.subr.mxu0 0.0
  %1897 = vmatpush1.xpose.msra.mxu0 0.0
  %1898 = vmatprep.mubr.f32.mxu0 0.0
  %1899 = vmatmul.mubr.f32.gmra.mrb[0].mxu0 %v1832
  %v1900 = vpop.f32.mrb[0].mxu0
  %v1901 = vadd.f32 0.0, %v1900
  %v1902 = vpop.f32.mrb[0].mxu0
  %1903 = vdwg.mxu0
  %v1904 = vadd.f32 %v1755, %v1901
  %s1905 = scalar_lea.vmem %s0, 96
  %v1906 = vld [vmem:[%s1905] sm:$0xff]
  %v1908 = vsel %vm22, %v1906, 0
  %1910 = vmatprep.subr.mxu0 0.0
  %1911 = vmatpush1.msra.mxu0 %v102
  %1912 = vmatprep.subr.mxu0 0.0
  %1913 = vmatpush1.msra.mxu0 %v107
  %1914 = vmatprep.subr.mxu0 0.0
  %1915 = vmatpush1.msra.mxu0 %v112
  %1916 = vmatprep.subr.mxu0 0.0
  %1917 = vmatpush1.msra.mxu0 %v117
  %1918 = vmatprep.subr.mxu0 0.0
  %1919 = vmatpush1.msra.mxu0 0.0
  %1920 = vmatprep.subr.mxu0 0.0
  %1921 = vmatpush1.msra.mxu0 0.0
  %1922 = vmatprep.subr.mxu0 0.0
  %1923 = vmatpush1.msra.mxu0 0.0
  %1924 = vmatprep.subr.mxu0 0.0
  %1925 = vmatpush1.msra.mxu0 0.0
  %1926 = vmatprep.subr.mxu0 0.0
  %1927 = vmatpush1.msra.mxu0 0.0
  %1928 = vmatprep.subr.mxu0 0.0
  %1929 = vmatpush1.msra.mxu0 0.0
  %1930 = vmatprep.subr.mxu0 0.0
  %1931 = vmatpush1.msra.mxu0 0.0
  %1932 = vmatprep.subr.mxu0 0.0
  %1933 = vmatpush1.msra.mxu0 0.0
  %1934 = vmatprep.subr.mxu0 0.0
  %1935 = vmatpush1.msra.mxu0 0.0
  %1936 = vmatprep.subr.mxu0 0.0
  %1937 = vmatpush1.msra.mxu0 0.0
  %1938 = vmatprep.subr.mxu0 0.0
  %1939 = vmatpush1.msra.mxu0 0.0
  %1940 = vmatprep.subr.mxu0 0.0
  %1941 = vmatpush1.msra.mxu0 0.0
  %1942 = vmatprep.subr.mxu0 0.0
  %1943 = vmatpush1.msra.mxu0 0.0
  %1944 = vmatprep.subr.mxu0 0.0
  %1945 = vmatpush1.msra.mxu0 0.0
  %1946 = vmatprep.subr.mxu0 0.0
  %1947 = vmatpush1.msra.mxu0 0.0
  %1948 = vmatprep.subr.mxu0 0.0
  %1949 = vmatpush1.msra.mxu0 0.0
  %1950 = vmatprep.subr.mxu0 0.0
  %1951 = vmatpush1.msra.mxu0 0.0
  %1952 = vmatprep.subr.mxu0 0.0
  %1953 = vmatpush1.msra.mxu0 0.0
  %1954 = vmatprep.subr.mxu0 0.0
  %1955 = vmatpush1.msra.mxu0 0.0
  %1956 = vmatprep.subr.mxu0 0.0
  %1957 = vmatpush1.msra.mxu0 0.0
  %1958 = vmatprep.subr.mxu0 0.0
  %1959 = vmatpush1.msra.mxu0 0.0
  %1960 = vmatprep.subr.mxu0 0.0
  %1961 = vmatpush1.msra.mxu0 0.0
  %1962 = vmatprep.subr.mxu0 0.0
  %1963 = vmatpush1.msra.mxu0 0.0
  %1964 = vmatprep.subr.mxu0 0.0
  %1965 = vmatpush1.msra.mxu0 0.0
  %1966 = vmatprep.subr.mxu0 0.0
  %1967 = vmatpush1.msra.mxu0 0.0
  %1968 = vmatprep.subr.mxu0 0.0
  %1969 = vmatpush1.msra.mxu0 0.0
  %1970 = vmatprep.subr.mxu0 0.0
  %1971 = vmatpush1.msra.mxu0 0.0
  %1972 = vmatprep.subr.mxu0 0.0
  %1973 = vmatpush1.msra.mxu0 0.0
  %1974 = vmatprep.mubr.f32.mxu0 0.0
  %1975 = vmatmul.mubr.f32.gmra.mrb[0].mxu0 %v1908
  %v1976 = vpop.f32.mrb[0].mxu0
  %v1977 = vadd.f32 0.0, %v1976
  %v1978 = vpop.f32.mrb[0].mxu0
  %1979 = vdwg.mxu0
  %v1981 = vsel %vm22, %v1977, 0
  %1983 = vmatprep.subr.mxu0 0.0
  %1984 = vmatpush1.xpose.msra.mxu0 %v1908
  %1985 = vmatprep.subr.mxu0 0.0
  %1986 = vmatpush1.xpose.msra.mxu0 0.0
  %1987 = vmatprep.subr.mxu0 0.0
  %1988 = vmatpush1.xpose.msra.mxu0 0.0
  %1989 = vmatprep.subr.mxu0 0.0
  %1990 = vmatpush1.xpose.msra.mxu0 0.0
  %1991 = vmatprep.subr.mxu0 0.0
  %1992 = vmatpush1.xpose.msra.mxu0 0.0
  %1993 = vmatprep.subr.mxu0 0.0
  %1994 = vmatpush1.xpose.msra.mxu0 0.0
  %1995 = vmatprep.subr.mxu0 0.0
  %1996 = vmatpush1.xpose.msra.mxu0 0.0
  %1997 = vmatprep.subr.mxu0 0.0
  %1998 = vmatpush1.xpose.msra.mxu0 0.0
  %1999 = vmatprep.subr.mxu0 0.0
  %2000 = vmatpush1.xpose.msra.mxu0 0.0
  %2001 = vmatprep.subr.mxu0 0.0
  %2002 = vmatpush1.xpose.msra.mxu0 0.0
  %2003 = vmatprep.subr.mxu0 0.0
  %2004 = vmatpush1.xpose.msra.mxu0 0.0
  %2005 = vmatprep.subr.mxu0 0.0
  %2006 = vmatpush1.xpose.msra.mxu0 0.0
  %2007 = vmatprep.subr.mxu0 0.0
  %2008 = vmatpush1.xpose.msra.mxu0 0.0
  %2009 = vmatprep.subr.mxu0 0.0
  %2010 = vmatpush1.xpose.msra.mxu0 0.0
  %2011 = vmatprep.subr.mxu0 0.0
  %2012 = vmatpush1.xpose.msra.mxu0 0.0
  %2013 = vmatprep.subr.mxu0 0.0
  %2014 = vmatpush1.xpose.msra.mxu0 0.0
  %2015 = vmatprep.subr.mxu0 0.0
  %2016 = vmatpush1.xpose.msra.mxu0 0.0
  %2017 = vmatprep.subr.mxu0 0.0
  %2018 = vmatpush1.xpose.msra.mxu0 0.0
  %2019 = vmatprep.subr.mxu0 0.0
  %2020 = vmatpush1.xpose.msra.mxu0 0.0
  %2021 = vmatprep.subr.mxu0 0.0
  %2022 = vmatpush1.xpose.msra.mxu0 0.0
  %2023 = vmatprep.subr.mxu0 0.0
  %2024 = vmatpush1.xpose.msra.mxu0 0.0
  %2025 = vmatprep.subr.mxu0 0.0
  %2026 = vmatpush1.xpose.msra.mxu0 0.0
  %2027 = vmatprep.subr.mxu0 0.0
  %2028 = vmatpush1.xpose.msra.mxu0 0.0
  %2029 = vmatprep.subr.mxu0 0.0
  %2030 = vmatpush1.xpose.msra.mxu0 0.0
  %2031 = vmatprep.subr.mxu0 0.0
  %2032 = vmatpush1.xpose.msra.mxu0 0.0
  %2033 = vmatprep.subr.mxu0 0.0
  %2034 = vmatpush1.xpose.msra.mxu0 0.0
  %2035 = vmatprep.subr.mxu0 0.0
  %2036 = vmatpush1.xpose.msra.mxu0 0.0
  %2037 = vmatprep.subr.mxu0 0.0
  %2038 = vmatpush1.xpose.msra.mxu0 0.0
  %2039 = vmatprep.subr.mxu0 0.0
  %2040 = vmatpush1.xpose.msra.mxu0 0.0
  %2041 = vmatprep.subr.mxu0 0.0
  %2042 = vmatpush1.xpose.msra.mxu0 0.0
  %2043 = vmatprep.subr.mxu0 0.0
  %2044 = vmatpush1.xpose.msra.mxu0 0.0
  %2045 = vmatprep.subr.mxu0 0.0
  %2046 = vmatpush1.xpose.msra.mxu0 0.0
  %2047 = vmatprep.mubr.f32.mxu0 0.0
  %2048 = vmatmul.mubr.f32.gmra.mrb[0].mxu0 %v1981
  %v2049 = vpop.f32.mrb[0].mxu0
  %v2050 = vadd.f32 0.0, %v2049
  %v2051 = vpop.f32.mrb[0].mxu0
  %2052 = vdwg.mxu0
  %v2053 = vadd.f32 %v1904, %v2050
  %s2054 = scalar_lea.vmem %s0, 104
  %v2055 = vld [vmem:[%s2054] sm:$0xff]
  %v2057 = vsel %vm22, %v2055, 0
  %2059 = vmatprep.subr.mxu0 0.0
  %2060 = vmatpush1.msra.mxu0 %v102
  %2061 = vmatprep.subr.mxu0 0.0
  %2062 = vmatpush1.msra.mxu0 %v107
  %2063 = vmatprep.subr.mxu0 0.0
  %2064 = vmatpush1.msra.mxu0 %v112
  %2065 = vmatprep.subr.mxu0 0.0
  %2066 = vmatpush1.msra.mxu0 %v117
  %2067 = vmatprep.subr.mxu0 0.0
  %2068 = vmatpush1.msra.mxu0 0.0
  %2069 = vmatprep.subr.mxu0 0.0
  %2070 = vmatpush1.msra.mxu0 0.0
  %2071 = vmatprep.subr.mxu0 0.0
  %2072 = vmatpush1.msra.mxu0 0.0
  %2073 = vmatprep.subr.mxu0 0.0
  %2074 = vmatpush1.msra.mxu0 0.0
  %2075 = vmatprep.subr.mxu0 0.0
  %2076 = vmatpush1.msra.mxu0 0.0
  %2077 = vmatprep.subr.mxu0 0.0
  %2078 = vmatpush1.msra.mxu0 0.0
  %2079 = vmatprep.subr.mxu0 0.0
  %2080 = vmatpush1.msra.mxu0 0.0
  %2081 = vmatprep.subr.mxu0 0.0
  %2082 = vmatpush1.msra.mxu0 0.0
  %2083 = vmatprep.subr.mxu0 0.0
  %2084 = vmatpush1.msra.mxu0 0.0
  %2085 = vmatprep.subr.mxu0 0.0
  %2086 = vmatpush1.msra.mxu0 0.0
  %2087 = vmatprep.subr.mxu0 0.0
  %2088 = vmatpush1.msra.mxu0 0.0
  %2089 = vmatprep.subr.mxu0 0.0
  %2090 = vmatpush1.msra.mxu0 0.0
  %2091 = vmatprep.subr.mxu0 0.0
  %2092 = vmatpush1.msra.mxu0 0.0
  %2093 = vmatprep.subr.mxu0 0.0
  %2094 = vmatpush1.msra.mxu0 0.0
  %2095 = vmatprep.subr.mxu0 0.0
  %2096 = vmatpush1.msra.mxu0 0.0
  %2097 = vmatprep.subr.mxu0 0.0
  %2098 = vmatpush1.msra.mxu0 0.0
  %2099 = vmatprep.subr.mxu0 0.0
  %2100 = vmatpush1.msra.mxu0 0.0
  %2101 = vmatprep.subr.mxu0 0.0
  %2102 = vmatpush1.msra.mxu0 0.0
  %2103 = vmatprep.subr.mxu0 0.0
  %2104 = vmatpush1.msra.mxu0 0.0
  %2105 = vmatprep.subr.mxu0 0.0
  %2106 = vmatpush1.msra.mxu0 0.0
  %2107 = vmatprep.subr.mxu0 0.0
  %2108 = vmatpush1.msra.mxu0 0.0
  %2109 = vmatprep.subr.mxu0 0.0
  %2110 = vmatpush1.msra.mxu0 0.0
  %2111 = vmatprep.subr.mxu0 0.0
  %2112 = vmatpush1.msra.mxu0 0.0
  %2113 = vmatprep.subr.mxu0 0.0
  %2114 = vmatpush1.msra.mxu0 0.0
  %2115 = vmatprep.subr.mxu0 0.0
  %2116 = vmatpush1.msra.mxu0 0.0
  %2117 = vmatprep.subr.mxu0 0.0
  %2118 = vmatpush1.msra.mxu0 0.0
  %2119 = vmatprep.subr.mxu0 0.0
  %2120 = vmatpush1.msra.mxu0 0.0
  %2121 = vmatprep.subr.mxu0 0.0
  %2122 = vmatpush1.msra.mxu0 0.0
  %2123 = vmatprep.mubr.f32.mxu0 0.0
  %2124 = vmatmul.mubr.f32.gmra.mrb[0].mxu0 %v2057
  %v2125 = vpop.f32.mrb[0].mxu0
  %v2126 = vadd.f32 0.0, %v2125
  %v2127 = vpop.f32.mrb[0].mxu0
  %2128 = vdwg.mxu0
  %v2130 = vsel %vm22, %v2126, 0
  %2132 = vmatprep.subr.mxu0 0.0
  %2133 = vmatpush1.xpose.msra.mxu0 %v2057
  %2134 = vmatprep.subr.mxu0 0.0
  %2135 = vmatpush1.xpose.msra.mxu0 0.0
  %2136 = vmatprep.subr.mxu0 0.0
  %2137 = vmatpush1.xpose.msra.mxu0 0.0
  %2138 = vmatprep.subr.mxu0 0.0
  %2139 = vmatpush1.xpose.msra.mxu0 0.0
  %2140 = vmatprep.subr.mxu0 0.0
  %2141 = vmatpush1.xpose.msra.mxu0 0.0
  %2142 = vmatprep.subr.mxu0 0.0
  %2143 = vmatpush1.xpose.msra.mxu0 0.0
  %2144 = vmatprep.subr.mxu0 0.0
  %2145 = vmatpush1.xpose.msra.mxu0 0.0
  %2146 = vmatprep.subr.mxu0 0.0
  %2147 = vmatpush1.xpose.msra.mxu0 0.0
  %2148 = vmatprep.subr.mxu0 0.0
  %2149 = vmatpush1.xpose.msra.mxu0 0.0
  %2150 = vmatprep.subr.mxu0 0.0
  %2151 = vmatpush1.xpose.msra.mxu0 0.0
  %2152 = vmatprep.subr.mxu0 0.0
  %2153 = vmatpush1.xpose.msra.mxu0 0.0
  %2154 = vmatprep.subr.mxu0 0.0
  %2155 = vmatpush1.xpose.msra.mxu0 0.0
  %2156 = vmatprep.subr.mxu0 0.0
  %2157 = vmatpush1.xpose.msra.mxu0 0.0
  %2158 = vmatprep.subr.mxu0 0.0
  %2159 = vmatpush1.xpose.msra.mxu0 0.0
  %2160 = vmatprep.subr.mxu0 0.0
  %2161 = vmatpush1.xpose.msra.mxu0 0.0
  %2162 = vmatprep.subr.mxu0 0.0
  %2163 = vmatpush1.xpose.msra.mxu0 0.0
  %2164 = vmatprep.subr.mxu0 0.0
  %2165 = vmatpush1.xpose.msra.mxu0 0.0
  %2166 = vmatprep.subr.mxu0 0.0
  %2167 = vmatpush1.xpose.msra.mxu0 0.0
  %2168 = vmatprep.subr.mxu0 0.0
  %2169 = vmatpush1.xpose.msra.mxu0 0.0
  %2170 = vmatprep.subr.mxu0 0.0
  %2171 = vmatpush1.xpose.msra.mxu0 0.0
  %2172 = vmatprep.subr.mxu0 0.0
  %2173 = vmatpush1.xpose.msra.mxu0 0.0
  %2174 = vmatprep.subr.mxu0 0.0
  %2175 = vmatpush1.xpose.msra.mxu0 0.0
  %2176 = vmatprep.subr.mxu0 0.0
  %2177 = vmatpush1.xpose.msra.mxu0 0.0
  %2178 = vmatprep.subr.mxu0 0.0
  %2179 = vmatpush1.xpose.msra.mxu0 0.0
  %2180 = vmatprep.subr.mxu0 0.0
  %2181 = vmatpush1.xpose.msra.mxu0 0.0
  %2182 = vmatprep.subr.mxu0 0.0
  %2183 = vmatpush1.xpose.msra.mxu0 0.0
  %2184 = vmatprep.subr.mxu0 0.0
  %2185 = vmatpush1.xpose.msra.mxu0 0.0
  %2186 = vmatprep.subr.mxu0 0.0
  %2187 = vmatpush1.xpose.msra.mxu0 0.0
  %2188 = vmatprep.subr.mxu0 0.0
  %2189 = vmatpush1.xpose.msra.mxu0 0.0
  %2190 = vmatprep.subr.mxu0 0.0
  %2191 = vmatpush1.xpose.msra.mxu0 0.0
  %2192 = vmatprep.subr.mxu0 0.0
  %2193 = vmatpush1.xpose.msra.mxu0 0.0
  %2194 = vmatprep.subr.mxu0 0.0
  %2195 = vmatpush1.xpose.msra.mxu0 0.0
  %2196 = vmatprep.mubr.f32.mxu0 0.0
  %2197 = vmatmul.mubr.f32.gmra.mrb[0].mxu0 %v2130
  %v2198 = vpop.f32.mrb[0].mxu0
  %v2199 = vadd.f32 0.0, %v2198
  %v2200 = vpop.f32.mrb[0].mxu0
  %2201 = vdwg.mxu0
  %v2202 = vadd.f32 %v2053, %v2199
  %s2203 = scalar_lea.vmem %s0, 112
  %v2204 = vld [vmem:[%s2203] sm:$0xff]
  %v2206 = vsel %vm22, %v2204, 0
  %2208 = vmatprep.subr.mxu0 0.0
  %2209 = vmatpush1.msra.mxu0 %v102
  %2210 = vmatprep.subr.mxu0 0.0
  %2211 = vmatpush1.msra.mxu0 %v107
  %2212 = vmatprep.subr.mxu0 0.0
  %2213 = vmatpush1.msra.mxu0 %v112
  %2214 = vmatprep.subr.mxu0 0.0
  %2215 = vmatpush1.msra.mxu0 %v117
  %2216 = vmatprep.subr.mxu0 0.0
  %2217 = vmatpush1.msra.mxu0 0.0
  %2218 = vmatprep.subr.mxu0 0.0
  %2219 = vmatpush1.msra.mxu0 0.0
  %2220 = vmatprep.subr.mxu0 0.0
  %2221 = vmatpush1.msra.mxu0 0.0
  %2222 = vmatprep.subr.mxu0 0.0
  %2223 = vmatpush1.msra.mxu0 0.0
  %2224 = vmatprep.subr.mxu0 0.0
  %2225 = vmatpush1.msra.mxu0 0.0
  %2226 = vmatprep.subr.mxu0 0.0
  %2227 = vmatpush1.msra.mxu0 0.0
  %2228 = vmatprep.subr.mxu0 0.0
  %2229 = vmatpush1.msra.mxu0 0.0
  %2230 = vmatprep.subr.mxu0 0.0
  %2231 = vmatpush1.msra.mxu0 0.0
  %2232 = vmatprep.subr.mxu0 0.0
  %2233 = vmatpush1.msra.mxu0 0.0
  %2234 = vmatprep.subr.mxu0 0.0
  %2235 = vmatpush1.msra.mxu0 0.0
  %2236 = vmatprep.subr.mxu0 0.0
  %2237 = vmatpush1.msra.mxu0 0.0
  %2238 = vmatprep.subr.mxu0 0.0
  %2239 = vmatpush1.msra.mxu0 0.0
  %2240 = vmatprep.subr.mxu0 0.0
  %2241 = vmatpush1.msra.mxu0 0.0
  %2242 = vmatprep.subr.mxu0 0.0
  %2243 = vmatpush1.msra.mxu0 0.0
  %2244 = vmatprep.subr.mxu0 0.0
  %2245 = vmatpush1.msra.mxu0 0.0
  %2246 = vmatprep.subr.mxu0 0.0
  %2247 = vmatpush1.msra.mxu0 0.0
  %2248 = vmatprep.subr.mxu0 0.0
  %2249 = vmatpush1.msra.mxu0 0.0
  %2250 = vmatprep.subr.mxu0 0.0
  %2251 = vmatpush1.msra.mxu0 0.0
  %2252 = vmatprep.subr.mxu0 0.0
  %2253 = vmatpush1.msra.mxu0 0.0
  %2254 = vmatprep.subr.mxu0 0.0
  %2255 = vmatpush1.msra.mxu0 0.0
  %2256 = vmatprep.subr.mxu0 0.0
  %2257 = vmatpush1.msra.mxu0 0.0
  %2258 = vmatprep.subr.mxu0 0.0
  %2259 = vmatpush1.msra.mxu0 0.0
  %2260 = vmatprep.subr.mxu0 0.0
  %2261 = vmatpush1.msra.mxu0 0.0
  %2262 = vmatprep.subr.mxu0 0.0
  %2263 = vmatpush1.msra.mxu0 0.0
  %2264 = vmatprep.subr.mxu0 0.0
  %2265 = vmatpush1.msra.mxu0 0.0
  %2266 = vmatprep.subr.mxu0 0.0
  %2267 = vmatpush1.msra.mxu0 0.0
  %2268 = vmatprep.subr.mxu0 0.0
  %2269 = vmatpush1.msra.mxu0 0.0
  %2270 = vmatprep.subr.mxu0 0.0
  %2271 = vmatpush1.msra.mxu0 0.0
  %2272 = vmatprep.mubr.f32.mxu0 0.0
  %2273 = vmatmul.mubr.f32.gmra.mrb[0].mxu0 %v2206
  %v2274 = vpop.f32.mrb[0].mxu0
  %v2275 = vadd.f32 0.0, %v2274
  %v2276 = vpop.f32.mrb[0].mxu0
  %2277 = vdwg.mxu0
  %v2279 = vsel %vm22, %v2275, 0
  %2281 = vmatprep.subr.mxu0 0.0
  %2282 = vmatpush1.xpose.msra.mxu0 %v2206
  %2283 = vmatprep.subr.mxu0 0.0
  %2284 = vmatpush1.xpose.msra.mxu0 0.0
  %2285 = vmatprep.subr.mxu0 0.0
  %2286 = vmatpush1.xpose.msra.mxu0 0.0
  %2287 = vmatprep.subr.mxu0 0.0
  %2288 = vmatpush1.xpose.msra.mxu0 0.0
  %2289 = vmatprep.subr.mxu0 0.0
  %2290 = vmatpush1.xpose.msra.mxu0 0.0
  %2291 = vmatprep.subr.mxu0 0.0
  %2292 = vmatpush1.xpose.msra.mxu0 0.0
  %2293 = vmatprep.subr.mxu0 0.0
  %2294 = vmatpush1.xpose.msra.mxu0 0.0
  %2295 = vmatprep.subr.mxu0 0.0
  %2296 = vmatpush1.xpose.msra.mxu0 0.0
  %2297 = vmatprep.subr.mxu0 0.0
  %2298 = vmatpush1.xpose.msra.mxu0 0.0
  %2299 = vmatprep.subr.mxu0 0.0
  %2300 = vmatpush1.xpose.msra.mxu0 0.0
  %2301 = vmatprep.subr.mxu0 0.0
  %2302 = vmatpush1.xpose.msra.mxu0 0.0
  %2303 = vmatprep.subr.mxu0 0.0
  %2304 = vmatpush1.xpose.msra.mxu0 0.0
  %2305 = vmatprep.subr.mxu0 0.0
  %2306 = vmatpush1.xpose.msra.mxu0 0.0
  %2307 = vmatprep.subr.mxu0 0.0
  %2308 = vmatpush1.xpose.msra.mxu0 0.0
  %2309 = vmatprep.subr.mxu0 0.0
  %2310 = vmatpush1.xpose.msra.mxu0 0.0
  %2311 = vmatprep.subr.mxu0 0.0
  %2312 = vmatpush1.xpose.msra.mxu0 0.0
  %2313 = vmatprep.subr.mxu0 0.0
  %2314 = vmatpush1.xpose.msra.mxu0 0.0
  %2315 = vmatprep.subr.mxu0 0.0
  %2316 = vmatpush1.xpose.msra.mxu0 0.0
  %2317 = vmatprep.subr.mxu0 0.0
  %2318 = vmatpush1.xpose.msra.mxu0 0.0
  %2319 = vmatprep.subr.mxu0 0.0
  %2320 = vmatpush1.xpose.msra.mxu0 0.0
  %2321 = vmatprep.subr.mxu0 0.0
  %2322 = vmatpush1.xpose.msra.mxu0 0.0
  %2323 = vmatprep.subr.mxu0 0.0
  %2324 = vmatpush1.xpose.msra.mxu0 0.0
  %2325 = vmatprep.subr.mxu0 0.0
  %2326 = vmatpush1.xpose.msra.mxu0 0.0
  %2327 = vmatprep.subr.mxu0 0.0
  %2328 = vmatpush1.xpose.msra.mxu0 0.0
  %2329 = vmatprep.subr.mxu0 0.0
  %2330 = vmatpush1.xpose.msra.mxu0 0.0
  %2331 = vmatprep.subr.mxu0 0.0
  %2332 = vmatpush1.xpose.msra.mxu0 0.0
  %2333 = vmatprep.subr.mxu0 0.0
  %2334 = vmatpush1.xpose.msra.mxu0 0.0
  %2335 = vmatprep.subr.mxu0 0.0
  %2336 = vmatpush1.xpose.msra.mxu0 0.0
  %2337 = vmatprep.subr.mxu0 0.0
  %2338 = vmatpush1.xpose.msra.mxu0 0.0
  %2339 = vmatprep.subr.mxu0 0.0
  %2340 = vmatpush1.xpose.msra.mxu0 0.0
  %2341 = vmatprep.subr.mxu0 0.0
  %2342 = vmatpush1.xpose.msra.mxu0 0.0
  %2343 = vmatprep.subr.mxu0 0.0
  %2344 = vmatpush1.xpose.msra.mxu0 0.0
  %2345 = vmatprep.mubr.f32.mxu0 0.0
  %2346 = vmatmul.mubr.f32.gmra.mrb[0].mxu0 %v2279
  %v2347 = vpop.f32.mrb[0].mxu0
  %v2348 = vadd.f32 0.0, %v2347
  %v2349 = vpop.f32.mrb[0].mxu0
  %2350 = vdwg.mxu0
  %v2351 = vadd.f32 %v2202, %v2348
  %s2352 = scalar_lea.vmem %s0, 120
  %v2353 = vld [vmem:[%s2352] sm:$0xff]
  %v2355 = vsel %vm22, %v2353, 0
  %2357 = vmatprep.subr.mxu0 0.0
  %2358 = vmatpush1.msra.mxu0 %v102
  %2359 = vmatprep.subr.mxu0 0.0
  %2360 = vmatpush1.msra.mxu0 %v107
  %2361 = vmatprep.subr.mxu0 0.0
  %2362 = vmatpush1.msra.mxu0 %v112
  %2363 = vmatprep.subr.mxu0 0.0
  %2364 = vmatpush1.msra.mxu0 %v117
  %2365 = vmatprep.subr.mxu0 0.0
  %2366 = vmatpush1.msra.mxu0 0.0
  %2367 = vmatprep.subr.mxu0 0.0
  %2368 = vmatpush1.msra.mxu0 0.0
  %2369 = vmatprep.subr.mxu0 0.0
  %2370 = vmatpush1.msra.mxu0 0.0
  %2371 = vmatprep.subr.mxu0 0.0
  %2372 = vmatpush1.msra.mxu0 0.0
  %2373 = vmatprep.subr.mxu0 0.0
  %2374 = vmatpush1.msra.mxu0 0.0
  %2375 = vmatprep.subr.mxu0 0.0
  %2376 = vmatpush1.msra.mxu0 0.0
  %2377 = vmatprep.subr.mxu0 0.0
  %2378 = vmatpush1.msra.mxu0 0.0
  %2379 = vmatprep.subr.mxu0 0.0
  %2380 = vmatpush1.msra.mxu0 0.0
  %2381 = vmatprep.subr.mxu0 0.0
  %2382 = vmatpush1.msra.mxu0 0.0
  %2383 = vmatprep.subr.mxu0 0.0
  %2384 = vmatpush1.msra.mxu0 0.0
  %2385 = vmatprep.subr.mxu0 0.0
  %2386 = vmatpush1.msra.mxu0 0.0
  %2387 = vmatprep.subr.mxu0 0.0
  %2388 = vmatpush1.msra.mxu0 0.0
  %2389 = vmatprep.subr.mxu0 0.0
  %2390 = vmatpush1.msra.mxu0 0.0
  %2391 = vmatprep.subr.mxu0 0.0
  %2392 = vmatpush1.msra.mxu0 0.0
  %2393 = vmatprep.subr.mxu0 0.0
  %2394 = vmatpush1.msra.mxu0 0.0
  %2395 = vmatprep.subr.mxu0 0.0
  %2396 = vmatpush1.msra.mxu0 0.0
  %2397 = vmatprep.subr.mxu0 0.0
  %2398 = vmatpush1.msra.mxu0 0.0
  %2399 = vmatprep.subr.mxu0 0.0
  %2400 = vmatpush1.msra.mxu0 0.0
  %2401 = vmatprep.subr.mxu0 0.0
  %2402 = vmatpush1.msra.mxu0 0.0
  %2403 = vmatprep.subr.mxu0 0.0
  %2404 = vmatpush1.msra.mxu0 0.0
  %2405 = vmatprep.subr.mxu0 0.0
  %2406 = vmatpush1.msra.mxu0 0.0
  %2407 = vmatprep.subr.mxu0 0.0
  %2408 = vmatpush1.msra.mxu0 0.0
  %2409 = vmatprep.subr.mxu0 0.0
  %2410 = vmatpush1.msra.mxu0 0.0
  %2411 = vmatprep.subr.mxu0 0.0
  %2412 = vmatpush1.msra.mxu0 0.0
  %2413 = vmatprep.subr.mxu0 0.0
  %2414 = vmatpush1.msra.mxu0 0.0
  %2415 = vmatprep.subr.mxu0 0.0
  %2416 = vmatpush1.msra.mxu0 0.0
  %2417 = vmatprep.subr.mxu0 0.0
  %2418 = vmatpush1.msra.mxu0 0.0
  %2419 = vmatprep.subr.mxu0 0.0
  %2420 = vmatpush1.msra.mxu0 0.0
  %2421 = vmatprep.mubr.f32.mxu0 0.0
  %2422 = vmatmul.mubr.f32.gmra.mrb[0].mxu0 %v2355
  %v2423 = vpop.f32.mrb[0].mxu0
  %v2424 = vadd.f32 0.0, %v2423
  %v2425 = vpop.f32.mrb[0].mxu0
  %2426 = vdwg.mxu0
  %v2428 = vsel %vm22, %v2424, 0
  %2430 = vmatprep.subr.mxu0 0.0
  %2431 = vmatpush1.xpose.msra.mxu0 %v2355
  %2432 = vmatprep.subr.mxu0 0.0
  %2433 = vmatpush1.xpose.msra.mxu0 0.0
  %2434 = vmatprep.subr.mxu0 0.0
  %2435 = vmatpush1.xpose.msra.mxu0 0.0
  %2436 = vmatprep.subr.mxu0 0.0
  %2437 = vmatpush1.xpose.msra.mxu0 0.0
  %2438 = vmatprep.subr.mxu0 0.0
  %2439 = vmatpush1.xpose.msra.mxu0 0.0
  %2440 = vmatprep.subr.mxu0 0.0
  %2441 = vmatpush1.xpose.msra.mxu0 0.0
  %2442 = vmatprep.subr.mxu0 0.0
  %2443 = vmatpush1.xpose.msra.mxu0 0.0
  %2444 = vmatprep.subr.mxu0 0.0
  %2445 = vmatpush1.xpose.msra.mxu0 0.0
  %2446 = vmatprep.subr.mxu0 0.0
  %2447 = vmatpush1.xpose.msra.mxu0 0.0
  %2448 = vmatprep.subr.mxu0 0.0
  %2449 = vmatpush1.xpose.msra.mxu0 0.0
  %2450 = vmatprep.subr.mxu0 0.0
  %2451 = vmatpush1.xpose.msra.mxu0 0.0
  %2452 = vmatprep.subr.mxu0 0.0
  %2453 = vmatpush1.xpose.msra.mxu0 0.0
  %2454 = vmatprep.subr.mxu0 0.0
  %2455 = vmatpush1.xpose.msra.mxu0 0.0
  %2456 = vmatprep.subr.mxu0 0.0
  %2457 = vmatpush1.xpose.msra.mxu0 0.0
  %2458 = vmatprep.subr.mxu0 0.0
  %2459 = vmatpush1.xpose.msra.mxu0 0.0
  %2460 = vmatprep.subr.mxu0 0.0
  %2461 = vmatpush1.xpose.msra.mxu0 0.0
  %2462 = vmatprep.subr.mxu0 0.0
  %2463 = vmatpush1.xpose.msra.mxu0 0.0
  %2464 = vmatprep.subr.mxu0 0.0
  %2465 = vmatpush1.xpose.msra.mxu0 0.0
  %2466 = vmatprep.subr.mxu0 0.0
  %2467 = vmatpush1.xpose.msra.mxu0 0.0
  %2468 = vmatprep.subr.mxu0 0.0
  %2469 = vmatpush1.xpose.msra.mxu0 0.0
  %2470 = vmatprep.subr.mxu0 0.0
  %2471 = vmatpush1.xpose.msra.mxu0 0.0
  %2472 = vmatprep.subr.mxu0 0.0
  %2473 = vmatpush1.xpose.msra.mxu0 0.0
  %2474 = vmatprep.subr.mxu0 0.0
  %2475 = vmatpush1.xpose.msra.mxu0 0.0
  %2476 = vmatprep.subr.mxu0 0.0
  %2477 = vmatpush1.xpose.msra.mxu0 0.0
  %2478 = vmatprep.subr.mxu0 0.0
  %2479 = vmatpush1.xpose.msra.mxu0 0.0
  %2480 = vmatprep.subr.mxu0 0.0
  %2481 = vmatpush1.xpose.msra.mxu0 0.0
  %2482 = vmatprep.subr.mxu0 0.0
  %2483 = vmatpush1.xpose.msra.mxu0 0.0
  %2484 = vmatprep.subr.mxu0 0.0
  %2485 = vmatpush1.xpose.msra.mxu0 0.0
  %2486 = vmatprep.subr.mxu0 0.0
  %2487 = vmatpush1.xpose.msra.mxu0 0.0
  %2488 = vmatprep.subr.mxu0 0.0
  %2489 = vmatpush1.xpose.msra.mxu0 0.0
  %2490 = vmatprep.subr.mxu0 0.0
  %2491 = vmatpush1.xpose.msra.mxu0 0.0
  %2492 = vmatprep.subr.mxu0 0.0
  %2493 = vmatpush1.xpose.msra.mxu0 0.0
  %2494 = vmatprep.mubr.f32.mxu0 0.0
  %2495 = vmatmul.mubr.f32.gmra.mrb[0].mxu0 %v2428
  %v2496 = vpop.f32.mrb[0].mxu0
  %v2497 = vadd.f32 0.0, %v2496
  %v2498 = vpop.f32.mrb[0].mxu0
  %2499 = vdwg.mxu0
  %v2500 = vadd.f32 %v2351, %v2497
  %v2501 = vmul.f32 %v2500, 0.044194173
  %vm2502 = vcmask 64512
  %v2503 = vsel %vm2502, %v2501, -inf
  %2504 = vmax.xlane.f32.xlu0 %v2503
  %v2505 = vpop.xlane.xlu0 %2504
  %v2506 = vsub.f32 %v2501, %v2505
  %v2507 = vmul.f32 %v2506, 1.442695
  %v2508 = vpow.pop %v2507
  %v2509 = vsel %vm2502, %v2508, 0.0
  %2510 = vadd.xlane.f32.xlu0 %v2509
  %v2511 = vpop.xlane.xlu0 %2510
  %v2512 = vrcp.pop %v2511
  %v2513 = vmul.f32 %v2508, %v2512
  %2514 = vst.msk [vmem:[%s3] sm:$0xff] %vm2502, %v2513
  // Predicated region
  $region14: #{cross_slice_attention.2} parent=0 // pred_check
    _
  $region15: #{cross_slice_attention.2} parent=0 // pred_check_branch
    %2516 = sbr.rel (0) target = $region17
  $region16: #{cross_slice_attention.2} parent=0 // pred_region
    _
  $region17: #{cross_slice_attention.2} parent=0 // pred_fallthru
    _
  // Predicated region
  $region18: #{cross_slice_attention.2} parent=0 // pred_check
    _
  $region19: #{cross_slice_attention.2} parent=0 // pred_check_branch
    %2518 = sbr.rel (0) target = $region21
  $region20: #{cross_slice_attention.2} parent=0 // pred_region
    _
  $region21: #{cross_slice_attention.2} parent=0 // pred_fallthru
    _

// kernel: cross_slice_attention.3
$region0: #{cross_slice_attention.3}
  #allocation0 [shape = 'u32[]', space=smem, size = 0x4, offset = 0x4, fixed_abs, tag = 'smem constant byte address 0x4 - core index']
  #allocation1 [shape = 'u32[144,128]{1,0:T(1,128)}', space=vmem, size = 0x12000, scoped, tag = 'internal scratch']
  %s0 = inlined_call_operand.vmem [shape: f32[8,8], index: 0, kind: input, shape index: {}]
  %s1 = inlined_call_operand.vmem [shape: f32[32,32], index: 1, kind: input, shape index: {}]
  %s2 = inlined_call_operand.vmem [shape: f32[8,32,256], index: 2, kind: input, shape index: {}]
  %s3 = inlined_call_operand.vmem [shape: f32[8,32,256], index: 3, kind: output, shape index: {}]
  %s4 = sld [smem:[#allocation0]]
  $region121: #{cross_slice_attention.3} parent=0
    _
  %s6 = ssub.s32 1, %s4
  %s7 = scalar_select 0, %s6, %s4
  $region1: #{cross_slice_attention.3} parent=0
    #allocation2 [shape = 'u8[4096]{0}', space=smem, size = 0x1000, scoped, tag = 'input window, operand 0, single buffered']
    #allocation3 [shape = 's32[2]{0}', space=sflag, size = 0x8, scoped, tag = 'scoped memory for cross_slice_attention.3']
    #allocation4 [shape = 'u8[262144]{0}', space=vmem, size = 0x40000, scoped, tag = 'input window, operand 2']
    #allocation5 [shape = 'u8[262144]{0}', space=vmem, size = 0x40000, scoped, tag = 'output window, operand 0']
    %8 = vsyncpa [#allocation3], 0
    loop: start=0, step=1, limit=4
    $region2: #{cross_slice_attention.3} parent=1 // loop_pre_header
      _
    $region3: #{cross_slice_attention.3} parent=1 // loop_header
      %s10 = sphi 0, %s14
      %p11 = scmp.ge.s32.totalorder %s10, 4
      %s18 = sphi 0, %s18
      %s20 = sphi 0, %s18
      %s21 = sphi 0, %s20
      %s35 = sphi 0, %s21
      %s39 = sphi 0, %s39
      %s41 = sphi 0, %s39
      %s42 = sphi 0, %s41
      %s56 = sphi 0, %s42
      %s62 = sphi 0, %s64
      %s65 = sphi 0, %s62
      %s66 = sphi 0, %s65
      %s82 = sphi 0, %s66
      %s88 = sphi 0, %s90
      %s91 = sphi 0, %s88
      %s92 = sphi 0, %s91
      %s108 = sphi 0, %s92
    $region4: #{cross_slice_attention.3} parent=1 // loop_header_branch
      %13 = sbr.rel (%p11) target = $region8
    $region5: #{cross_slice_attention.3} parent=1 // loop_body
      %s15 = ssub.s32 %s10, 1
      %s16 = ssub.s32 %s10, 2
      %s17 = sadd.s32 %s10, 1
      %s19 = sadd.s32 %s18, 1
      %p22 = scmp.eq.s32.totalorder %s10, 1
      %p23 = scmp.ne.s32.totalorder %s18, %s20
      %p24 = scmp.eq.s32.totalorder %s10, 0
      %p25 = por %p23, %p24
      %p26 = scmp.ne.s32.totalorder %s18, %s20
      %p27 = scmp.eq.s32.totalorder %s15, 1
      %p28 = por %p26, %p27
      %p29 = scmp.ne.s32.totalorder %s20, %s21
      %p30 = scmp.eq.s32.totalorder %s15, 0
      %p31 = por %p29, %p30
      %p32 = scmp.ne.s32.totalorder %s20, %s21
      %p33 = scmp.eq.s32.totalorder %s16, 1
      %p34 = por %p32, %p33
      %p36 = scmp.ne.s32.totalorder %s21, %s35
      %p37 = scmp.eq.s32.totalorder %s16, 0
      %p38 = por %p36, %p37
      %s40 = sadd.s32 %s39, 1
      %p43 = scmp.eq.s32.totalorder %s10, 1
      %p44 = scmp.ne.s32.totalorder %s39, %s41
      %p45 = scmp.eq.s32.totalorder %s10, 0
      %p46 = por %p44, %p45
      %p47 = scmp.ne.s32.totalorder %s39, %s41
      %p48 = scmp.eq.s32.totalorder %s15, 1
      %p49 = por %p47, %p48
      %p50 = scmp.ne.s32.totalorder %s41, %s42
      %p51 = scmp.eq.s32.totalorder %s15, 0
      %p52 = por %p50, %p51
      %p53 = scmp.ne.s32.totalorder %s41, %s42
      %p54 = scmp.eq.s32.totalorder %s16, 1
      %p55 = por %p53, %p54
      %p57 = scmp.ne.s32.totalorder %s42, %s56
      %p58 = scmp.eq.s32.totalorder %s16, 0
      %p59 = por %p57, %p58
      %s60 = ssub.s32 %s10, %s17
      %p61 = scmp.eq.s32.totalorder %s60, 0
      %s63 = sadd.s32 %s62, 1
      %s64 = scalar_select %p61, %s62, %s63
      %p67 = pneg %p61
      %p68 = scmp.eq.s32.totalorder %s10, 1
      %p69 = por %p67, %p68
      %p70 = scmp.ne.s32.totalorder %s62, %s65
      %p71 = scmp.eq.s32.totalorder %s10, 0
      %p72 = por %p70, %p71
      %p73 = scmp.ne.s32.totalorder %s62, %s65
      %p74 = scmp.eq.s32.totalorder %s15, 1
      %p75 = por %p73, %p74
      %p76 = scmp.ne.s32.totalorder %s65, %s66
      %p77 = scmp.eq.s32.totalorder %s15, 0
      %p78 = por %p76, %p77
      %p79 = scmp.ne.s32.totalorder %s65, %s66
      %p80 = scmp.eq.s32.totalorder %s16, 1
      %p81 = por %p79, %p80
      %p83 = scmp.ne.s32.totalorder %s66, %s82
      %p84 = scmp.eq.s32.totalorder %s16, 0
      %p85 = por %p83, %p84
      %s86 = ssub.s32 %s10, %s17
      %p87 = scmp.eq.s32.totalorder %s86, 0
      %s89 = sadd.s32 %s88, 1
      %s90 = scalar_select %p87, %s88, %s89
      %p93 = pneg %p87
      %p94 = scmp.eq.s32.totalorder %s10, 1
      %p95 = por %p93, %p94
      %p96 = scmp.ne.s32.totalorder %s88, %s91
      %p97 = scmp.eq.s32.totalorder %s10, 0
      %p98 = por %p96, %p97
      %p99 = scmp.ne.s32.totalorder %s88, %s91
      %p100 = scmp.eq.s32.totalorder %s15, 1
      %p101 = por %p99, %p100
      %p102 = scmp.ne.s32.totalorder %s91, %s92
      %p103 = scmp.eq.s32.totalorder %s15, 0
      %p104 = por %p102, %p103
      %p105 = scmp.ne.s32.totalorder %s91, %s92
      %p106 = scmp.eq.s32.totalorder %s16, 1
      %p107 = por %p105, %p106
      %p109 = scmp.ne.s32.totalorder %s92, %s108
      %p110 = scmp.eq.s32.totalorder %s16, 0
      %p111 = por %p109, %p110
      %p112 = scmp.le.s32.totalorder 1, %s10
      %p113 = scmp.lt.s32.totalorder %s10, 3
      %p114 = pnand %p112, %p113
      %p115 = pneg %p114
      // Predicated region
      $region9: #{cross_slice_attention.3} parent=5 // pred_check
        _
      $region10: #{cross_slice_attention.3} parent=5 // pred_check_branch
        %117 = sbr.rel (%p114) target = $region12
      $region11: #{cross_slice_attention.3} parent=5 // pred_region
        %s118 = ssub.s32 %s10, 1
        // Predicated region
        $region13: #{cross_slice_attention.3} parent=11 // pred_check
          %p119 = pneg %p31
        $region14: #{cross_slice_attention.3} parent=11 // pred_check_branch
          %121 = sbr.rel (%p119) target = $region16
        $region15: #{cross_slice_attention.3} parent=11 // pred_region
          %s123 = ssub.s32 128, 128
          %124 = vsyncadd [#allocation3], %s123
          %s126 = sshll.u32 %s0, 4
          %s127 = int_to_ptr.vmem [resolvable:$true] %s126
          %129 = dma.vmem_to_smem %s127, 128, [#allocation2], [#allocation3]
        $region16: #{cross_slice_attention.3} parent=11 // pred_fallthru
          _
        // Predicated region
        $region17: #{cross_slice_attention.3} parent=11 // pred_check
          %p130 = pneg %p52
        $region18: #{cross_slice_attention.3} parent=11 // pred_check_branch
          %132 = sbr.rel (%p130) target = $region20
        $region19: #{cross_slice_attention.3} parent=11 // pred_region
          _
        $region20: #{cross_slice_attention.3} parent=11 // pred_fallthru
          _
      $region12: #{cross_slice_attention.3} parent=5 // pred_fallthru
        _
      %p133 = scmp.lt.s32.totalorder %s10, 2
      // Predicated region
      $region21: #{cross_slice_attention.3} parent=5 // pred_check
        %p134 = pneg %p133
      $region22: #{cross_slice_attention.3} parent=5 // pred_check_branch
        %136 = sbr.rel (%p134) target = $region24
      $region23: #{cross_slice_attention.3} parent=5 // pred_region
        // Predicated region
        $region25: #{cross_slice_attention.3} parent=23 // pred_check
          %p137 = pneg %p72
        $region26: #{cross_slice_attention.3} parent=23 // pred_check_branch
          %139 = sbr.rel (%p137) target = $region28
        $region27: #{cross_slice_attention.3} parent=23 // pred_region
          %s140 = sand.u32 %s62, 1
          %s141 = sand.u32 %s62, 1
          %s142 = smul.addr %s141, 256
          %s143 = scalar_lea.vmem [#allocation4], %s142
          %s144 = smul.addr %s10, 8
          %s145 = scalar_lea.vmem %s2, %s144
          // Predicated region
          $region29: #{cross_slice_attention.3} parent=27 // pred_check
            _
          $region30: #{cross_slice_attention.3} parent=27 // pred_check_branch
            %147 = sbr.rel (0) target = $region32
          $region31: #{cross_slice_attention.3} parent=27 // pred_region
            // Predicated region
            $region33: #{cross_slice_attention.3} parent=31 // pred_check
              _
            $region34: #{cross_slice_attention.3} parent=31 // pred_check_branch
              %149 = sbr.rel (0) target = $region36
            $region35: #{cross_slice_attention.3} parent=31 // pred_region
              // Predicated region
              $region48: #{cross_slice_attention.3} parent=35 // pred_check
                _
              $region49: #{cross_slice_attention.3} parent=35 // pred_check_branch
                %226 = sbr.rel (0) target = $region51
              $region50: #{cross_slice_attention.3} parent=35 // pred_region
                loop: start=0, step=1, limit=1
                $region52: #{cross_slice_attention.3} parent=50 // loop_pre_header
                  _
                $region53: #{cross_slice_attention.3} parent=50 // loop_header
                  %s228 = sphi 0, %s232
                  %p229 = scmp.ge.s32.totalorder %s228, 1
                  %s233 = sphi %s145, %s145
                  %s234 = sphi %s143, %s143
                $region54: #{cross_slice_attention.3} parent=50 // loop_header_branch
                  %231 = sbr.rel (%p229) target = $region58
                $region55: #{cross_slice_attention.3} parent=50 // loop_body
                  %v235 = vld [vmem:[%s233] sm:$0xff]
                  %236 = vst [vmem:[%s234] sm:$0xff] %v235
                  %v237 = vld [vmem:[%s233 + $0x10] sm:$0xff]
                  %238 = vst [vmem:[%s234 + $0x8] sm:$0xff] %v237
                  %v239 = vld [vmem:[%s233 + $0x20] sm:$0xff]
                  %240 = vst [vmem:[%s234 + $0x10] sm:$0xff] %v239
                  %v241 = vld [vmem:[%s233 + $0x30] sm:$0xff]
                  %242 = vst [vmem:[%s234 + $0x18] sm:$0xff] %v241
                  %v243 = vld [vmem:[%s233 + $0x40] sm:$0xff]
                  %244 = vst [vmem:[%s234 + $0x20] sm:$0xff] %v243
                  %v245 = vld [vmem:[%s233 + $0x50] sm:$0xff]
                  %246 = vst [vmem:[%s234 + $0x28] sm:$0xff] %v245
                  %v247 = vld [vmem:[%s233 + $0x60] sm:$0xff]
                  %248 = vst [vmem:[%s234 + $0x30] sm:$0xff] %v247
                  %v249 = vld [vmem:[%s233 + $0x70] sm:$0xff]
                  %250 = vst [vmem:[%s234 + $0x38] sm:$0xff] %v249
                  %v251 = vld [vmem:[%s233 + $0x80] sm:$0xff]
                  %252 = vst [vmem:[%s234 + $0x40] sm:$0xff] %v251
                  %v253 = vld [vmem:[%s233 + $0x90] sm:$0xff]
                  %254 = vst [vmem:[%s234 + $0x48] sm:$0xff] %v253
                  %v255 = vld [vmem:[%s233 + $0xa0] sm:$0xff]
                  %256 = vst [vmem:[%s234 + $0x50] sm:$0xff] %v255
                  %v257 = vld [vmem:[%s233 + $0xb0] sm:$0xff]
                  %258 = vst [vmem:[%s234 + $0x58] sm:$0xff] %v257
                  %v259 = vld [vmem:[%s233 + $0xc0] sm:$0xff]
                  %260 = vst [vmem:[%s234 + $0x60] sm:$0xff] %v259
                  %v261 = vld [vmem:[%s233 + $0xd0] sm:$0xff]
                  %262 = vst [vmem:[%s234 + $0x68] sm:$0xff] %v261
                  %v263 = vld [vmem:[%s233 + $0xe0] sm:$0xff]
                  %264 = vst [vmem:[%s234 + $0x70] sm:$0xff] %v263
                  %v265 = vld [vmem:[%s233 + $0xf0] sm:$0xff]
                  %266 = vst [vmem:[%s234 + $0x78] sm:$0xff] %v265
                  %v267 = vld [vmem:[%s233 + $0x100] sm:$0xff]
                  %268 = vst [vmem:[%s234 + $0x80] sm:$0xff] %v267
                  %v269 = vld [vmem:[%s233 + $0x110] sm:$0xff]
                  %270 = vst [vmem:[%s234 + $0x88] sm:$0xff] %v269
                  %v271 = vld [vmem:[%s233 + $0x120] sm:$0xff]
                  %272 = vst [vmem:[%s234 + $0x90] sm:$0xff] %v271
                  %v273 = vld [vmem:[%s233 + $0x130] sm:$0xff]
                  %274 = vst [vmem:[%s234 + $0x98] sm:$0xff] %v273
                  %v275 = vld [vmem:[%s233 + $0x140] sm:$0xff]
                  %276 = vst [vmem:[%s234 + $0xa0] sm:$0xff] %v275
                  %v277 = vld [vmem:[%s233 + $0x150] sm:$0xff]
                  %278 = vst [vmem:[%s234 + $0xa8] sm:$0xff] %v277
                  %v279 = vld [vmem:[%s233 + $0x160] sm:$0xff]
                  %280 = vst [vmem:[%s234 + $0xb0] sm:$0xff] %v279
                  %v281 = vld [vmem:[%s233 + $0x170] sm:$0xff]
                  %282 = vst [vmem:[%s234 + $0xb8] sm:$0xff] %v281
                  %v283 = vld [vmem:[%s233 + $0x180] sm:$0xff]
                  %284 = vst [vmem:[%s234 + $0xc0] sm:$0xff] %v283
                  %v285 = vld [vmem:[%s233 + $0x190] sm:$0xff]
                  %286 = vst [vmem:[%s234 + $0xc8] sm:$0xff] %v285
                  %v287 = vld [vmem:[%s233 + $0x1a0] sm:$0xff]
                  %288 = vst [vmem:[%s234 + $0xd0] sm:$0xff] %v287
                  %v289 = vld [vmem:[%s233 + $0x1b0] sm:$0xff]
                  %290 = vst [vmem:[%s234 + $0xd8] sm:$0xff] %v289
                  %v291 = vld [vmem:[%s233 + $0x1c0] sm:$0xff]
                  %292 = vst [vmem:[%s234 + $0xe0] sm:$0xff] %v291
                  %v293 = vld [vmem:[%s233 + $0x1d0] sm:$0xff]
                  %294 = vst [vmem:[%s234 + $0xe8] sm:$0xff] %v293
                  %v295 = vld [vmem:[%s233 + $0x1e0] sm:$0xff]
                  %296 = vst [vmem:[%s234 + $0xf0] sm:$0xff] %v295
                  %v297 = vld [vmem:[%s233 + $0x1f0] sm:$0xff]
                  %298 = vst [vmem:[%s234 + $0xf8] sm:$0xff] %v297
                $region56: #{cross_slice_attention.3} parent=50 // loop_footer
                  %s232 = sadd.s32 1, %s228
                $region57: #{cross_slice_attention.3} parent=50 // loop_footer_branch
                  %227 = sbr.rel target = $region53
                $region58: #{cross_slice_attention.3} parent=50 // loop_exit
                  _
              $region51: #{cross_slice_attention.3} parent=35 // pred_fallthru
                _
              // Predicated region
              $region59: #{cross_slice_attention.3} parent=35 // pred_check
                _
              $region60: #{cross_slice_attention.3} parent=35 // pred_check_branch
                %300 = sbr.rel target = $region62
              $region61: #{cross_slice_attention.3} parent=35 // pred_region
                _
              $region62: #{cross_slice_attention.3} parent=35 // pred_fallthru
                _
            $region36: #{cross_slice_attention.3} parent=31 // pred_fallthru
              _
            // Predicated region
            $region37: #{cross_slice_attention.3} parent=31 // pred_check
              _
            $region38: #{cross_slice_attention.3} parent=31 // pred_check_branch
              %151 = sbr.rel target = $region40
            $region39: #{cross_slice_attention.3} parent=31 // pred_region
              loop: start=0, step=1, limit=1
              $region41: #{cross_slice_attention.3} parent=39 // loop_pre_header
                _
              $region42: #{cross_slice_attention.3} parent=39 // loop_header
                %s154 = sphi 0, %s158
                %p155 = scmp.ge.s32.totalorder %s154, 1
                %s159 = sphi %s145, %s145
                %s160 = sphi %s143, %s143
              $region43: #{cross_slice_attention.3} parent=39 // loop_header_branch
                %157 = sbr.rel (%p155) target = $region47
              $region44: #{cross_slice_attention.3} parent=39 // loop_body
                %v161 = vld [vmem:[%s159] sm:$0xff]
                %162 = vst [vmem:[%s160] sm:$0xff] %v161
                %v163 = vld [vmem:[%s159 + $0x10] sm:$0xff]
                %164 = vst [vmem:[%s160 + $0x8] sm:$0xff] %v163
                %v165 = vld [vmem:[%s159 + $0x20] sm:$0xff]
                %166 = vst [vmem:[%s160 + $0x10] sm:$0xff] %v165
                %v167 = vld [vmem:[%s159 + $0x30] sm:$0xff]
                %168 = vst [vmem:[%s160 + $0x18] sm:$0xff] %v167
                %v169 = vld [vmem:[%s159 + $0x40] sm:$0xff]
                %170 = vst [vmem:[%s160 + $0x20] sm:$0xff] %v169
                %v171 = vld [vmem:[%s159 + $0x50] sm:$0xff]
                %172 = vst [vmem:[%s160 + $0x28] sm:$0xff] %v171
                %v173 = vld [vmem:[%s159 + $0x60] sm:$0xff]
                %174 = vst [vmem:[%s160 + $0x30] sm:$0xff] %v173
                %v175 = vld [vmem:[%s159 + $0x70] sm:$0xff]
                %176 = vst [vmem:[%s160 + $0x38] sm:$0xff] %v175
                %v177 = vld [vmem:[%s159 + $0x80] sm:$0xff]
                %178 = vst [vmem:[%s160 + $0x40] sm:$0xff] %v177
                %v179 = vld [vmem:[%s159 + $0x90] sm:$0xff]
                %180 = vst [vmem:[%s160 + $0x48] sm:$0xff] %v179
                %v181 = vld [vmem:[%s159 + $0xa0] sm:$0xff]
                %182 = vst [vmem:[%s160 + $0x50] sm:$0xff] %v181
                %v183 = vld [vmem:[%s159 + $0xb0] sm:$0xff]
                %184 = vst [vmem:[%s160 + $0x58] sm:$0xff] %v183
                %v185 = vld [vmem:[%s159 + $0xc0] sm:$0xff]
                %186 = vst [vmem:[%s160 + $0x60] sm:$0xff] %v185
                %v187 = vld [vmem:[%s159 + $0xd0] sm:$0xff]
                %188 = vst [vmem:[%s160 + $0x68] sm:$0xff] %v187
                %v189 = vld [vmem:[%s159 + $0xe0] sm:$0xff]
                %190 = vst [vmem:[%s160 + $0x70] sm:$0xff] %v189
                %v191 = vld [vmem:[%s159 + $0xf0] sm:$0xff]
                %192 = vst [vmem:[%s160 + $0x78] sm:$0xff] %v191
                %v193 = vld [vmem:[%s159 + $0x100] sm:$0xff]
                %194 = vst [vmem:[%s160 + $0x80] sm:$0xff] %v193
                %v195 = vld [vmem:[%s159 + $0x110] sm:$0xff]
                %196 = vst [vmem:[%s160 + $0x88] sm:$0xff] %v195
                %v197 = vld [vmem:[%s159 + $0x120] sm:$0xff]
                %198 = vst [vmem:[%s160 + $0x90] sm:$0xff] %v197
                %v199 = vld [vmem:[%s159 + $0x130] sm:$0xff]
                %200 = vst [vmem:[%s160 + $0x98] sm:$0xff] %v199
                %v201 = vld [vmem:[%s159 + $0x140] sm:$0xff]
                %202 = vst [vmem:[%s160 + $0xa0] sm:$0xff] %v201
                %v203 = vld [vmem:[%s159 + $0x150] sm:$0xff]
                %204 = vst [vmem:[%s160 + $0xa8] sm:$0xff] %v203
                %v205 = vld [vmem:[%s159 + $0x160] sm:$0xff]
                %206 = vst [vmem:[%s160 + $0xb0] sm:$0xff] %v205
                %v207 = vld [vmem:[%s159 + $0x170] sm:$0xff]
                %208 = vst [vmem:[%s160 + $0xb8] sm:$0xff] %v207
                %v209 = vld [vmem:[%s159 + $0x180] sm:$0xff]
                %210 = vst [vmem:[%s160 + $0xc0] sm:$0xff] %v209
                %v211 = vld [vmem:[%s159 + $0x190] sm:$0xff]
                %212 = vst [vmem:[%s160 + $0xc8] sm:$0xff] %v211
                %v213 = vld [vmem:[%s159 + $0x1a0] sm:$0xff]
                %214 = vst [vmem:[%s160 + $0xd0] sm:$0xff] %v213
                %v215 = vld [vmem:[%s159 + $0x1b0] sm:$0xff]
                %216 = vst [vmem:[%s160 + $0xd8] sm:$0xff] %v215
                %v217 = vld [vmem:[%s159 + $0x1c0] sm:$0xff]
                %218 = vst [vmem:[%s160 + $0xe0] sm:$0xff] %v217
                %v219 = vld [vmem:[%s159 + $0x1d0] sm:$0xff]
                %220 = vst [vmem:[%s160 + $0xe8] sm:$0xff] %v219
                %v221 = vld [vmem:[%s159 + $0x1e0] sm:$0xff]
                %222 = vst [vmem:[%s160 + $0xf0] sm:$0xff] %v221
                %v223 = vld [vmem:[%s159 + $0x1f0] sm:$0xff]
                %224 = vst [vmem:[%s160 + $0xf8] sm:$0xff] %v223
              $region45: #{cross_slice_attention.3} parent=39 // loop_footer
                %s158 = sadd.s32 1, %s154
              $region46: #{cross_slice_attention.3} parent=39 // loop_footer_branch
                %153 = sbr.rel target = $region42
              $region47: #{cross_slice_attention.3} parent=39 // loop_exit
                _
            $region40: #{cross_slice_attention.3} parent=31 // pred_fallthru
              _
          $region32: #{cross_slice_attention.3} parent=27 // pred_fallthru
            _
          %301 = vnop
        $region28: #{cross_slice_attention.3} parent=23 // pred_fallthru
          _
      $region24: #{cross_slice_attention.3} parent=5 // pred_fallthru
        _
      %p302 = scmp.le.s32.totalorder 1, %s10
      %p303 = scmp.lt.s32.totalorder %s10, 3
      %p304 = pnand %p302, %p303
      %p305 = pneg %p304
      // Predicated region
      $region63: #{cross_slice_attention.3} parent=5 // pred_check
        _
      $region64: #{cross_slice_attention.3} parent=5 // pred_check_branch
        %307 = sbr.rel (%p304) target = $region66
      $region65: #{cross_slice_attention.3} parent=5 // pred_region
        %s308 = ssub.s32 %s10, 1
        // Predicated region
        $region67: #{cross_slice_attention.3} parent=65 // pred_check
          %p309 = pneg %p31
        $region68: #{cross_slice_attention.3} parent=65 // pred_check_branch
          %311 = sbr.rel (%p309) target = $region70
        $region69: #{cross_slice_attention.3} parent=65 // pred_region
          %312 = dma.done [#allocation3], 128
        $region70: #{cross_slice_attention.3} parent=65 // pred_fallthru
          _
        %s313 = sand.u32 %s65, 1
        %s314 = sand.u32 %s65, 1
        %s315 = smul.addr %s314, 256
        %s316 = scalar_lea.vmem [#allocation4], %s315
        // Predicated region
        $region71: #{cross_slice_attention.3} parent=65 // pred_check
          %p317 = pneg %p78
        $region72: #{cross_slice_attention.3} parent=65 // pred_check_branch
          %319 = sbr.rel (%p317) target = $region74
        $region73: #{cross_slice_attention.3} parent=65 // pred_region
          _
        $region74: #{cross_slice_attention.3} parent=65 // pred_fallthru
          _
        %320 = sfence
        %p321 = pneg %p31
        %p322 = pneg %p28
        %p323 = pneg %p52
        %p324 = pneg %p49
        %s325 = sand.u32 %s65, 1
        %s326 = sand.u32 %s65, 1
        %s327 = smul.addr %s326, 256
        %s328 = scalar_lea.vmem [#allocation4], %s327
        %p329 = pneg %p78
        %p330 = pneg %p75
        %p331 = pneg %p104
        %p332 = pneg %p101
        %s333 = sand.u32 %s91, 1
        %s334 = sand.u32 %s91, 1
        %s335 = smul.addr %s334, 256
        %s336 = scalar_lea.vmem [#allocation5], %s335
        %v337 = vld [vmem:[%s1] sm:$0xff]
        %v338 = vld [vmem:[%s1 + $0x8] sm:$0xff]
        %v339 = vld [vmem:[%s1 + $0x10] sm:$0xff]
        %v340 = vld [vmem:[%s1 + $0x18] sm:$0xff]
        %s341 = sld [smem:[#allocation2]]
        %v342 = vld [vmem:[%s316] sm:$0xff]
        %v343 = vld [vmem:[%s316 + $0x8] sm:$0xff]
        %v344 = vld [vmem:[%s316 + $0x10] sm:$0xff]
        %v345 = vld [vmem:[%s316 + $0x18] sm:$0xff]
        %v346 = vstv %s341
        %v347 = vmul.f32 %v346, %v342
        %v348 = vmul.f32 %v346, %v343
        %v349 = vmul.f32 %v346, %v344
        %v350 = vmul.f32 %v346, %v345
        %s351 = sld [smem:[#allocation2 + $0x1]]
        %s352 = scalar_lea.vmem %s316, 32 [#allocation4]
        %v353 = vld [vmem:[%s352] sm:$0xff]
        %v354 = vld [vmem:[%s352 + $0x8] sm:$0xff]
        %v355 = vld [vmem:[%s352 + $0x10] sm:$0xff]
        %v356 = vld [vmem:[%s352 + $0x18] sm:$0xff]
        %v357 = vstv %s351
        %v358 = vmul.f32 %v357, %v353
        %v359 = vmul.f32 %v357, %v354
        %v360 = vmul.f32 %v357, %v355
        %v361 = vmul.f32 %v357, %v356
        %v362 = vadd.f32 %v347, %v358
        %v363 = vadd.f32 %v348, %v359
        %v364 = vadd.f32 %v349, %v360
        %v365 = vadd.f32 %v350, %v361
        %s366 = sld [smem:[#allocation2 + $0x2]]
        %s367 = scalar_lea.vmem %s316, 64 [#allocation4]
        %v368 = vld [vmem:[%s367] sm:$0xff]
        %v369 = vld [vmem:[%s367 + $0x8] sm:$0xff]
        %v370 = vld [vmem:[%s367 + $0x10] sm:$0xff]
        %v371 = vld [vmem:[%s367 + $0x18] sm:$0xff]
        %v372 = vstv %s366
        %v373 = vmul.f32 %v372, %v368
        %v374 = vmul.f32 %v372, %v369
        %v375 = vmul.f32 %v372, %v370
        %v376 = vmul.f32 %v372, %v371
        %v377 = vadd.f32 %v362, %v373
        %v378 = vadd.f32 %v363, %v374
        %v379 = vadd.f32 %v364, %v375
        %v380 = vadd.f32 %v365, %v376
        %s381 = sld [smem:[#allocation2 + $0x3]]
        %s382 = scalar_lea.vmem %s316, 96 [#allocation4]
        %v383 = vld [vmem:[%s382] sm:$0xff]
        %v384 = vld [vmem:[%s382 + $0x8] sm:$0xff]
        %v385 = vld [vmem:[%s382 + $0x10] sm:$0xff]
        %v386 = vld [vmem:[%s382 + $0x18] sm:$0xff]
        %v387 = vstv %s381
        %v388 = vmul.f32 %v387, %v383
        %v389 = vmul.f32 %v387, %v384
        %v390 = vmul.f32 %v387, %v385
        %v391 = vmul.f32 %v387, %v386
        %v392 = vadd.f32 %v377, %v388
        %v393 = vadd.f32 %v378, %v389
        %v394 = vadd.f32 %v379, %v390
        %v395 = vadd.f32 %v380, %v391
        %s396 = sld [smem:[#allocation2 + $0x4]]
        %s397 = scalar_lea.vmem %s316, 128 [#allocation4]
        %v398 = vld [vmem:[%s397] sm:$0xff]
        %v399 = vld [vmem:[%s397 + $0x8] sm:$0xff]
        %v400 = vld [vmem:[%s397 + $0x10] sm:$0xff]
        %v401 = vld [vmem:[%s397 + $0x18] sm:$0xff]
        %v402 = vstv %s396
        %v403 = vmul.f32 %v402, %v398
        %v404 = vmul.f32 %v402, %v399
        %v405 = vmul.f32 %v402, %v400
        %v406 = vmul.f32 %v402, %v401
        %v407 = vadd.f32 %v392, %v403
        %v408 = vadd.f32 %v393, %v404
        %v409 = vadd.f32 %v394, %v405
        %v410 = vadd.f32 %v395, %v406
        %s411 = sld [smem:[#allocation2 + $0x5]]
        %s412 = scalar_lea.vmem %s316, 160 [#allocation4]
        %v413 = vld [vmem:[%s412] sm:$0xff]
        %v414 = vld [vmem:[%s412 + $0x8] sm:$0xff]
        %v415 = vld [vmem:[%s412 + $0x10] sm:$0xff]
        %v416 = vld [vmem:[%s412 + $0x18] sm:$0xff]
        %v417 = vstv %s411
        %v418 = vmul.f32 %v417, %v413
        %v419 = vmul.f32 %v417, %v414
        %v420 = vmul.f32 %v417, %v415
        %v421 = vmul.f32 %v417, %v416
        %v422 = vadd.f32 %v407, %v418
        %v423 = vadd.f32 %v408, %v419
        %v424 = vadd.f32 %v409, %v420
        %v425 = vadd.f32 %v410, %v421
        %s426 = sld [smem:[#allocation2 + $0x6]]
        %s427 = scalar_lea.vmem %s316, 192 [#allocation4]
        %v428 = vld [vmem:[%s427] sm:$0xff]
        %v429 = vld [vmem:[%s427 + $0x8] sm:$0xff]
        %v430 = vld [vmem:[%s427 + $0x10] sm:$0xff]
        %v431 = vld [vmem:[%s427 + $0x18] sm:$0xff]
        %v432 = vstv %s426
        %v433 = vmul.f32 %v432, %v428
        %v434 = vmul.f32 %v432, %v429
        %v435 = vmul.f32 %v432, %v430
        %v436 = vmul.f32 %v432, %v431
        %v437 = vadd.f32 %v422, %v433
        %v438 = vadd.f32 %v423, %v434
        %v439 = vadd.f32 %v424, %v435
        %v440 = vadd.f32 %v425, %v436
        %s441 = sld [smem:[#allocation2 + $0x7]]
        %s442 = scalar_lea.vmem %s316, 224 [#allocation4]
        %v443 = vld [vmem:[%s442] sm:$0xff]
        %v444 = vld [vmem:[%s442 + $0x8] sm:$0xff]
        %v445 = vld [vmem:[%s442 + $0x10] sm:$0xff]
        %v446 = vld [vmem:[%s442 + $0x18] sm:$0xff]
        %v447 = vstv %s441
        %v448 = vmul.f32 %v447, %v443
        %v449 = vmul.f32 %v447, %v444
        %v450 = vmul.f32 %v447, %v445
        %v451 = vmul.f32 %v447, %v446
        %v452 = vadd.f32 %v437, %v448
        %v453 = vadd.f32 %v438, %v449
        %v454 = vadd.f32 %v439, %v450
        %v455 = vadd.f32 %v440, %v451
        %vm456 = vcmask 261120
        %v458 = vsel %vm456, %v337, 0
        %v461 = vsel %vm456, %v338, 0
        %v464 = vsel %vm456, %v339, 0
        %v467 = vsel %vm456, %v340, 0
        %469 = vmatprep.subr.mxu0 0.0
        %470 = vmatpush1.msra.mxu0 %v452
        %471 = vmatprep.subr.mxu0 0.0
        %472 = vmatpush1.msra.mxu0 %v453
        %473 = vmatprep.subr.mxu0 0.0
        %474 = vmatpush1.msra.mxu0 %v454
        %475 = vmatprep.subr.mxu0 0.0
        %476 = vmatpush1.msra.mxu0 %v455
        %477 = vmatprep.subr.mxu0 0.0
        %478 = vmatpush1.msra.mxu0 0.0
        %479 = vmatprep.subr.mxu0 0.0
        %480 = vmatpush1.msra.mxu0 0.0
        %481 = vmatprep.subr.mxu0 0.0
        %482 = vmatpush1.msra.mxu0 0.0
        %483 = vmatprep.subr.mxu0 0.0
        %484 = vmatpush1.msra.mxu0 0.0
        %485 = vmatprep.subr.mxu0 0.0
        %486 = vmatpush1.msra.mxu0 0.0
        %487 = vmatprep.subr.mxu0 0.0
        %488 = vmatpush1.msra.mxu0 0.0
        %489 = vmatprep.subr.mxu0 0.0
        %490 = vmatpush1.msra.mxu0 0.0
        %491 = vmatprep.subr.mxu0 0.0
        %492 = vmatpush1.msra.mxu0 0.0
        %493 = vmatprep.subr.mxu0 0.0
        %494 = vmatpush1.msra.mxu0 0.0
        %495 = vmatprep.subr.mxu0 0.0
        %496 = vmatpush1.msra.mxu0 0.0
        %497 = vmatprep.subr.mxu0 0.0
        %498 = vmatpush1.msra.mxu0 0.0
        %499 = vmatprep.subr.mxu0 0.0
        %500 = vmatpush1.msra.mxu0 0.0
        %501 = vmatprep.subr.mxu0 0.0
        %502 = vmatpush1.msra.mxu0 0.0
        %503 = vmatprep.subr.mxu0 0.0
        %504 = vmatpush1.msra.mxu0 0.0
        %505 = vmatprep.subr.mxu0 0.0
        %506 = vmatpush1.msra.mxu0 0.0
        %507 = vmatprep.subr.mxu0 0.0
        %508 = vmatpush1.msra.mxu0 0.0
        %509 = vmatprep.subr.mxu0 0.0
        %510 = vmatpush1.msra.mxu0 0.0
        %511 = vmatprep.subr.mxu0 0.0
        %512 = vmatpush1.msra.mxu0 0.0
        %513 = vmatprep.subr.mxu0 0.0
        %514 = vmatpush1.msra.mxu0 0.0
        %515 = vmatprep.subr.mxu0 0.0
        %516 = vmatpush1.msra.mxu0 0.0
        %517 = vmatprep.subr.mxu0 0.0
        %518 = vmatpush1.msra.mxu0 0.0
        %519 = vmatprep.subr.mxu0 0.0
        %520 = vmatpush1.msra.mxu0 0.0
        %521 = vmatprep.subr.mxu0 0.0
        %522 = vmatpush1.msra.mxu0 0.0
        %523 = vmatprep.subr.mxu0 0.0
        %524 = vmatpush1.msra.mxu0 0.0
        %525 = vmatprep.subr.mxu0 0.0
        %526 = vmatpush1.msra.mxu0 0.0
        %527 = vmatprep.subr.mxu0 0.0
        %528 = vmatpush1.msra.mxu0 0.0
        %529 = vmatprep.subr.mxu0 0.0
        %530 = vmatpush1.msra.mxu0 0.0
        %531 = vmatprep.subr.mxu0 0.0
        %532 = vmatpush1.msra.mxu0 0.0
        %533 = vmatprep.mubr.f32.mxu0 0.0
        %534 = vmatmul.mubr.f32.gmra.mrb[0].mxu0 %v458
        %v535 = vpop.f32.mrb[0].mxu0
        %v536 = vadd.f32 0.0, %v535
        %v537 = vpop.f32.mrb[0].mxu0
        %538 = vmatprep.mubr.f32.mxu0 0.0
        %539 = vmatmul.mubr.f32.gmra.mrb[0].mxu0 %v461
        %v540 = vpop.f32.mrb[0].mxu0
        %v541 = vadd.f32 0.0, %v540
        %v542 = vpop.f32.mrb[0].mxu0
        %543 = vmatprep.mubr.f32.mxu0 0.0
        %544 = vmatmul.mubr.f32.gmra.mrb[0].mxu0 %v464
        %v545 = vpop.f32.mrb[0].mxu0
        %v546 = vadd.f32 0.0, %v545
        %v547 = vpop.f32.mrb[0].mxu0
        %548 = vmatprep.mubr.f32.mxu0 0.0
        %549 = vmatmul.mubr.f32.gmra.mrb[0].mxu0 %v467
        %v550 = vpop.f32.mrb[0].mxu0
        %v551 = vadd.f32 0.0, %v550
        %v552 = vpop.f32.mrb[0].mxu0
        %553 = vdwg.mxu0
        %554 = vst [vmem:[%s336] sm:$0xff] %v536
        %555 = vst [vmem:[%s336 + $0x8] sm:$0xff] %v541
        %556 = vst [vmem:[%s336 + $0x10] sm:$0xff] %v546
        %557 = vst [vmem:[%s336 + $0x18] sm:$0xff] %v551
        %s558 = sld [smem:[#allocation2 + $0x80]]
        %v559 = vld [vmem:[%s316] sm:$0xff]
        %v560 = vld [vmem:[%s316 + $0x8] sm:$0xff]
        %v561 = vld [vmem:[%s316 + $0x10] sm:$0xff]
        %v562 = vld [vmem:[%s316 + $0x18] sm:$0xff]
        %v563 = vstv %s558
        %v564 = vmul.f32 %v563, %v559
        %v565 = vmul.f32 %v563, %v560
        %v566 = vmul.f32 %v563, %v561
        %v567 = vmul.f32 %v563, %v562
        %s568 = sld [smem:[#allocation2 + $0x81]]
        %v569 = vld [vmem:[%s352] sm:$0xff]
        %v570 = vld [vmem:[%s352 + $0x8] sm:$0xff]
        %v571 = vld [vmem:[%s352 + $0x10] sm:$0xff]
        %v572 = vld [vmem:[%s352 + $0x18] sm:$0xff]
        %v573 = vstv %s568
        %v574 = vmul.f32 %v573, %v569
        %v575 = vmul.f32 %v573, %v570
        %v576 = vmul.f32 %v573, %v571
        %v577 = vmul.f32 %v573, %v572
        %v578 = vadd.f32 %v564, %v574
        %v579 = vadd.f32 %v565, %v575
        %v580 = vadd.f32 %v566, %v576
        %v581 = vadd.f32 %v567, %v577
        %s582 = sld [smem:[#allocation2 + $0x82]]
        %v583 = vld [vmem:[%s367] sm:$0xff]
        %v584 = vld [vmem:[%s367 + $0x8] sm:$0xff]
        %v585 = vld [vmem:[%s367 + $0x10] sm:$0xff]
        %v586 = vld [vmem:[%s367 + $0x18] sm:$0xff]
        %v587 = vstv %s582
        %v588 = vmul.f32 %v587, %v583
        %v589 = vmul.f32 %v587, %v584
        %v590 = vmul.f32 %v587, %v585
        %v591 = vmul.f32 %v587, %v586
        %v592 = vadd.f32 %v578, %v588
        %v593 = vadd.f32 %v579, %v589
        %v594 = vadd.f32 %v580, %v590
        %v595 = vadd.f32 %v581, %v591
        %s596 = sld [smem:[#allocation2 + $0x83]]
        %v597 = vld [vmem:[%s382] sm:$0xff]
        %v598 = vld [vmem:[%s382 + $0x8] sm:$0xff]
        %v599 = vld [vmem:[%s382 + $0x10] sm:$0xff]
        %v600 = vld [vmem:[%s382 + $0x18] sm:$0xff]
        %v601 = vstv %s596
        %v602 = vmul.f32 %v601, %v597
        %v603 = vmul.f32 %v601, %v598
        %v604 = vmul.f32 %v601, %v599
        %v605 = vmul.f32 %v601, %v600
        %v606 = vadd.f32 %v592, %v602
        %v607 = vadd.f32 %v593, %v603
        %v608 = vadd.f32 %v594, %v604
        %v609 = vadd.f32 %v595, %v605
        %s610 = sld [smem:[#allocation2 + $0x84]]
        %v611 = vld [vmem:[%s397] sm:$0xff]
        %v612 = vld [vmem:[%s397 + $0x8] sm:$0xff]
        %v613 = vld [vmem:[%s397 + $0x10] sm:$0xff]
        %v614 = vld [vmem:[%s397 + $0x18] sm:$0xff]
        %v615 = vstv %s610
        %v616 = vmul.f32 %v615, %v611
        %v617 = vmul.f32 %v615, %v612
        %v618 = vmul.f32 %v615, %v613
        %v619 = vmul.f32 %v615, %v614
        %v620 = vadd.f32 %v606, %v616
        %v621 = vadd.f32 %v607, %v617
        %v622 = vadd.f32 %v608, %v618
        %v623 = vadd.f32 %v609, %v619
        %s624 = sld [smem:[#allocation2 + $0x85]]
        %v625 = vld [vmem:[%s412] sm:$0xff]
        %v626 = vld [vmem:[%s412 + $0x8] sm:$0xff]
        %v627 = vld [vmem:[%s412 + $0x10] sm:$0xff]
        %v628 = vld [vmem:[%s412 + $0x18] sm:$0xff]
        %v629 = vstv %s624
        %v630 = vmul.f32 %v629, %v625
        %v631 = vmul.f32 %v629, %v626
        %v632 = vmul.f32 %v629, %v627
        %v633 = vmul.f32 %v629, %v628
        %v634 = vadd.f32 %v620, %v630
        %v635 = vadd.f32 %v621, %v631
        %v636 = vadd.f32 %v622, %v632
        %v637 = vadd.f32 %v623, %v633
        %s638 = sld [smem:[#allocation2 + $0x86]]
        %v639 = vld [vmem:[%s427] sm:$0xff]
        %v640 = vld [vmem:[%s427 + $0x8] sm:$0xff]
        %v641 = vld [vmem:[%s427 + $0x10] sm:$0xff]
        %v642 = vld [vmem:[%s427 + $0x18] sm:$0xff]
        %v643 = vstv %s638
        %v644 = vmul.f32 %v643, %v639
        %v645 = vmul.f32 %v643, %v640
        %v646 = vmul.f32 %v643, %v641
        %v647 = vmul.f32 %v643, %v642
        %v648 = vadd.f32 %v634, %v644
        %v649 = vadd.f32 %v635, %v645
        %v650 = vadd.f32 %v636, %v646
        %v651 = vadd.f32 %v637, %v647
        %s652 = sld [smem:[#allocation2 + $0x87]]
        %v653 = vld [vmem:[%s442] sm:$0xff]
        %v654 = vld [vmem:[%s442 + $0x8] sm:$0xff]
        %v655 = vld [vmem:[%s442 + $0x10] sm:$0xff]
        %v656 = vld [vmem:[%s442 + $0x18] sm:$0xff]
        %v657 = vstv %s652
        %v658 = vmul.f32 %v657, %v653
        %v659 = vmul.f32 %v657, %v654
        %v660 = vmul.f32 %v657, %v655
        %v661 = vmul.f32 %v657, %v656
        %v662 = vadd.f32 %v648, %v658
        %v663 = vadd.f32 %v649, %v659
        %v664 = vadd.f32 %v650, %v660
        %v665 = vadd.f32 %v651, %v661
        %666 = vmatprep.subr.mxu0 0.0
        %667 = vmatpush1.msra.mxu0 %v662
        %668 = vmatprep.subr.mxu0 0.0
        %669 = vmatpush1.msra.mxu0 %v663
        %670 = vmatprep.subr.mxu0 0.0
        %671 = vmatpush1.msra.mxu0 %v664
        %672 = vmatprep.subr.mxu0 0.0
        %673 = vmatpush1.msra.mxu0 %v665
        %674 = vmatprep.subr.mxu0 0.0
        %675 = vmatpush1.msra.mxu0 0.0
        %676 = vmatprep.subr.mxu0 0.0
        %677 = vmatpush1.msra.mxu0 0.0
        %678 = vmatprep.subr.mxu0 0.0
        %679 = vmatpush1.msra.mxu0 0.0
        %680 = vmatprep.subr.mxu0 0.0
        %681 = vmatpush1.msra.mxu0 0.0
        %682 = vmatprep.subr.mxu0 0.0
        %683 = vmatpush1.msra.mxu0 0.0
        %684 = vmatprep.subr.mxu0 0.0
        %685 = vmatpush1.msra.mxu0 0.0
        %686 = vmatprep.subr.mxu0 0.0
        %687 = vmatpush1.msra.mxu0 0.0
        %688 = vmatprep.subr.mxu0 0.0
        %689 = vmatpush1.msra.mxu0 0.0
        %690 = vmatprep.subr.mxu0 0.0
        %691 = vmatpush1.msra.mxu0 0.0
        %692 = vmatprep.subr.mxu0 0.0
        %693 = vmatpush1.msra.mxu0 0.0
        %694 = vmatprep.subr.mxu0 0.0
        %695 = vmatpush1.msra.mxu0 0.0
        %696 = vmatprep.subr.mxu0 0.0
        %697 = vmatpush1.msra.mxu0 0.0
        %698 = vmatprep.subr.mxu0 0.0
        %699 = vmatpush1.msra.mxu0 0.0
        %700 = vmatprep.subr.mxu0 0.0
        %701 = vmatpush1.msra.mxu0 0.0
        %702 = vmatprep.subr.mxu0 0.0
        %703 = vmatpush1.msra.mxu0 0.0
        %704 = vmatprep.subr.mxu0 0.0
        %705 = vmatpush1.msra.mxu0 0.0
        %706 = vmatprep.subr.mxu0 0.0
        %707 = vmatpush1.msra.mxu0 0.0
        %708 = vmatprep.subr.mxu0 0.0
        %709 = vmatpush1.msra.mxu0 0.0
        %710 = vmatprep.subr.mxu0 0.0
        %711 = vmatpush1.msra.mxu0 0.0
        %712 = vmatprep.subr.mxu0 0.0
        %713 = vmatpush1.msra.mxu0 0.0
        %714 = vmatprep.subr.mxu0 0.0
        %715 = vmatpush1.msra.mxu0 0.0
        %716 = vmatprep.subr.mxu0 0.0
        %717 = vmatpush1.msra.mxu0 0.0
        %718 = vmatprep.subr.mxu0 0.0
        %719 = vmatpush1.msra.mxu0 0.0
        %720 = vmatprep.subr.mxu0 0.0
        %721 = vmatpush1.msra.mxu0 0.0
        %722 = vmatprep.subr.mxu0 0.0
        %723 = vmatpush1.msra.mxu0 0.0
        %724 = vmatprep.subr.mxu0 0.0
        %725 = vmatpush1.msra.mxu0 0.0
        %726 = vmatprep.subr.mxu0 0.0
        %727 = vmatpush1.msra.mxu0 0.0
        %728 = vmatprep.subr.mxu0 0.0
        %729 = vmatpush1.msra.mxu0 0.0
        %730 = vmatprep.mubr.f32.mxu0 0.0
        %731 = vmatmul.mubr.f32.gmra.mrb[0].mxu0 %v458
        %v732 = vpop.f32.mrb[0].mxu0
        %v733 = vadd.f32 0.0, %v732
        %v734 = vpop.f32.mrb[0].mxu0
        %735 = vmatprep.mubr.f32.mxu0 0.0
        %736 = vmatmul.mubr.f32.gmra.mrb[0].mxu0 %v461
        %v737 = vpop.f32.mrb[0].mxu0
        %v738 = vadd.f32 0.0, %v737
        %v739 = vpop.f32.mrb[0].mxu0
        %740 = vmatprep.mubr.f32.mxu0 0.0
        %741 = vmatmul.mubr.f32.gmra.mrb[0].mxu0 %v464
        %v742 = vpop.f32.mrb[0].mxu0
        %v743 = vadd.f32 0.0, %v742
        %v744 = vpop.f32.mrb[0].mxu0
        %745 = vmatprep.mubr.f32.mxu0 0.0
        %746 = vmatmul.mubr.f32.gmra.mrb[0].mxu0 %v467
        %v747 = vpop.f32.mrb[0].mxu0
        %v748 = vadd.f32 0.0, %v747
        %v749 = vpop.f32.mrb[0].mxu0
        %750 = vdwg.mxu0
        %s751 = scalar_lea.vmem %s336, 32 [#allocation5]
        %752 = vst [vmem:[%s751] sm:$0xff] %v733
        %753 = vst [vmem:[%s751 + $0x8] sm:$0xff] %v738
        %754 = vst [vmem:[%s751 + $0x10] sm:$0xff] %v743
        %755 = vst [vmem:[%s751 + $0x18] sm:$0xff] %v748
        %s756 = sld [smem:[#allocation2 + $0x100]]
        %v757 = vld [vmem:[%s316] sm:$0xff]
        %v758 = vld [vmem:[%s316 + $0x8] sm:$0xff]
        %v759 = vld [vmem:[%s316 + $0x10] sm:$0xff]
        %v760 = vld [vmem:[%s316 + $0x18] sm:$0xff]
        %v761 = vstv %s756
        %v762 = vmul.f32 %v761, %v757
        %v763 = vmul.f32 %v761, %v758
        %v764 = vmul.f32 %v761, %v759
        %v765 = vmul.f32 %v761, %v760
        %s766 = sld [smem:[#allocation2 + $0x101]]
        %v767 = vld [vmem:[%s352] sm:$0xff]
        %v768 = vld [vmem:[%s352 + $0x8] sm:$0xff]
        %v769 = vld [vmem:[%s352 + $0x10] sm:$0xff]
        %v770 = vld [vmem:[%s352 + $0x18] sm:$0xff]
        %v771 = vstv %s766
        %v772 = vmul.f32 %v771, %v767
        %v773 = vmul.f32 %v771, %v768
        %v774 = vmul.f32 %v771, %v769
        %v775 = vmul.f32 %v771, %v770
        %v776 = vadd.f32 %v762, %v772
        %v777 = vadd.f32 %v763, %v773
        %v778 = vadd.f32 %v764, %v774
        %v779 = vadd.f32 %v765, %v775
        %s780 = sld [smem:[#allocation2 + $0x102]]
        %v781 = vld [vmem:[%s367] sm:$0xff]
        %v782 = vld [vmem:[%s367 + $0x8] sm:$0xff]
        %v783 = vld [vmem:[%s367 + $0x10] sm:$0xff]
        %v784 = vld [vmem:[%s367 + $0x18] sm:$0xff]
        %v785 = vstv %s780
        %v786 = vmul.f32 %v785, %v781
        %v787 = vmul.f32 %v785, %v782
        %v788 = vmul.f32 %v785, %v783
        %v789 = vmul.f32 %v785, %v784
        %v790 = vadd.f32 %v776, %v786
        %v791 = vadd.f32 %v777, %v787
        %v792 = vadd.f32 %v778, %v788
        %v793 = vadd.f32 %v779, %v789
        %s794 = sld [smem:[#allocation2 + $0x103]]
        %v795 = vld [vmem:[%s382] sm:$0xff]
        %v796 = vld [vmem:[%s382 + $0x8] sm:$0xff]
        %v797 = vld [vmem:[%s382 + $0x10] sm:$0xff]
        %v798 = vld [vmem:[%s382 + $0x18] sm:$0xff]
        %v799 = vstv %s794
        %v800 = vmul.f32 %v799, %v795
        %v801 = vmul.f32 %v799, %v796
        %v802 = vmul.f32 %v799, %v797
        %v803 = vmul.f32 %v799, %v798
        %v804 = vadd.f32 %v790, %v800
        %v805 = vadd.f32 %v791, %v801
        %v806 = vadd.f32 %v792, %v802
        %v807 = vadd.f32 %v793, %v803
        %s808 = sld [smem:[#allocation2 + $0x104]]
        %v809 = vld [vmem:[%s397] sm:$0xff]
        %v810 = vld [vmem:[%s397 + $0x8] sm:$0xff]
        %v811 = vld [vmem:[%s397 + $0x10] sm:$0xff]
        %v812 = vld [vmem:[%s397 + $0x18] sm:$0xff]
        %v813 = vstv %s808
        %v814 = vmul.f32 %v813, %v809
        %v815 = vmul.f32 %v813, %v810
        %v816 = vmul.f32 %v813, %v811
        %v817 = vmul.f32 %v813, %v812
        %v818 = vadd.f32 %v804, %v814
        %v819 = vadd.f32 %v805, %v815
        %v820 = vadd.f32 %v806, %v816
        %v821 = vadd.f32 %v807, %v817
        %s822 = sld [smem:[#allocation2 + $0x105]]
        %v823 = vld [vmem:[%s412] sm:$0xff]
        %v824 = vld [vmem:[%s412 + $0x8] sm:$0xff]
        %v825 = vld [vmem:[%s412 + $0x10] sm:$0xff]
        %v826 = vld [vmem:[%s412 + $0x18] sm:$0xff]
        %v827 = vstv %s822
        %v828 = vmul.f32 %v827, %v823
        %v829 = vmul.f32 %v827, %v824
        %v830 = vmul.f32 %v827, %v825
        %v831 = vmul.f32 %v827, %v826
        %v832 = vadd.f32 %v818, %v828
        %v833 = vadd.f32 %v819, %v829
        %v834 = vadd.f32 %v820, %v830
        %v835 = vadd.f32 %v821, %v831
        %s836 = sld [smem:[#allocation2 + $0x106]]
        %v837 = vld [vmem:[%s427] sm:$0xff]
        %v838 = vld [vmem:[%s427 + $0x8] sm:$0xff]
        %v839 = vld [vmem:[%s427 + $0x10] sm:$0xff]
        %v840 = vld [vmem:[%s427 + $0x18] sm:$0xff]
        %v841 = vstv %s836
        %v842 = vmul.f32 %v841, %v837
        %v843 = vmul.f32 %v841, %v838
        %v844 = vmul.f32 %v841, %v839
        %v845 = vmul.f32 %v841, %v840
        %v846 = vadd.f32 %v832, %v842
        %v847 = vadd.f32 %v833, %v843
        %v848 = vadd.f32 %v834, %v844
        %v849 = vadd.f32 %v835, %v845
        %s850 = sld [smem:[#allocation2 + $0x107]]
        %v851 = vld [vmem:[%s442] sm:$0xff]
        %v852 = vld [vmem:[%s442 + $0x8] sm:$0xff]
        %v853 = vld [vmem:[%s442 + $0x10] sm:$0xff]
        %v854 = vld [vmem:[%s442 + $0x18] sm:$0xff]
        %v855 = vstv %s850
        %v856 = vmul.f32 %v855, %v851
        %v857 = vmul.f32 %v855, %v852
        %v858 = vmul.f32 %v855, %v853
        %v859 = vmul.f32 %v855, %v854
        %v860 = vadd.f32 %v846, %v856
        %v861 = vadd.f32 %v847, %v857
        %v862 = vadd.f32 %v848, %v858
        %v863 = vadd.f32 %v849, %v859
        %864 = vmatprep.subr.mxu0 0.0
        %865 = vmatpush1.msra.mxu0 %v860
        %866 = vmatprep.subr.mxu0 0.0
        %867 = vmatpush1.msra.mxu0 %v861
        %868 = vmatprep.subr.mxu0 0.0
        %869 = vmatpush1.msra.mxu0 %v862
        %870 = vmatprep.subr.mxu0 0.0
        %871 = vmatpush1.msra.mxu0 %v863
        %872 = vmatprep.subr.mxu0 0.0
        %873 = vmatpush1.msra.mxu0 0.0
        %874 = vmatprep.subr.mxu0 0.0
        %875 = vmatpush1.msra.mxu0 0.0
        %876 = vmatprep.subr.mxu0 0.0
        %877 = vmatpush1.msra.mxu0 0.0
        %878 = vmatprep.subr.mxu0 0.0
        %879 = vmatpush1.msra.mxu0 0.0
        %880 = vmatprep.subr.mxu0 0.0
        %881 = vmatpush1.msra.mxu0 0.0
        %882 = vmatprep.subr.mxu0 0.0
        %883 = vmatpush1.msra.mxu0 0.0
        %884 = vmatprep.subr.mxu0 0.0
        %885 = vmatpush1.msra.mxu0 0.0
        %886 = vmatprep.subr.mxu0 0.0
        %887 = vmatpush1.msra.mxu0 0.0
        %888 = vmatprep.subr.mxu0 0.0
        %889 = vmatpush1.msra.mxu0 0.0
        %890 = vmatprep.subr.mxu0 0.0
        %891 = vmatpush1.msra.mxu0 0.0
        %892 = vmatprep.subr.mxu0 0.0
        %893 = vmatpush1.msra.mxu0 0.0
        %894 = vmatprep.subr.mxu0 0.0
        %895 = vmatpush1.msra.mxu0 0.0
        %896 = vmatprep.subr.mxu0 0.0
        %897 = vmatpush1.msra.mxu0 0.0
        %898 = vmatprep.subr.mxu0 0.0
        %899 = vmatpush1.msra.mxu0 0.0
        %900 = vmatprep.subr.mxu0 0.0
        %901 = vmatpush1.msra.mxu0 0.0
        %902 = vmatprep.subr.mxu0 0.0
        %903 = vmatpush1.msra.mxu0 0.0
        %904 = vmatprep.subr.mxu0 0.0
        %905 = vmatpush1.msra.mxu0 0.0
        %906 = vmatprep.subr.mxu0 0.0
        %907 = vmatpush1.msra.mxu0 0.0
        %908 = vmatprep.subr.mxu0 0.0
        %909 = vmatpush1.msra.mxu0 0.0
        %910 = vmatprep.subr.mxu0 0.0
        %911 = vmatpush1.msra.mxu0 0.0
        %912 = vmatprep.subr.mxu0 0.0
        %913 = vmatpush1.msra.mxu0 0.0
        %914 = vmatprep.subr.mxu0 0.0
        %915 = vmatpush1.msra.mxu0 0.0
        %916 = vmatprep.subr.mxu0 0.0
        %917 = vmatpush1.msra.mxu0 0.0
        %918 = vmatprep.subr.mxu0 0.0
        %919 = vmatpush1.msra.mxu0 0.0
        %920 = vmatprep.subr.mxu0 0.0
        %921 = vmatpush1.msra.mxu0 0.0
        %922 = vmatprep.subr.mxu0 0.0
        %923 = vmatpush1.msra.mxu0 0.0
        %924 = vmatprep.subr.mxu0 0.0
        %925 = vmatpush1.msra.mxu0 0.0
        %926 = vmatprep.subr.mxu0 0.0
        %927 = vmatpush1.msra.mxu0 0.0
        %928 = vmatprep.mubr.f32.mxu0 0.0
        %929 = vmatmul.mubr.f32.gmra.mrb[0].mxu0 %v458
        %v930 = vpop.f32.mrb[0].mxu0
        %v931 = vadd.f32 0.0, %v930
        %v932 = vpop.f32.mrb[0].mxu0
        %933 = vmatprep.mubr.f32.mxu0 0.0
        %934 = vmatmul.mubr.f32.gmra.mrb[0].mxu0 %v461
        %v935 = vpop.f32.mrb[0].mxu0
        %v936 = vadd.f32 0.0, %v935
        %v937 = vpop.f32.mrb[0].mxu0
        %938 = vmatprep.mubr.f32.mxu0 0.0
        %939 = vmatmul.mubr.f32.gmra.mrb[0].mxu0 %v464
        %v940 = vpop.f32.mrb[0].mxu0
        %v941 = vadd.f32 0.0, %v940
        %v942 = vpop.f32.mrb[0].mxu0
        %943 = vmatprep.mubr.f32.mxu0 0.0
        %944 = vmatmul.mubr.f32.gmra.mrb[0].mxu0 %v467
        %v945 = vpop.f32.mrb[0].mxu0
        %v946 = vadd.f32 0.0, %v945
        %v947 = vpop.f32.mrb[0].mxu0
        %948 = vdwg.mxu0
        %s949 = scalar_lea.vmem %s336, 64 [#allocation5]
        %950 = vst [vmem:[%s949] sm:$0xff] %v931
        %951 = vst [vmem:[%s949 + $0x8] sm:$0xff] %v936
        %952 = vst [vmem:[%s949 + $0x10] sm:$0xff] %v941
        %953 = vst [vmem:[%s949 + $0x18] sm:$0xff] %v946
        %s954 = sld [smem:[#allocation2 + $0x180]]
        %v955 = vld [vmem:[%s316] sm:$0xff]
        %v956 = vld [vmem:[%s316 + $0x8] sm:$0xff]
        %v957 = vld [vmem:[%s316 + $0x10] sm:$0xff]
        %v958 = vld [vmem:[%s316 + $0x18] sm:$0xff]
        %v959 = vstv %s954
        %v960 = vmul.f32 %v959, %v955
        %v961 = vmul.f32 %v959, %v956
        %v962 = vmul.f32 %v959, %v957
        %v963 = vmul.f32 %v959, %v958
        %s964 = sld [smem:[#allocation2 + $0x181]]
        %v965 = vld [vmem:[%s352] sm:$0xff]
        %v966 = vld [vmem:[%s352 + $0x8] sm:$0xff]
        %v967 = vld [vmem:[%s352 + $0x10] sm:$0xff]
        %v968 = vld [vmem:[%s352 + $0x18] sm:$0xff]
        %v969 = vstv %s964
        %v970 = vmul.f32 %v969, %v965
        %v971 = vmul.f32 %v969, %v966
        %v972 = vmul.f32 %v969, %v967
        %v973 = vmul.f32 %v969, %v968
        %v974 = vadd.f32 %v960, %v970
        %v975 = vadd.f32 %v961, %v971
        %v976 = vadd.f32 %v962, %v972
        %v977 = vadd.f32 %v963, %v973
        %s978 = sld [smem:[#allocation2 + $0x182]]
        %v979 = vld [vmem:[%s367] sm:$0xff]
        %v980 = vld [vmem:[%s367 + $0x8] sm:$0xff]
        %v981 = vld [vmem:[%s367 + $0x10] sm:$0xff]
        %v982 = vld [vmem:[%s367 + $0x18] sm:$0xff]
        %v983 = vstv %s978
        %v984 = vmul.f32 %v983, %v979
        %v985 = vmul.f32 %v983, %v980
        %v986 = vmul.f32 %v983, %v981
        %v987 = vmul.f32 %v983, %v982
        %v988 = vadd.f32 %v974, %v984
        %v989 = vadd.f32 %v975, %v985
        %v990 = vadd.f32 %v976, %v986
        %v991 = vadd.f32 %v977, %v987
        %s992 = sld [smem:[#allocation2 + $0x183]]
        %v993 = vld [vmem:[%s382] sm:$0xff]
        %v994 = vld [vmem:[%s382 + $0x8] sm:$0xff]
        %v995 = vld [vmem:[%s382 + $0x10] sm:$0xff]
        %v996 = vld [vmem:[%s382 + $0x18] sm:$0xff]
        %v997 = vstv %s992
        %v998 = vmul.f32 %v997, %v993
        %v999 = vmul.f32 %v997, %v994
        %v1000 = vmul.f32 %v997, %v995
        %v1001 = vmul.f32 %v997, %v996
        %v1002 = vadd.f32 %v988, %v998
        %v1003 = vadd.f32 %v989, %v999
        %v1004 = vadd.f32 %v990, %v1000
        %v1005 = vadd.f32 %v991, %v1001
        %s1006 = sld [smem:[#allocation2 + $0x184]]
        %v1007 = vld [vmem:[%s397] sm:$0xff]
        %v1008 = vld [vmem:[%s397 + $0x8] sm:$0xff]
        %v1009 = vld [vmem:[%s397 + $0x10] sm:$0xff]
        %v1010 = vld [vmem:[%s397 + $0x18] sm:$0xff]
        %v1011 = vstv %s1006
        %v1012 = vmul.f32 %v1011, %v1007
        %v1013 = vmul.f32 %v1011, %v1008
        %v1014 = vmul.f32 %v1011, %v1009
        %v1015 = vmul.f32 %v1011, %v1010
        %v1016 = vadd.f32 %v1002, %v1012
        %v1017 = vadd.f32 %v1003, %v1013
        %v1018 = vadd.f32 %v1004, %v1014
        %v1019 = vadd.f32 %v1005, %v1015
        %s1020 = sld [smem:[#allocation2 + $0x185]]
        %v1021 = vld [vmem:[%s412] sm:$0xff]
        %v1022 = vld [vmem:[%s412 + $0x8] sm:$0xff]
        %v1023 = vld [vmem:[%s412 + $0x10] sm:$0xff]
        %v1024 = vld [vmem:[%s412 + $0x18] sm:$0xff]
        %v1025 = vstv %s1020
        %v1026 = vmul.f32 %v1025, %v1021
        %v1027 = vmul.f32 %v1025, %v1022
        %v1028 = vmul.f32 %v1025, %v1023
        %v1029 = vmul.f32 %v1025, %v1024
        %v1030 = vadd.f32 %v1016, %v1026
        %v1031 = vadd.f32 %v1017, %v1027
        %v1032 = vadd.f32 %v1018, %v1028
        %v1033 = vadd.f32 %v1019, %v1029
        %s1034 = sld [smem:[#allocation2 + $0x186]]
        %v1035 = vld [vmem:[%s427] sm:$0xff]
        %v1036 = vld [vmem:[%s427 + $0x8] sm:$0xff]
        %v1037 = vld [vmem:[%s427 + $0x10] sm:$0xff]
        %v1038 = vld [vmem:[%s427 + $0x18] sm:$0xff]
        %v1039 = vstv %s1034
        %v1040 = vmul.f32 %v1039, %v1035
        %v1041 = vmul.f32 %v1039, %v1036
        %v1042 = vmul.f32 %v1039, %v1037
        %v1043 = vmul.f32 %v1039, %v1038
        %v1044 = vadd.f32 %v1030, %v1040
        %v1045 = vadd.f32 %v1031, %v1041
        %v1046 = vadd.f32 %v1032, %v1042
        %v1047 = vadd.f32 %v1033, %v1043
        %s1048 = sld [smem:[#allocation2 + $0x187]]
        %v1049 = vld [vmem:[%s442] sm:$0xff]
        %v1050 = vld [vmem:[%s442 + $0x8] sm:$0xff]
        %v1051 = vld [vmem:[%s442 + $0x10] sm:$0xff]
        %v1052 = vld [vmem:[%s442 + $0x18] sm:$0xff]
        %v1053 = vstv %s1048
        %v1054 = vmul.f32 %v1053, %v1049
        %v1055 = vmul.f32 %v1053, %v1050
        %v1056 = vmul.f32 %v1053, %v1051
        %v1057 = vmul.f32 %v1053, %v1052
        %v1058 = vadd.f32 %v1044, %v1054
        %v1059 = vadd.f32 %v1045, %v1055
        %v1060 = vadd.f32 %v1046, %v1056
        %v1061 = vadd.f32 %v1047, %v1057
        %1062 = vmatprep.subr.mxu0 0.0
        %1063 = vmatpush1.msra.mxu0 %v1058
        %1064 = vmatprep.subr.mxu0 0.0
        %1065 = vmatpush1.msra.mxu0 %v1059
        %1066 = vmatprep.subr.mxu0 0.0
        %1067 = vmatpush1.msra.mxu0 %v1060
        %1068 = vmatprep.subr.mxu0 0.0
        %1069 = vmatpush1.msra.mxu0 %v1061
        %1070 = vmatprep.subr.mxu0 0.0
        %1071 = vmatpush1.msra.mxu0 0.0
        %1072 = vmatprep.subr.mxu0 0.0
        %1073 = vmatpush1.msra.mxu0 0.0
        %1074 = vmatprep.subr.mxu0 0.0
        %1075 = vmatpush1.msra.mxu0 0.0
        %1076 = vmatprep.subr.mxu0 0.0
        %1077 = vmatpush1.msra.mxu0 0.0
        %1078 = vmatprep.subr.mxu0 0.0
        %1079 = vmatpush1.msra.mxu0 0.0
        %1080 = vmatprep.subr.mxu0 0.0
        %1081 = vmatpush1.msra.mxu0 0.0
        %1082 = vmatprep.subr.mxu0 0.0
        %1083 = vmatpush1.msra.mxu0 0.0
        %1084 = vmatprep.subr.mxu0 0.0
        %1085 = vmatpush1.msra.mxu0 0.0
        %1086 = vmatprep.subr.mxu0 0.0
        %1087 = vmatpush1.msra.mxu0 0.0
        %1088 = vmatprep.subr.mxu0 0.0
        %1089 = vmatpush1.msra.mxu0 0.0
        %1090 = vmatprep.subr.mxu0 0.0
        %1091 = vmatpush1.msra.mxu0 0.0
        %1092 = vmatprep.subr.mxu0 0.0
        %1093 = vmatpush1.msra.mxu0 0.0
        %1094 = vmatprep.subr.mxu0 0.0
        %1095 = vmatpush1.msra.mxu0 0.0
        %1096 = vmatprep.subr.mxu0 0.0
        %1097 = vmatpush1.msra.mxu0 0.0
        %1098 = vmatprep.subr.mxu0 0.0
        %1099 = vmatpush1.msra.mxu0 0.0
        %1100 = vmatprep.subr.mxu0 0.0
        %1101 = vmatpush1.msra.mxu0 0.0
        %1102 = vmatprep.subr.mxu0 0.0
        %1103 = vmatpush1.msra.mxu0 0.0
        %1104 = vmatprep.subr.mxu0 0.0
        %1105 = vmatpush1.msra.mxu0 0.0
        %1106 = vmatprep.subr.mxu0 0.0
        %1107 = vmatpush1.msra.mxu0 0.0
        %1108 = vmatprep.subr.mxu0 0.0
        %1109 = vmatpush1.msra.mxu0 0.0
        %1110 = vmatprep.subr.mxu0 0.0
        %1111 = vmatpush1.msra.mxu0 0.0
        %1112 = vmatprep.subr.mxu0 0.0
        %1113 = vmatpush1.msra.mxu0 0.0
        %1114 = vmatprep.subr.mxu0 0.0
        %1115 = vmatpush1.msra.mxu0 0.0
        %1116 = vmatprep.subr.mxu0 0.0
        %1117 = vmatpush1.msra.mxu0 0.0
        %1118 = vmatprep.subr.mxu0 0.0
        %1119 = vmatpush1.msra.mxu0 0.0
        %1120 = vmatprep.subr.mxu0 0.0
        %1121 = vmatpush1.msra.mxu0 0.0
        %1122 = vmatprep.subr.mxu0 0.0
        %1123 = vmatpush1.msra.mxu0 0.0
        %1124 = vmatprep.subr.mxu0 0.0
        %1125 = vmatpush1.msra.mxu0 0.0
        %1126 = vmatprep.mubr.f32.mxu0 0.0
        %1127 = vmatmul.mubr.f32.gmra.mrb[0].mxu0 %v458
        %v1128 = vpop.f32.mrb[0].mxu0
        %v1129 = vadd.f32 0.0, %v1128
        %v1130 = vpop.f32.mrb[0].mxu0
        %1131 = vmatprep.mubr.f32.mxu0 0.0
        %1132 = vmatmul.mubr.f32.gmra.mrb[0].mxu0 %v461
        %v1133 = vpop.f32.mrb[0].mxu0
        %v1134 = vadd.f32 0.0, %v1133
        %v1135 = vpop.f32.mrb[0].mxu0
        %1136 = vmatprep.mubr.f32.mxu0 0.0
        %1137 = vmatmul.mubr.f32.gmra.mrb[0].mxu0 %v464
        %v1138 = vpop.f32.mrb[0].mxu0
        %v1139 = vadd.f32 0.0, %v1138
        %v1140 = vpop.f32.mrb[0].mxu0
        %1141 = vmatprep.mubr.f32.mxu0 0.0
        %1142 = vmatmul.mubr.f32.gmra.mrb[0].mxu0 %v467
        %v1143 = vpop.f32.mrb[0].mxu0
        %v1144 = vadd.f32 0.0, %v1143
        %v1145 = vpop.f32.mrb[0].mxu0
        %1146 = vdwg.mxu0
        %s1147 = scalar_lea.vmem %s336, 96 [#allocation5]
        %1148 = vst [vmem:[%s1147] sm:$0xff] %v1129
        %1149 = vst [vmem:[%s1147 + $0x8] sm:$0xff] %v1134
        %1150 = vst [vmem:[%s1147 + $0x10] sm:$0xff] %v1139
        %1151 = vst [vmem:[%s1147 + $0x18] sm:$0xff] %v1144
        %s1152 = sld [smem:[#allocation2 + $0x200]]
        %v1153 = vld [vmem:[%s316] sm:$0xff]
        %v1154 = vld [vmem:[%s316 + $0x8] sm:$0xff]
        %v1155 = vld [vmem:[%s316 + $0x10] sm:$0xff]
        %v1156 = vld [vmem:[%s316 + $0x18] sm:$0xff]
        %v1157 = vstv %s1152
        %v1158 = vmul.f32 %v1157, %v1153
        %v1159 = vmul.f32 %v1157, %v1154
        %v1160 = vmul.f32 %v1157, %v1155
        %v1161 = vmul.f32 %v1157, %v1156
        %s1162 = sld [smem:[#allocation2 + $0x201]]
        %v1163 = vld [vmem:[%s352] sm:$0xff]
        %v1164 = vld [vmem:[%s352 + $0x8] sm:$0xff]
        %v1165 = vld [vmem:[%s352 + $0x10] sm:$0xff]
        %v1166 = vld [vmem:[%s352 + $0x18] sm:$0xff]
        %v1167 = vstv %s1162
        %v1168 = vmul.f32 %v1167, %v1163
        %v1169 = vmul.f32 %v1167, %v1164
        %v1170 = vmul.f32 %v1167, %v1165
        %v1171 = vmul.f32 %v1167, %v1166
        %v1172 = vadd.f32 %v1158, %v1168
        %v1173 = vadd.f32 %v1159, %v1169
        %v1174 = vadd.f32 %v1160, %v1170
        %v1175 = vadd.f32 %v1161, %v1171
        %s1176 = sld [smem:[#allocation2 + $0x202]]
        %v1177 = vld [vmem:[%s367] sm:$0xff]
        %v1178 = vld [vmem:[%s367 + $0x8] sm:$0xff]
        %v1179 = vld [vmem:[%s367 + $0x10] sm:$0xff]
        %v1180 = vld [vmem:[%s367 + $0x18] sm:$0xff]
        %v1181 = vstv %s1176
        %v1182 = vmul.f32 %v1181, %v1177
        %v1183 = vmul.f32 %v1181, %v1178
        %v1184 = vmul.f32 %v1181, %v1179
        %v1185 = vmul.f32 %v1181, %v1180
        %v1186 = vadd.f32 %v1172, %v1182
        %v1187 = vadd.f32 %v1173, %v1183
        %v1188 = vadd.f32 %v1174, %v1184
        %v1189 = vadd.f32 %v1175, %v1185
        %s1190 = sld [smem:[#allocation2 + $0x203]]
        %v1191 = vld [vmem:[%s382] sm:$0xff]
        %v1192 = vld [vmem:[%s382 + $0x8] sm:$0xff]
        %v1193 = vld [vmem:[%s382 + $0x10] sm:$0xff]
        %v1194 = vld [vmem:[%s382 + $0x18] sm:$0xff]
        %v1195 = vstv %s1190
        %v1196 = vmul.f32 %v1195, %v1191
        %v1197 = vmul.f32 %v1195, %v1192
        %v1198 = vmul.f32 %v1195, %v1193
        %v1199 = vmul.f32 %v1195, %v1194
        %v1200 = vadd.f32 %v1186, %v1196
        %v1201 = vadd.f32 %v1187, %v1197
        %v1202 = vadd.f32 %v1188, %v1198
        %v1203 = vadd.f32 %v1189, %v1199
        %s1204 = sld [smem:[#allocation2 + $0x204]]
        %v1205 = vld [vmem:[%s397] sm:$0xff]
        %v1206 = vld [vmem:[%s397 + $0x8] sm:$0xff]
        %v1207 = vld [vmem:[%s397 + $0x10] sm:$0xff]
        %v1208 = vld [vmem:[%s397 + $0x18] sm:$0xff]
        %v1209 = vstv %s1204
        %v1210 = vmul.f32 %v1209, %v1205
        %v1211 = vmul.f32 %v1209, %v1206
        %v1212 = vmul.f32 %v1209, %v1207
        %v1213 = vmul.f32 %v1209, %v1208
        %v1214 = vadd.f32 %v1200, %v1210
        %v1215 = vadd.f32 %v1201, %v1211
        %v1216 = vadd.f32 %v1202, %v1212
        %v1217 = vadd.f32 %v1203, %v1213
        %s1218 = sld [smem:[#allocation2 + $0x205]]
        %v1219 = vld [vmem:[%s412] sm:$0xff]
        %v1220 = vld [vmem:[%s412 + $0x8] sm:$0xff]
        %v1221 = vld [vmem:[%s412 + $0x10] sm:$0xff]
        %v1222 = vld [vmem:[%s412 + $0x18] sm:$0xff]
        %v1223 = vstv %s1218
        %v1224 = vmul.f32 %v1223, %v1219
        %v1225 = vmul.f32 %v1223, %v1220
        %v1226 = vmul.f32 %v1223, %v1221
        %v1227 = vmul.f32 %v1223, %v1222
        %v1228 = vadd.f32 %v1214, %v1224
        %v1229 = vadd.f32 %v1215, %v1225
        %v1230 = vadd.f32 %v1216, %v1226
        %v1231 = vadd.f32 %v1217, %v1227
        %s1232 = sld [smem:[#allocation2 + $0x206]]
        %v1233 = vld [vmem:[%s427] sm:$0xff]
        %v1234 = vld [vmem:[%s427 + $0x8] sm:$0xff]
        %v1235 = vld [vmem:[%s427 + $0x10] sm:$0xff]
        %v1236 = vld [vmem:[%s427 + $0x18] sm:$0xff]
        %v1237 = vstv %s1232
        %v1238 = vmul.f32 %v1237, %v1233
        %v1239 = vmul.f32 %v1237, %v1234
        %v1240 = vmul.f32 %v1237, %v1235
        %v1241 = vmul.f32 %v1237, %v1236
        %v1242 = vadd.f32 %v1228, %v1238
        %v1243 = vadd.f32 %v1229, %v1239
        %v1244 = vadd.f32 %v1230, %v1240
        %v1245 = vadd.f32 %v1231, %v1241
        %s1246 = sld [smem:[#allocation2 + $0x207]]
        %v1247 = vld [vmem:[%s442] sm:$0xff]
        %v1248 = vld [vmem:[%s442 + $0x8] sm:$0xff]
        %v1249 = vld [vmem:[%s442 + $0x10] sm:$0xff]
        %v1250 = vld [vmem:[%s442 + $0x18] sm:$0xff]
        %v1251 = vstv %s1246
        %v1252 = vmul.f32 %v1251, %v1247
        %v1253 = vmul.f32 %v1251, %v1248
        %v1254 = vmul.f32 %v1251, %v1249
        %v1255 = vmul.f32 %v1251, %v1250
        %v1256 = vadd.f32 %v1242, %v1252
        %v1257 = vadd.f32 %v1243, %v1253
        %v1258 = vadd.f32 %v1244, %v1254
        %v1259 = vadd.f32 %v1245, %v1255
        %1260 = vmatprep.subr.mxu0 0.0
        %1261 = vmatpush1.msra.mxu0 %v1256
        %1262 = vmatprep.subr.mxu0 0.0
        %1263 = vmatpush1.msra.mxu0 %v1257
        %1264 = vmatprep.subr.mxu0 0.0
        %1265 = vmatpush1.msra.mxu0 %v1258
        %1266 = vmatprep.subr.mxu0 0.0
        %1267 = vmatpush1.msra.mxu0 %v1259
        %1268 = vmatprep.subr.mxu0 0.0
        %1269 = vmatpush1.msra.mxu0 0.0
        %1270 = vmatprep.subr.mxu0 0.0
        %1271 = vmatpush1.msra.mxu0 0.0
        %1272 = vmatprep.subr.mxu0 0.0
        %1273 = vmatpush1.msra.mxu0 0.0
        %1274 = vmatprep.subr.mxu0 0.0
        %1275 = vmatpush1.msra.mxu0 0.0
        %1276 = vmatprep.subr.mxu0 0.0
        %1277 = vmatpush1.msra.mxu0 0.0
        %1278 = vmatprep.subr.mxu0 0.0
        %1279 = vmatpush1.msra.mxu0 0.0
        %1280 = vmatprep.subr.mxu0 0.0
        %1281 = vmatpush1.msra.mxu0 0.0
        %1282 = vmatprep.subr.mxu0 0.0
        %1283 = vmatpush1.msra.mxu0 0.0
        %1284 = vmatprep.subr.mxu0 0.0
        %1285 = vmatpush1.msra.mxu0 0.0
        %1286 = vmatprep.subr.mxu0 0.0
        %1287 = vmatpush1.msra.mxu0 0.0
        %1288 = vmatprep.subr.mxu0 0.0
        %1289 = vmatpush1.msra.mxu0 0.0
        %1290 = vmatprep.subr.mxu0 0.0
        %1291 = vmatpush1.msra.mxu0 0.0
        %1292 = vmatprep.subr.mxu0 0.0
        %1293 = vmatpush1.msra.mxu0 0.0
        %1294 = vmatprep.subr.mxu0 0.0
        %1295 = vmatpush1.msra.mxu0 0.0
        %1296 = vmatprep.subr.mxu0 0.0
        %1297 = vmatpush1.msra.mxu0 0.0
        %1298 = vmatprep.subr.mxu0 0.0
        %1299 = vmatpush1.msra.mxu0 0.0
        %1300 = vmatprep.subr.mxu0 0.0
        %1301 = vmatpush1.msra.mxu0 0.0
        %1302 = vmatprep.subr.mxu0 0.0
        %1303 = vmatpush1.msra.mxu0 0.0
        %1304 = vmatprep.subr.mxu0 0.0
        %1305 = vmatpush1.msra.mxu0 0.0
        %1306 = vmatprep.subr.mxu0 0.0
        %1307 = vmatpush1.msra.mxu0 0.0
        %1308 = vmatprep.subr.mxu0 0.0
        %1309 = vmatpush1.msra.mxu0 0.0
        %1310 = vmatprep.subr.mxu0 0.0
        %1311 = vmatpush1.msra.mxu0 0.0
        %1312 = vmatprep.subr.mxu0 0.0
        %1313 = vmatpush1.msra.mxu0 0.0
        %1314 = vmatprep.subr.mxu0 0.0
        %1315 = vmatpush1.msra.mxu0 0.0
        %1316 = vmatprep.subr.mxu0 0.0
        %1317 = vmatpush1.msra.mxu0 0.0
        %1318 = vmatprep.subr.mxu0 0.0
        %1319 = vmatpush1.msra.mxu0 0.0
        %1320 = vmatprep.subr.mxu0 0.0
        %1321 = vmatpush1.msra.mxu0 0.0
        %1322 = vmatprep.subr.mxu0 0.0
        %1323 = vmatpush1.msra.mxu0 0.0
        %1324 = vmatprep.mubr.f32.mxu0 0.0
        %1325 = vmatmul.mubr.f32.gmra.mrb[0].mxu0 %v458
        %v1326 = vpop.f32.mrb[0].mxu0
        %v1327 = vadd.f32 0.0, %v1326
        %v1328 = vpop.f32.mrb[0].mxu0
        %1329 = vmatprep.mubr.f32.mxu0 0.0
        %1330 = vmatmul.mubr.f32.gmra.mrb[0].mxu0 %v461
        %v1331 = vpop.f32.mrb[0].mxu0
        %v1332 = vadd.f32 0.0, %v1331
        %v1333 = vpop.f32.mrb[0].mxu0
        %1334 = vmatprep.mubr.f32.mxu0 0.0
        %1335 = vmatmul.mubr.f32.gmra.mrb[0].mxu0 %v464
        %v1336 = vpop.f32.mrb[0].mxu0
        %v1337 = vadd.f32 0.0, %v1336
        %v1338 = vpop.f32.mrb[0].mxu0
        %1339 = vmatprep.mubr.f32.mxu0 0.0
        %1340 = vmatmul.mubr.f32.gmra.mrb[0].mxu0 %v467
        %v1341 = vpop.f32.mrb[0].mxu0
        %v1342 = vadd.f32 0.0, %v1341
        %v1343 = vpop.f32.mrb[0].mxu0
        %1344 = vdwg.mxu0
        %s1345 = scalar_lea.vmem %s336, 128 [#allocation5]
        %1346 = vst [vmem:[%s1345] sm:$0xff] %v1327
        %1347 = vst [vmem:[%s1345 + $0x8] sm:$0xff] %v1332
        %1348 = vst [vmem:[%s1345 + $0x10] sm:$0xff] %v1337
        %1349 = vst [vmem:[%s1345 + $0x18] sm:$0xff] %v1342
        %s1350 = sld [smem:[#allocation2 + $0x280]]
        %v1351 = vld [vmem:[%s316] sm:$0xff]
        %v1352 = vld [vmem:[%s316 + $0x8] sm:$0xff]
        %v1353 = vld [vmem:[%s316 + $0x10] sm:$0xff]
        %v1354 = vld [vmem:[%s316 + $0x18] sm:$0xff]
        %v1355 = vstv %s1350
        %v1356 = vmul.f32 %v1355, %v1351
        %v1357 = vmul.f32 %v1355, %v1352
        %v1358 = vmul.f32 %v1355, %v1353
        %v1359 = vmul.f32 %v1355, %v1354
        %s1360 = sld [smem:[#allocation2 + $0x281]]
        %v1361 = vld [vmem:[%s352] sm:$0xff]
        %v1362 = vld [vmem:[%s352 + $0x8] sm:$0xff]
        %v1363 = vld [vmem:[%s352 + $0x10] sm:$0xff]
        %v1364 = vld [vmem:[%s352 + $0x18] sm:$0xff]
        %v1365 = vstv %s1360
        %v1366 = vmul.f32 %v1365, %v1361
        %v1367 = vmul.f32 %v1365, %v1362
        %v1368 = vmul.f32 %v1365, %v1363
        %v1369 = vmul.f32 %v1365, %v1364
        %v1370 = vadd.f32 %v1356, %v1366
        %v1371 = vadd.f32 %v1357, %v1367
        %v1372 = vadd.f32 %v1358, %v1368
        %v1373 = vadd.f32 %v1359, %v1369
        %s1374 = sld [smem:[#allocation2 + $0x282]]
        %v1375 = vld [vmem:[%s367] sm:$0xff]
        %v1376 = vld [vmem:[%s367 + $0x8] sm:$0xff]
        %v1377 = vld [vmem:[%s367 + $0x10] sm:$0xff]
        %v1378 = vld [vmem:[%s367 + $0x18] sm:$0xff]
        %v1379 = vstv %s1374
        %v1380 = vmul.f32 %v1379, %v1375
        %v1381 = vmul.f32 %v1379, %v1376
        %v1382 = vmul.f32 %v1379, %v1377
        %v1383 = vmul.f32 %v1379, %v1378
        %v1384 = vadd.f32 %v1370, %v1380
        %v1385 = vadd.f32 %v1371, %v1381
        %v1386 = vadd.f32 %v1372, %v1382
        %v1387 = vadd.f32 %v1373, %v1383
        %s1388 = sld [smem:[#allocation2 + $0x283]]
        %v1389 = vld [vmem:[%s382] sm:$0xff]
        %v1390 = vld [vmem:[%s382 + $0x8] sm:$0xff]
        %v1391 = vld [vmem:[%s382 + $0x10] sm:$0xff]
        %v1392 = vld [vmem:[%s382 + $0x18] sm:$0xff]
        %v1393 = vstv %s1388
        %v1394 = vmul.f32 %v1393, %v1389
        %v1395 = vmul.f32 %v1393, %v1390
        %v1396 = vmul.f32 %v1393, %v1391
        %v1397 = vmul.f32 %v1393, %v1392
        %v1398 = vadd.f32 %v1384, %v1394
        %v1399 = vadd.f32 %v1385, %v1395
        %v1400 = vadd.f32 %v1386, %v1396
        %v1401 = vadd.f32 %v1387, %v1397
        %s1402 = sld [smem:[#allocation2 + $0x284]]
        %v1403 = vld [vmem:[%s397] sm:$0xff]
        %v1404 = vld [vmem:[%s397 + $0x8] sm:$0xff]
        %v1405 = vld [vmem:[%s397 + $0x10] sm:$0xff]
        %v1406 = vld [vmem:[%s397 + $0x18] sm:$0xff]
        %v1407 = vstv %s1402
        %v1408 = vmul.f32 %v1407, %v1403
        %v1409 = vmul.f32 %v1407, %v1404
        %v1410 = vmul.f32 %v1407, %v1405
        %v1411 = vmul.f32 %v1407, %v1406
        %v1412 = vadd.f32 %v1398, %v1408
        %v1413 = vadd.f32 %v1399, %v1409
        %v1414 = vadd.f32 %v1400, %v1410
        %v1415 = vadd.f32 %v1401, %v1411
        %s1416 = sld [smem:[#allocation2 + $0x285]]
        %v1417 = vld [vmem:[%s412] sm:$0xff]
        %v1418 = vld [vmem:[%s412 + $0x8] sm:$0xff]
        %v1419 = vld [vmem:[%s412 + $0x10] sm:$0xff]
        %v1420 = vld [vmem:[%s412 + $0x18] sm:$0xff]
        %v1421 = vstv %s1416
        %v1422 = vmul.f32 %v1421, %v1417
        %v1423 = vmul.f32 %v1421, %v1418
        %v1424 = vmul.f32 %v1421, %v1419
        %v1425 = vmul.f32 %v1421, %v1420
        %v1426 = vadd.f32 %v1412, %v1422
        %v1427 = vadd.f32 %v1413, %v1423
        %v1428 = vadd.f32 %v1414, %v1424
        %v1429 = vadd.f32 %v1415, %v1425
        %s1430 = sld [smem:[#allocation2 + $0x286]]
        %v1431 = vld [vmem:[%s427] sm:$0xff]
        %v1432 = vld [vmem:[%s427 + $0x8] sm:$0xff]
        %v1433 = vld [vmem:[%s427 + $0x10] sm:$0xff]
        %v1434 = vld [vmem:[%s427 + $0x18] sm:$0xff]
        %v1435 = vstv %s1430
        %v1436 = vmul.f32 %v1435, %v1431
        %v1437 = vmul.f32 %v1435, %v1432
        %v1438 = vmul.f32 %v1435, %v1433
        %v1439 = vmul.f32 %v1435, %v1434
        %v1440 = vadd.f32 %v1426, %v1436
        %v1441 = vadd.f32 %v1427, %v1437
        %v1442 = vadd.f32 %v1428, %v1438
        %v1443 = vadd.f32 %v1429, %v1439
        %s1444 = sld [smem:[#allocation2 + $0x287]]
        %v1445 = vld [vmem:[%s442] sm:$0xff]
        %v1446 = vld [vmem:[%s442 + $0x8] sm:$0xff]
        %v1447 = vld [vmem:[%s442 + $0x10] sm:$0xff]
        %v1448 = vld [vmem:[%s442 + $0x18] sm:$0xff]
        %v1449 = vstv %s1444
        %v1450 = vmul.f32 %v1449, %v1445
        %v1451 = vmul.f32 %v1449, %v1446
        %v1452 = vmul.f32 %v1449, %v1447
        %v1453 = vmul.f32 %v1449, %v1448
        %v1454 = vadd.f32 %v1440, %v1450
        %v1455 = vadd.f32 %v1441, %v1451
        %v1456 = vadd.f32 %v1442, %v1452
        %v1457 = vadd.f32 %v1443, %v1453
        %1458 = vmatprep.subr.mxu0 0.0
        %1459 = vmatpush1.msra.mxu0 %v1454
        %1460 = vmatprep.subr.mxu0 0.0
        %1461 = vmatpush1.msra.mxu0 %v1455
        %1462 = vmatprep.subr.mxu0 0.0
        %1463 = vmatpush1.msra.mxu0 %v1456
        %1464 = vmatprep.subr.mxu0 0.0
        %1465 = vmatpush1.msra.mxu0 %v1457
        %1466 = vmatprep.subr.mxu0 0.0
        %1467 = vmatpush1.msra.mxu0 0.0
        %1468 = vmatprep.subr.mxu0 0.0
        %1469 = vmatpush1.msra.mxu0 0.0
        %1470 = vmatprep.subr.mxu0 0.0
        %1471 = vmatpush1.msra.mxu0 0.0
        %1472 = vmatprep.subr.mxu0 0.0
        %1473 = vmatpush1.msra.mxu0 0.0
        %1474 = vmatprep.subr.mxu0 0.0
        %1475 = vmatpush1.msra.mxu0 0.0
        %1476 = vmatprep.subr.mxu0 0.0
        %1477 = vmatpush1.msra.mxu0 0.0
        %1478 = vmatprep.subr.mxu0 0.0
        %1479 = vmatpush1.msra.mxu0 0.0
        %1480 = vmatprep.subr.mxu0 0.0
        %1481 = vmatpush1.msra.mxu0 0.0
        %1482 = vmatprep.subr.mxu0 0.0
        %1483 = vmatpush1.msra.mxu0 0.0
        %1484 = vmatprep.subr.mxu0 0.0
        %1485 = vmatpush1.msra.mxu0 0.0
        %1486 = vmatprep.subr.mxu0 0.0
        %1487 = vmatpush1.msra.mxu0 0.0
        %1488 = vmatprep.subr.mxu0 0.0
        %1489 = vmatpush1.msra.mxu0 0.0
        %1490 = vmatprep.subr.mxu0 0.0
        %1491 = vmatpush1.msra.mxu0 0.0
        %1492 = vmatprep.subr.mxu0 0.0
        %1493 = vmatpush1.msra.mxu0 0.0
        %1494 = vmatprep.subr.mxu0 0.0
        %1495 = vmatpush1.msra.mxu0 0.0
        %1496 = vmatprep.subr.mxu0 0.0
        %1497 = vmatpush1.msra.mxu0 0.0
        %1498 = vmatprep.subr.mxu0 0.0
        %1499 = vmatpush1.msra.mxu0 0.0
        %1500 = vmatprep.subr.mxu0 0.0
        %1501 = vmatpush1.msra.mxu0 0.0
        %1502 = vmatprep.subr.mxu0 0.0
        %1503 = vmatpush1.msra.mxu0 0.0
        %1504 = vmatprep.subr.mxu0 0.0
        %1505 = vmatpush1.msra.mxu0 0.0
        %1506 = vmatprep.subr.mxu0 0.0
        %1507 = vmatpush1.msra.mxu0 0.0
        %1508 = vmatprep.subr.mxu0 0.0
        %1509 = vmatpush1.msra.mxu0 0.0
        %1510 = vmatprep.subr.mxu0 0.0
        %1511 = vmatpush1.msra.mxu0 0.0
        %1512 = vmatprep.subr.mxu0 0.0
        %1513 = vmatpush1.msra.mxu0 0.0
        %1514 = vmatprep.subr.mxu0 0.0
        %1515 = vmatpush1.msra.mxu0 0.0
        %1516 = vmatprep.subr.mxu0 0.0
        %1517 = vmatpush1.msra.mxu0 0.0
        %1518 = vmatprep.subr.mxu0 0.0
        %1519 = vmatpush1.msra.mxu0 0.0
        %1520 = vmatprep.subr.mxu0 0.0
        %1521 = vmatpush1.msra.mxu0 0.0
        %1522 = vmatprep.mubr.f32.mxu0 0.0
        %1523 = vmatmul.mubr.f32.gmra.mrb[0].mxu0 %v458
        %v1524 = vpop.f32.mrb[0].mxu0
        %v1525 = vadd.f32 0.0, %v1524
        %v1526 = vpop.f32.mrb[0].mxu0
        %1527 = vmatprep.mubr.f32.mxu0 0.0
        %1528 = vmatmul.mubr.f32.gmra.mrb[0].mxu0 %v461
        %v1529 = vpop.f32.mrb[0].mxu0
        %v1530 = vadd.f32 0.0, %v1529
        %v1531 = vpop.f32.mrb[0].mxu0
        %1532 = vmatprep.mubr.f32.mxu0 0.0
        %1533 = vmatmul.mubr.f32.gmra.mrb[0].mxu0 %v464
        %v1534 = vpop.f32.mrb[0].mxu0
        %v1535 = vadd.f32 0.0, %v1534
        %v1536 = vpop.f32.mrb[0].mxu0
        %1537 = vmatprep.mubr.f32.mxu0 0.0
        %1538 = vmatmul.mubr.f32.gmra.mrb[0].mxu0 %v467
        %v1539 = vpop.f32.mrb[0].mxu0
        %v1540 = vadd.f32 0.0, %v1539
        %v1541 = vpop.f32.mrb[0].mxu0
        %1542 = vdwg.mxu0
        %s1543 = scalar_lea.vmem %s336, 160 [#allocation5]
        %1544 = vst [vmem:[%s1543] sm:$0xff] %v1525
        %1545 = vst [vmem:[%s1543 + $0x8] sm:$0xff] %v1530
        %1546 = vst [vmem:[%s1543 + $0x10] sm:$0xff] %v1535
        %1547 = vst [vmem:[%s1543 + $0x18] sm:$0xff] %v1540
        %s1548 = sld [smem:[#allocation2 + $0x300]]
        %v1549 = vld [vmem:[%s316] sm:$0xff]
        %v1550 = vld [vmem:[%s316 + $0x8] sm:$0xff]
        %v1551 = vld [vmem:[%s316 + $0x10] sm:$0xff]
        %v1552 = vld [vmem:[%s316 + $0x18] sm:$0xff]
        %v1553 = vstv %s1548
        %v1554 = vmul.f32 %v1553, %v1549
        %v1555 = vmul.f32 %v1553, %v1550
        %v1556 = vmul.f32 %v1553, %v1551
        %v1557 = vmul.f32 %v1553, %v1552
        %s1558 = sld [smem:[#allocation2 + $0x301]]
        %v1559 = vld [vmem:[%s352] sm:$0xff]
        %v1560 = vld [vmem:[%s352 + $0x8] sm:$0xff]
        %v1561 = vld [vmem:[%s352 + $0x10] sm:$0xff]
        %v1562 = vld [vmem:[%s352 + $0x18] sm:$0xff]
        %v1563 = vstv %s1558
        %v1564 = vmul.f32 %v1563, %v1559
        %v1565 = vmul.f32 %v1563, %v1560
        %v1566 = vmul.f32 %v1563, %v1561
        %v1567 = vmul.f32 %v1563, %v1562
        %v1568 = vadd.f32 %v1554, %v1564
        %v1569 = vadd.f32 %v1555, %v1565
        %v1570 = vadd.f32 %v1556, %v1566
        %v1571 = vadd.f32 %v1557, %v1567
        %s1572 = sld [smem:[#allocation2 + $0x302]]
        %v1573 = vld [vmem:[%s367] sm:$0xff]
        %v1574 = vld [vmem:[%s367 + $0x8] sm:$0xff]
        %v1575 = vld [vmem:[%s367 + $0x10] sm:$0xff]
        %v1576 = vld [vmem:[%s367 + $0x18] sm:$0xff]
        %v1577 = vstv %s1572
        %v1578 = vmul.f32 %v1577, %v1573
        %v1579 = vmul.f32 %v1577, %v1574
        %v1580 = vmul.f32 %v1577, %v1575
        %v1581 = vmul.f32 %v1577, %v1576
        %v1582 = vadd.f32 %v1568, %v1578
        %v1583 = vadd.f32 %v1569, %v1579
        %v1584 = vadd.f32 %v1570, %v1580
        %v1585 = vadd.f32 %v1571, %v1581
        %s1586 = sld [smem:[#allocation2 + $0x303]]
        %v1587 = vld [vmem:[%s382] sm:$0xff]
        %v1588 = vld [vmem:[%s382 + $0x8] sm:$0xff]
        %v1589 = vld [vmem:[%s382 + $0x10] sm:$0xff]
        %v1590 = vld [vmem:[%s382 + $0x18] sm:$0xff]
        %v1591 = vstv %s1586
        %v1592 = vmul.f32 %v1591, %v1587
        %v1593 = vmul.f32 %v1591, %v1588
        %v1594 = vmul.f32 %v1591, %v1589
        %v1595 = vmul.f32 %v1591, %v1590
        %v1596 = vadd.f32 %v1582, %v1592
        %v1597 = vadd.f32 %v1583, %v1593
        %v1598 = vadd.f32 %v1584, %v1594
        %v1599 = vadd.f32 %v1585, %v1595
        %s1600 = sld [smem:[#allocation2 + $0x304]]
        %v1601 = vld [vmem:[%s397] sm:$0xff]
        %v1602 = vld [vmem:[%s397 + $0x8] sm:$0xff]
        %v1603 = vld [vmem:[%s397 + $0x10] sm:$0xff]
        %v1604 = vld [vmem:[%s397 + $0x18] sm:$0xff]
        %v1605 = vstv %s1600
        %v1606 = vmul.f32 %v1605, %v1601
        %v1607 = vmul.f32 %v1605, %v1602
        %v1608 = vmul.f32 %v1605, %v1603
        %v1609 = vmul.f32 %v1605, %v1604
        %v1610 = vadd.f32 %v1596, %v1606
        %v1611 = vadd.f32 %v1597, %v1607
        %v1612 = vadd.f32 %v1598, %v1608
        %v1613 = vadd.f32 %v1599, %v1609
        %s1614 = sld [smem:[#allocation2 + $0x305]]
        %v1615 = vld [vmem:[%s412] sm:$0xff]
        %v1616 = vld [vmem:[%s412 + $0x8] sm:$0xff]
        %v1617 = vld [vmem:[%s412 + $0x10] sm:$0xff]
        %v1618 = vld [vmem:[%s412 + $0x18] sm:$0xff]
        %v1619 = vstv %s1614
        %v1620 = vmul.f32 %v1619, %v1615
        %v1621 = vmul.f32 %v1619, %v1616
        %v1622 = vmul.f32 %v1619, %v1617
        %v1623 = vmul.f32 %v1619, %v1618
        %v1624 = vadd.f32 %v1610, %v1620
        %v1625 = vadd.f32 %v1611, %v1621
        %v1626 = vadd.f32 %v1612, %v1622
        %v1627 = vadd.f32 %v1613, %v1623
        %s1628 = sld [smem:[#allocation2 + $0x306]]
        %v1629 = vld [vmem:[%s427] sm:$0xff]
        %v1630 = vld [vmem:[%s427 + $0x8] sm:$0xff]
        %v1631 = vld [vmem:[%s427 + $0x10] sm:$0xff]
        %v1632 = vld [vmem:[%s427 + $0x18] sm:$0xff]
        %v1633 = vstv %s1628
        %v1634 = vmul.f32 %v1633, %v1629
        %v1635 = vmul.f32 %v1633, %v1630
        %v1636 = vmul.f32 %v1633, %v1631
        %v1637 = vmul.f32 %v1633, %v1632
        %v1638 = vadd.f32 %v1624, %v1634
        %v1639 = vadd.f32 %v1625, %v1635
        %v1640 = vadd.f32 %v1626, %v1636
        %v1641 = vadd.f32 %v1627, %v1637
        %s1642 = sld [smem:[#allocation2 + $0x307]]
        %v1643 = vld [vmem:[%s442] sm:$0xff]
        %v1644 = vld [vmem:[%s442 + $0x8] sm:$0xff]
        %v1645 = vld [vmem:[%s442 + $0x10] sm:$0xff]
        %v1646 = vld [vmem:[%s442 + $0x18] sm:$0xff]
        %v1647 = vstv %s1642
        %v1648 = vmul.f32 %v1647, %v1643
        %v1649 = vmul.f32 %v1647, %v1644
        %v1650 = vmul.f32 %v1647, %v1645
        %v1651 = vmul.f32 %v1647, %v1646
        %v1652 = vadd.f32 %v1638, %v1648
        %v1653 = vadd.f32 %v1639, %v1649
        %v1654 = vadd.f32 %v1640, %v1650
        %v1655 = vadd.f32 %v1641, %v1651
        %1656 = vmatprep.subr.mxu0 0.0
        %1657 = vmatpush1.msra.mxu0 %v1652
        %1658 = vmatprep.subr.mxu0 0.0
        %1659 = vmatpush1.msra.mxu0 %v1653
        %1660 = vmatprep.subr.mxu0 0.0
        %1661 = vmatpush1.msra.mxu0 %v1654
        %1662 = vmatprep.subr.mxu0 0.0
        %1663 = vmatpush1.msra.mxu0 %v1655
        %1664 = vmatprep.subr.mxu0 0.0
        %1665 = vmatpush1.msra.mxu0 0.0
        %1666 = vmatprep.subr.mxu0 0.0
        %1667 = vmatpush1.msra.mxu0 0.0
        %1668 = vmatprep.subr.mxu0 0.0
        %1669 = vmatpush1.msra.mxu0 0.0
        %1670 = vmatprep.subr.mxu0 0.0
        %1671 = vmatpush1.msra.mxu0 0.0
        %1672 = vmatprep.subr.mxu0 0.0
        %1673 = vmatpush1.msra.mxu0 0.0
        %1674 = vmatprep.subr.mxu0 0.0
        %1675 = vmatpush1.msra.mxu0 0.0
        %1676 = vmatprep.subr.mxu0 0.0
        %1677 = vmatpush1.msra.mxu0 0.0
        %1678 = vmatprep.subr.mxu0 0.0
        %1679 = vmatpush1.msra.mxu0 0.0
        %1680 = vmatprep.subr.mxu0 0.0
        %1681 = vmatpush1.msra.mxu0 0.0
        %1682 = vmatprep.subr.mxu0 0.0
        %1683 = vmatpush1.msra.mxu0 0.0
        %1684 = vmatprep.subr.mxu0 0.0
        %1685 = vmatpush1.msra.mxu0 0.0
        %1686 = vmatprep.subr.mxu0 0.0
        %1687 = vmatpush1.msra.mxu0 0.0
        %1688 = vmatprep.subr.mxu0 0.0
        %1689 = vmatpush1.msra.mxu0 0.0
        %1690 = vmatprep.subr.mxu0 0.0
        %1691 = vmatpush1.msra.mxu0 0.0
        %1692 = vmatprep.subr.mxu0 0.0
        %1693 = vmatpush1.msra.mxu0 0.0
        %1694 = vmatprep.subr.mxu0 0.0
        %1695 = vmatpush1.msra.mxu0 0.0
        %1696 = vmatprep.subr.mxu0 0.0
        %1697 = vmatpush1.msra.mxu0 0.0
        %1698 = vmatprep.subr.mxu0 0.0
        %1699 = vmatpush1.msra.mxu0 0.0
        %1700 = vmatprep.subr.mxu0 0.0
        %1701 = vmatpush1.msra.mxu0 0.0
        %1702 = vmatprep.subr.mxu0 0.0
        %1703 = vmatpush1.msra.mxu0 0.0
        %1704 = vmatprep.subr.mxu0 0.0
        %1705 = vmatpush1.msra.mxu0 0.0
        %1706 = vmatprep.subr.mxu0 0.0
        %1707 = vmatpush1.msra.mxu0 0.0
        %1708 = vmatprep.subr.mxu0 0.0
        %1709 = vmatpush1.msra.mxu0 0.0
        %1710 = vmatprep.subr.mxu0 0.0
        %1711 = vmatpush1.msra.mxu0 0.0
        %1712 = vmatprep.subr.mxu0 0.0
        %1713 = vmatpush1.msra.mxu0 0.0
        %1714 = vmatprep.subr.mxu0 0.0
        %1715 = vmatpush1.msra.mxu0 0.0
        %1716 = vmatprep.subr.mxu0 0.0
        %1717 = vmatpush1.msra.mxu0 0.0
        %1718 = vmatprep.subr.mxu0 0.0
        %1719 = vmatpush1.msra.mxu0 0.0
        %1720 = vmatprep.mubr.f32.mxu0 0.0
        %1721 = vmatmul.mubr.f32.gmra.mrb[0].mxu0 %v458
        %v1722 = vpop.f32.mrb[0].mxu0
        %v1723 = vadd.f32 0.0, %v1722
        %v1724 = vpop.f32.mrb[0].mxu0
        %1725 = vmatprep.mubr.f32.mxu0 0.0
        %1726 = vmatmul.mubr.f32.gmra.mrb[0].mxu0 %v461
        %v1727 = vpop.f32.mrb[0].mxu0
        %v1728 = vadd.f32 0.0, %v1727
        %v1729 = vpop.f32.mrb[0].mxu0
        %1730 = vmatprep.mubr.f32.mxu0 0.0
        %1731 = vmatmul.mubr.f32.gmra.mrb[0].mxu0 %v464
        %v1732 = vpop.f32.mrb[0].mxu0
        %v1733 = vadd.f32 0.0, %v1732
        %v1734 = vpop.f32.mrb[0].mxu0
        %1735 = vmatprep.mubr.f32.mxu0 0.0
        %1736 = vmatmul.mubr.f32.gmra.mrb[0].mxu0 %v467
        %v1737 = vpop.f32.mrb[0].mxu0
        %v1738 = vadd.f32 0.0, %v1737
        %v1739 = vpop.f32.mrb[0].mxu0
        %1740 = vdwg.mxu0
        %s1741 = scalar_lea.vmem %s336, 192 [#allocation5]
        %1742 = vst [vmem:[%s1741] sm:$0xff] %v1723
        %1743 = vst [vmem:[%s1741 + $0x8] sm:$0xff] %v1728
        %1744 = vst [vmem:[%s1741 + $0x10] sm:$0xff] %v1733
        %1745 = vst [vmem:[%s1741 + $0x18] sm:$0xff] %v1738
        %s1746 = sld [smem:[#allocation2 + $0x380]]
        %v1747 = vld [vmem:[%s316] sm:$0xff]
        %v1748 = vld [vmem:[%s316 + $0x8] sm:$0xff]
        %v1749 = vld [vmem:[%s316 + $0x10] sm:$0xff]
        %v1750 = vld [vmem:[%s316 + $0x18] sm:$0xff]
        %v1751 = vstv %s1746
        %v1752 = vmul.f32 %v1751, %v1747
        %v1753 = vmul.f32 %v1751, %v1748
        %v1754 = vmul.f32 %v1751, %v1749
        %v1755 = vmul.f32 %v1751, %v1750
        %s1756 = sld [smem:[#allocation2 + $0x381]]
        %v1757 = vld [vmem:[%s352] sm:$0xff]
        %v1758 = vld [vmem:[%s352 + $0x8] sm:$0xff]
        %v1759 = vld [vmem:[%s352 + $0x10] sm:$0xff]
        %v1760 = vld [vmem:[%s352 + $0x18] sm:$0xff]
        %v1761 = vstv %s1756
        %v1762 = vmul.f32 %v1761, %v1757
        %v1763 = vmul.f32 %v1761, %v1758
        %v1764 = vmul.f32 %v1761, %v1759
        %v1765 = vmul.f32 %v1761, %v1760
        %v1766 = vadd.f32 %v1752, %v1762
        %v1767 = vadd.f32 %v1753, %v1763
        %v1768 = vadd.f32 %v1754, %v1764
        %v1769 = vadd.f32 %v1755, %v1765
        %s1770 = sld [smem:[#allocation2 + $0x382]]
        %v1771 = vld [vmem:[%s367] sm:$0xff]
        %v1772 = vld [vmem:[%s367 + $0x8] sm:$0xff]
        %v1773 = vld [vmem:[%s367 + $0x10] sm:$0xff]
        %v1774 = vld [vmem:[%s367 + $0x18] sm:$0xff]
        %v1775 = vstv %s1770
        %v1776 = vmul.f32 %v1775, %v1771
        %v1777 = vmul.f32 %v1775, %v1772
        %v1778 = vmul.f32 %v1775, %v1773
        %v1779 = vmul.f32 %v1775, %v1774
        %v1780 = vadd.f32 %v1766, %v1776
        %v1781 = vadd.f32 %v1767, %v1777
        %v1782 = vadd.f32 %v1768, %v1778
        %v1783 = vadd.f32 %v1769, %v1779
        %s1784 = sld [smem:[#allocation2 + $0x383]]
        %v1785 = vld [vmem:[%s382] sm:$0xff]
        %v1786 = vld [vmem:[%s382 + $0x8] sm:$0xff]
        %v1787 = vld [vmem:[%s382 + $0x10] sm:$0xff]
        %v1788 = vld [vmem:[%s382 + $0x18] sm:$0xff]
        %v1789 = vstv %s1784
        %v1790 = vmul.f32 %v1789, %v1785
        %v1791 = vmul.f32 %v1789, %v1786
        %v1792 = vmul.f32 %v1789, %v1787
        %v1793 = vmul.f32 %v1789, %v1788
        %v1794 = vadd.f32 %v1780, %v1790
        %v1795 = vadd.f32 %v1781, %v1791
        %v1796 = vadd.f32 %v1782, %v1792
        %v1797 = vadd.f32 %v1783, %v1793
        %s1798 = sld [smem:[#allocation2 + $0x384]]
        %v1799 = vld [vmem:[%s397] sm:$0xff]
        %v1800 = vld [vmem:[%s397 + $0x8] sm:$0xff]
        %v1801 = vld [vmem:[%s397 + $0x10] sm:$0xff]
        %v1802 = vld [vmem:[%s397 + $0x18] sm:$0xff]
        %v1803 = vstv %s1798
        %v1804 = vmul.f32 %v1803, %v1799
        %v1805 = vmul.f32 %v1803, %v1800
        %v1806 = vmul.f32 %v1803, %v1801
        %v1807 = vmul.f32 %v1803, %v1802
        %v1808 = vadd.f32 %v1794, %v1804
        %v1809 = vadd.f32 %v1795, %v1805
        %v1810 = vadd.f32 %v1796, %v1806
        %v1811 = vadd.f32 %v1797, %v1807
        %s1812 = sld [smem:[#allocation2 + $0x385]]
        %v1813 = vld [vmem:[%s412] sm:$0xff]
        %v1814 = vld [vmem:[%s412 + $0x8] sm:$0xff]
        %v1815 = vld [vmem:[%s412 + $0x10] sm:$0xff]
        %v1816 = vld [vmem:[%s412 + $0x18] sm:$0xff]
        %v1817 = vstv %s1812
        %v1818 = vmul.f32 %v1817, %v1813
        %v1819 = vmul.f32 %v1817, %v1814
        %v1820 = vmul.f32 %v1817, %v1815
        %v1821 = vmul.f32 %v1817, %v1816
        %v1822 = vadd.f32 %v1808, %v1818
        %v1823 = vadd.f32 %v1809, %v1819
        %v1824 = vadd.f32 %v1810, %v1820
        %v1825 = vadd.f32 %v1811, %v1821
        %s1826 = sld [smem:[#allocation2 + $0x386]]
        %v1827 = vld [vmem:[%s427] sm:$0xff]
        %v1828 = vld [vmem:[%s427 + $0x8] sm:$0xff]
        %v1829 = vld [vmem:[%s427 + $0x10] sm:$0xff]
        %v1830 = vld [vmem:[%s427 + $0x18] sm:$0xff]
        %v1831 = vstv %s1826
        %v1832 = vmul.f32 %v1831, %v1827
        %v1833 = vmul.f32 %v1831, %v1828
        %v1834 = vmul.f32 %v1831, %v1829
        %v1835 = vmul.f32 %v1831, %v1830
        %v1836 = vadd.f32 %v1822, %v1832
        %v1837 = vadd.f32 %v1823, %v1833
        %v1838 = vadd.f32 %v1824, %v1834
        %v1839 = vadd.f32 %v1825, %v1835
        %s1840 = sld [smem:[#allocation2 + $0x387]]
        %v1841 = vld [vmem:[%s442] sm:$0xff]
        %v1842 = vld [vmem:[%s442 + $0x8] sm:$0xff]
        %v1843 = vld [vmem:[%s442 + $0x10] sm:$0xff]
        %v1844 = vld [vmem:[%s442 + $0x18] sm:$0xff]
        %v1845 = vstv %s1840
        %v1846 = vmul.f32 %v1845, %v1841
        %v1847 = vmul.f32 %v1845, %v1842
        %v1848 = vmul.f32 %v1845, %v1843
        %v1849 = vmul.f32 %v1845, %v1844
        %v1850 = vadd.f32 %v1836, %v1846
        %v1851 = vadd.f32 %v1837, %v1847
        %v1852 = vadd.f32 %v1838, %v1848
        %v1853 = vadd.f32 %v1839, %v1849
        %1854 = vmatprep.subr.mxu0 0.0
        %1855 = vmatpush1.msra.mxu0 %v1850
        %1856 = vmatprep.subr.mxu0 0.0
        %1857 = vmatpush1.msra.mxu0 %v1851
        %1858 = vmatprep.subr.mxu0 0.0
        %1859 = vmatpush1.msra.mxu0 %v1852
        %1860 = vmatprep.subr.mxu0 0.0
        %1861 = vmatpush1.msra.mxu0 %v1853
        %1862 = vmatprep.subr.mxu0 0.0
        %1863 = vmatpush1.msra.mxu0 0.0
        %1864 = vmatprep.subr.mxu0 0.0
        %1865 = vmatpush1.msra.mxu0 0.0
        %1866 = vmatprep.subr.mxu0 0.0
        %1867 = vmatpush1.msra.mxu0 0.0
        %1868 = vmatprep.subr.mxu0 0.0
        %1869 = vmatpush1.msra.mxu0 0.0
        %1870 = vmatprep.subr.mxu0 0.0
        %1871 = vmatpush1.msra.mxu0 0.0
        %1872 = vmatprep.subr.mxu0 0.0
        %1873 = vmatpush1.msra.mxu0 0.0
        %1874 = vmatprep.subr.mxu0 0.0
        %1875 = vmatpush1.msra.mxu0 0.0
        %1876 = vmatprep.subr.mxu0 0.0
        %1877 = vmatpush1.msra.mxu0 0.0
        %1878 = vmatprep.subr.mxu0 0.0
        %1879 = vmatpush1.msra.mxu0 0.0
        %1880 = vmatprep.subr.mxu0 0.0
        %1881 = vmatpush1.msra.mxu0 0.0
        %1882 = vmatprep.subr.mxu0 0.0
        %1883 = vmatpush1.msra.mxu0 0.0
        %1884 = vmatprep.subr.mxu0 0.0
        %1885 = vmatpush1.msra.mxu0 0.0
        %1886 = vmatprep.subr.mxu0 0.0
        %1887 = vmatpush1.msra.mxu0 0.0
        %1888 = vmatprep.subr.mxu0 0.0
        %1889 = vmatpush1.msra.mxu0 0.0
        %1890 = vmatprep.subr.mxu0 0.0
        %1891 = vmatpush1.msra.mxu0 0.0
        %1892 = vmatprep.subr.mxu0 0.0
        %1893 = vmatpush1.msra.mxu0 0.0
        %1894 = vmatprep.subr.mxu0 0.0
        %1895 = vmatpush1.msra.mxu0 0.0
        %1896 = vmatprep.subr.mxu0 0.0
        %1897 = vmatpush1.msra.mxu0 0.0
        %1898 = vmatprep.subr.mxu0 0.0
        %1899 = vmatpush1.msra.mxu0 0.0
        %1900 = vmatprep.subr.mxu0 0.0
        %1901 = vmatpush1.msra.mxu0 0.0
        %1902 = vmatprep.subr.mxu0 0.0
        %1903 = vmatpush1.msra.mxu0 0.0
        %1904 = vmatprep.subr.mxu0 0.0
        %1905 = vmatpush1.msra.mxu0 0.0
        %1906 = vmatprep.subr.mxu0 0.0
        %1907 = vmatpush1.msra.mxu0 0.0
        %1908 = vmatprep.subr.mxu0 0.0
        %1909 = vmatpush1.msra.mxu0 0.0
        %1910 = vmatprep.subr.mxu0 0.0
        %1911 = vmatpush1.msra.mxu0 0.0
        %1912 = vmatprep.subr.mxu0 0.0
        %1913 = vmatpush1.msra.mxu0 0.0
        %1914 = vmatprep.subr.mxu0 0.0
        %1915 = vmatpush1.msra.mxu0 0.0
        %1916 = vmatprep.subr.mxu0 0.0
        %1917 = vmatpush1.msra.mxu0 0.0
        %1918 = vmatprep.mubr.f32.mxu0 0.0
        %1919 = vmatmul.mubr.f32.gmra.mrb[0].mxu0 %v458
        %v1920 = vpop.f32.mrb[0].mxu0
        %v1921 = vadd.f32 0.0, %v1920
        %v1922 = vpop.f32.mrb[0].mxu0
        %1923 = vmatprep.mubr.f32.mxu0 0.0
        %1924 = vmatmul.mubr.f32.gmra.mrb[0].mxu0 %v461
        %v1925 = vpop.f32.mrb[0].mxu0
        %v1926 = vadd.f32 0.0, %v1925
        %v1927 = vpop.f32.mrb[0].mxu0
        %1928 = vmatprep.mubr.f32.mxu0 0.0
        %1929 = vmatmul.mubr.f32.gmra.mrb[0].mxu0 %v464
        %v1930 = vpop.f32.mrb[0].mxu0
        %v1931 = vadd.f32 0.0, %v1930
        %v1932 = vpop.f32.mrb[0].mxu0
        %1933 = vmatprep.mubr.f32.mxu0 0.0
        %1934 = vmatmul.mubr.f32.gmra.mrb[0].mxu0 %v467
        %v1935 = vpop.f32.mrb[0].mxu0
        %v1936 = vadd.f32 0.0, %v1935
        %v1937 = vpop.f32.mrb[0].mxu0
        %1938 = vdwg.mxu0
        %s1939 = scalar_lea.vmem %s336, 224 [#allocation5]
        %1940 = vst [vmem:[%s1939] sm:$0xff] %v1921
        %1941 = vst [vmem:[%s1939 + $0x8] sm:$0xff] %v1926
        %1942 = vst [vmem:[%s1939 + $0x10] sm:$0xff] %v1931
        %1943 = vst [vmem:[%s1939 + $0x18] sm:$0xff] %v1936
        %s1944 = sand.u32 %s91, 1
        %s1945 = sand.u32 %s91, 1
        %s1946 = smul.addr %s1945, 256
        %s1947 = scalar_lea.vmem [#allocation5], %s1946
        // Predicated region
        $region75: #{cross_slice_attention.3} parent=65 // pred_check
          %p1948 = pneg %p101
        $region76: #{cross_slice_attention.3} parent=65 // pred_check_branch
          %1950 = sbr.rel (%p1948) target = $region78
        $region77: #{cross_slice_attention.3} parent=65 // pred_region
          %s1951 = smul.addr %s15, 8
          %s1952 = scalar_lea.vmem %s3, %s1951
          // Predicated region
          $region79: #{cross_slice_attention.3} parent=77 // pred_check
            _
          $region80: #{cross_slice_attention.3} parent=77 // pred_check_branch
            %1954 = sbr.rel (0) target = $region82
          $region81: #{cross_slice_attention.3} parent=77 // pred_region
            // Predicated region
            $region83: #{cross_slice_attention.3} parent=81 // pred_check
              _
            $region84: #{cross_slice_attention.3} parent=81 // pred_check_branch
              %1956 = sbr.rel (0) target = $region86
            $region85: #{cross_slice_attention.3} parent=81 // pred_region
              // Predicated region
              $region98: #{cross_slice_attention.3} parent=85 // pred_check
                _
              $region99: #{cross_slice_attention.3} parent=85 // pred_check_branch
                %2033 = sbr.rel (0) target = $region101
              $region100: #{cross_slice_attention.3} parent=85 // pred_region
                loop: start=0, step=1, limit=1
                $region102: #{cross_slice_attention.3} parent=100 // loop_pre_header
                  _
                $region103: #{cross_slice_attention.3} parent=100 // loop_header
                  %s2035 = sphi 0, %s2039
                  %p2036 = scmp.ge.s32.totalorder %s2035, 1
                  %s2040 = sphi %s1947, %s1947
                  %s2041 = sphi %s1952, %s1952
                $region104: #{cross_slice_attention.3} parent=100 // loop_header_branch
                  %2038 = sbr.rel (%p2036) target = $region108
                $region105: #{cross_slice_attention.3} parent=100 // loop_body
                  %v2042 = vld [vmem:[%s2040] sm:$0xff]
                  %2043 = vst [vmem:[%s2041] sm:$0xff] %v2042
                  %v2044 = vld [vmem:[%s2040 + $0x8] sm:$0xff]
                  %2045 = vst [vmem:[%s2041 + $0x10] sm:$0xff] %v2044
                  %v2046 = vld [vmem:[%s2040 + $0x10] sm:$0xff]
                  %2047 = vst [vmem:[%s2041 + $0x20] sm:$0xff] %v2046
                  %v2048 = vld [vmem:[%s2040 + $0x18] sm:$0xff]
                  %2049 = vst [vmem:[%s2041 + $0x30] sm:$0xff] %v2048
                  %v2050 = vld [vmem:[%s2040 + $0x20] sm:$0xff]
                  %2051 = vst [vmem:[%s2041 + $0x40] sm:$0xff] %v2050
                  %v2052 = vld [vmem:[%s2040 + $0x28] sm:$0xff]
                  %2053 = vst [vmem:[%s2041 + $0x50] sm:$0xff] %v2052
                  %v2054 = vld [vmem:[%s2040 + $0x30] sm:$0xff]
                  %2055 = vst [vmem:[%s2041 + $0x60] sm:$0xff] %v2054
                  %v2056 = vld [vmem:[%s2040 + $0x38] sm:$0xff]
                  %2057 = vst [vmem:[%s2041 + $0x70] sm:$0xff] %v2056
                  %v2058 = vld [vmem:[%s2040 + $0x40] sm:$0xff]
                  %2059 = vst [vmem:[%s2041 + $0x80] sm:$0xff] %v2058
                  %v2060 = vld [vmem:[%s2040 + $0x48] sm:$0xff]
                  %2061 = vst [vmem:[%s2041 + $0x90] sm:$0xff] %v2060
                  %v2062 = vld [vmem:[%s2040 + $0x50] sm:$0xff]
                  %2063 = vst [vmem:[%s2041 + $0xa0] sm:$0xff] %v2062
                  %v2064 = vld [vmem:[%s2040 + $0x58] sm:$0xff]
                  %2065 = vst [vmem:[%s2041 + $0xb0] sm:$0xff] %v2064
                  %v2066 = vld [vmem:[%s2040 + $0x60] sm:$0xff]
                  %2067 = vst [vmem:[%s2041 + $0xc0] sm:$0xff] %v2066
                  %v2068 = vld [vmem:[%s2040 + $0x68] sm:$0xff]
                  %2069 = vst [vmem:[%s2041 + $0xd0] sm:$0xff] %v2068
                  %v2070 = vld [vmem:[%s2040 + $0x70] sm:$0xff]
                  %2071 = vst [vmem:[%s2041 + $0xe0] sm:$0xff] %v2070
                  %v2072 = vld [vmem:[%s2040 + $0x78] sm:$0xff]
                  %2073 = vst [vmem:[%s2041 + $0xf0] sm:$0xff] %v2072
                  %v2074 = vld [vmem:[%s2040 + $0x80] sm:$0xff]
                  %2075 = vst [vmem:[%s2041 + $0x100] sm:$0xff] %v2074
                  %v2076 = vld [vmem:[%s2040 + $0x88] sm:$0xff]
                  %2077 = vst [vmem:[%s2041 + $0x110] sm:$0xff] %v2076
                  %v2078 = vld [vmem:[%s2040 + $0x90] sm:$0xff]
                  %2079 = vst [vmem:[%s2041 + $0x120] sm:$0xff] %v2078
                  %v2080 = vld [vmem:[%s2040 + $0x98] sm:$0xff]
                  %2081 = vst [vmem:[%s2041 + $0x130] sm:$0xff] %v2080
                  %v2082 = vld [vmem:[%s2040 + $0xa0] sm:$0xff]
                  %2083 = vst [vmem:[%s2041 + $0x140] sm:$0xff] %v2082
                  %v2084 = vld [vmem:[%s2040 + $0xa8] sm:$0xff]
                  %2085 = vst [vmem:[%s2041 + $0x150] sm:$0xff] %v2084
                  %v2086 = vld [vmem:[%s2040 + $0xb0] sm:$0xff]
                  %2087 = vst [vmem:[%s2041 + $0x160] sm:$0xff] %v2086
                  %v2088 = vld [vmem:[%s2040 + $0xb8] sm:$0xff]
                  %2089 = vst [vmem:[%s2041 + $0x170] sm:$0xff] %v2088
                  %v2090 = vld [vmem:[%s2040 + $0xc0] sm:$0xff]
                  %2091 = vst [vmem:[%s2041 + $0x180] sm:$0xff] %v2090
                  %v2092 = vld [vmem:[%s2040 + $0xc8] sm:$0xff]
                  %2093 = vst [vmem:[%s2041 + $0x190] sm:$0xff] %v2092
                  %v2094 = vld [vmem:[%s2040 + $0xd0] sm:$0xff]
                  %2095 = vst [vmem:[%s2041 + $0x1a0] sm:$0xff] %v2094
                  %v2096 = vld [vmem:[%s2040 + $0xd8] sm:$0xff]
                  %2097 = vst [vmem:[%s2041 + $0x1b0] sm:$0xff] %v2096
                  %v2098 = vld [vmem:[%s2040 + $0xe0] sm:$0xff]
                  %2099 = vst [vmem:[%s2041 + $0x1c0] sm:$0xff] %v2098
                  %v2100 = vld [vmem:[%s2040 + $0xe8] sm:$0xff]
                  %2101 = vst [vmem:[%s2041 + $0x1d0] sm:$0xff] %v2100
                  %v2102 = vld [vmem:[%s2040 + $0xf0] sm:$0xff]
                  %2103 = vst [vmem:[%s2041 + $0x1e0] sm:$0xff] %v2102
                  %v2104 = vld [vmem:[%s2040 + $0xf8] sm:$0xff]
                  %2105 = vst [vmem:[%s2041 + $0x1f0] sm:$0xff] %v2104
                $region106: #{cross_slice_attention.3} parent=100 // loop_footer
                  %s2039 = sadd.s32 1, %s2035
                $region107: #{cross_slice_attention.3} parent=100 // loop_footer_branch
                  %2034 = sbr.rel target = $region103
                $region108: #{cross_slice_attention.3} parent=100 // loop_exit
                  _
              $region101: #{cross_slice_attention.3} parent=85 // pred_fallthru
                _
              // Predicated region
              $region109: #{cross_slice_attention.3} parent=85 // pred_check
                _
              $region110: #{cross_slice_attention.3} parent=85 // pred_check_branch
                %2107 = sbr.rel target = $region112
              $region111: #{cross_slice_attention.3} parent=85 // pred_region
                _
              $region112: #{cross_slice_attention.3} parent=85 // pred_fallthru
                _
            $region86: #{cross_slice_attention.3} parent=81 // pred_fallthru
              _
            // Predicated region
            $region87: #{cross_slice_attention.3} parent=81 // pred_check
              _
            $region88: #{cross_slice_attention.3} parent=81 // pred_check_branch
              %1958 = sbr.rel target = $region90
            $region89: #{cross_slice_attention.3} parent=81 // pred_region
              loop: start=0, step=1, limit=1
              $region91: #{cross_slice_attention.3} parent=89 // loop_pre_header
                _
              $region92: #{cross_slice_attention.3} parent=89 // loop_header
                %s1961 = sphi 0, %s1965
                %p1962 = scmp.ge.s32.totalorder %s1961, 1
                %s1966 = sphi %s1947, %s1947
                %s1967 = sphi %s1952, %s1952
              $region93: #{cross_slice_attention.3} parent=89 // loop_header_branch
                %1964 = sbr.rel (%p1962) target = $region97
              $region94: #{cross_slice_attention.3} parent=89 // loop_body
                %v1968 = vld [vmem:[%s1966] sm:$0xff]
                %1969 = vst [vmem:[%s1967] sm:$0xff] %v1968
                %v1970 = vld [vmem:[%s1966 + $0x8] sm:$0xff]
                %1971 = vst [vmem:[%s1967 + $0x10] sm:$0xff] %v1970
                %v1972 = vld [vmem:[%s1966 + $0x10] sm:$0xff]
                %1973 = vst [vmem:[%s1967 + $0x20] sm:$0xff] %v1972
                %v1974 = vld [vmem:[%s1966 + $0x18] sm:$0xff]
                %1975 = vst [vmem:[%s1967 + $0x30] sm:$0xff] %v1974
                %v1976 = vld [vmem:[%s1966 + $0x20] sm:$0xff]
                %1977 = vst [vmem:[%s1967 + $0x40] sm:$0xff] %v1976
                %v1978 = vld [vmem:[%s1966 + $0x28] sm:$0xff]
                %1979 = vst [vmem:[%s1967 + $0x50] sm:$0xff] %v1978
                %v1980 = vld [vmem:[%s1966 + $0x30] sm:$0xff]
                %1981 = vst [vmem:[%s1967 + $0x60] sm:$0xff] %v1980
                %v1982 = vld [vmem:[%s1966 + $0x38] sm:$0xff]
                %1983 = vst [vmem:[%s1967 + $0x70] sm:$0xff] %v1982
                %v1984 = vld [vmem:[%s1966 + $0x40] sm:$0xff]
                %1985 = vst [vmem:[%s1967 + $0x80] sm:$0xff] %v1984
                %v1986 = vld [vmem:[%s1966 + $0x48] sm:$0xff]
                %1987 = vst [vmem:[%s1967 + $0x90] sm:$0xff] %v1986
                %v1988 = vld [vmem:[%s1966 + $0x50] sm:$0xff]
                %1989 = vst [vmem:[%s1967 + $0xa0] sm:$0xff] %v1988
                %v1990 = vld [vmem:[%s1966 + $0x58] sm:$0xff]
                %1991 = vst [vmem:[%s1967 + $0xb0] sm:$0xff] %v1990
                %v1992 = vld [vmem:[%s1966 + $0x60] sm:$0xff]
                %1993 = vst [vmem:[%s1967 + $0xc0] sm:$0xff] %v1992
                %v1994 = vld [vmem:[%s1966 + $0x68] sm:$0xff]
                %1995 = vst [vmem:[%s1967 + $0xd0] sm:$0xff] %v1994
                %v1996 = vld [vmem:[%s1966 + $0x70] sm:$0xff]
                %1997 = vst [vmem:[%s1967 + $0xe0] sm:$0xff] %v1996
                %v1998 = vld [vmem:[%s1966 + $0x78] sm:$0xff]
                %1999 = vst [vmem:[%s1967 + $0xf0] sm:$0xff] %v1998
                %v2000 = vld [vmem:[%s1966 + $0x80] sm:$0xff]
                %2001 = vst [vmem:[%s1967 + $0x100] sm:$0xff] %v2000
                %v2002 = vld [vmem:[%s1966 + $0x88] sm:$0xff]
                %2003 = vst [vmem:[%s1967 + $0x110] sm:$0xff] %v2002
                %v2004 = vld [vmem:[%s1966 + $0x90] sm:$0xff]
                %2005 = vst [vmem:[%s1967 + $0x120] sm:$0xff] %v2004
                %v2006 = vld [vmem:[%s1966 + $0x98] sm:$0xff]
                %2007 = vst [vmem:[%s1967 + $0x130] sm:$0xff] %v2006
                %v2008 = vld [vmem:[%s1966 + $0xa0] sm:$0xff]
                %2009 = vst [vmem:[%s1967 + $0x140] sm:$0xff] %v2008
                %v2010 = vld [vmem:[%s1966 + $0xa8] sm:$0xff]
                %2011 = vst [vmem:[%s1967 + $0x150] sm:$0xff] %v2010
                %v2012 = vld [vmem:[%s1966 + $0xb0] sm:$0xff]
                %2013 = vst [vmem:[%s1967 + $0x160] sm:$0xff] %v2012
                %v2014 = vld [vmem:[%s1966 + $0xb8] sm:$0xff]
                %2015 = vst [vmem:[%s1967 + $0x170] sm:$0xff] %v2014
                %v2016 = vld [vmem:[%s1966 + $0xc0] sm:$0xff]
                %2017 = vst [vmem:[%s1967 + $0x180] sm:$0xff] %v2016
                %v2018 = vld [vmem:[%s1966 + $0xc8] sm:$0xff]
                %2019 = vst [vmem:[%s1967 + $0x190] sm:$0xff] %v2018
                %v2020 = vld [vmem:[%s1966 + $0xd0] sm:$0xff]
                %2021 = vst [vmem:[%s1967 + $0x1a0] sm:$0xff] %v2020
                %v2022 = vld [vmem:[%s1966 + $0xd8] sm:$0xff]
                %2023 = vst [vmem:[%s1967 + $0x1b0] sm:$0xff] %v2022
                %v2024 = vld [vmem:[%s1966 + $0xe0] sm:$0xff]
                %2025 = vst [vmem:[%s1967 + $0x1c0] sm:$0xff] %v2024
                %v2026 = vld [vmem:[%s1966 + $0xe8] sm:$0xff]
                %2027 = vst [vmem:[%s1967 + $0x1d0] sm:$0xff] %v2026
                %v2028 = vld [vmem:[%s1966 + $0xf0] sm:$0xff]
                %2029 = vst [vmem:[%s1967 + $0x1e0] sm:$0xff] %v2028
                %v2030 = vld [vmem:[%s1966 + $0xf8] sm:$0xff]
                %2031 = vst [vmem:[%s1967 + $0x1f0] sm:$0xff] %v2030
              $region95: #{cross_slice_attention.3} parent=89 // loop_footer
                %s1965 = sadd.s32 1, %s1961
              $region96: #{cross_slice_attention.3} parent=89 // loop_footer_branch
                %1960 = sbr.rel target = $region92
              $region97: #{cross_slice_attention.3} parent=89 // loop_exit
                _
            $region90: #{cross_slice_attention.3} parent=81 // pred_fallthru
              _
          $region82: #{cross_slice_attention.3} parent=77 // pred_fallthru
            _
          %2108 = vnop
        $region78: #{cross_slice_attention.3} parent=65 // pred_fallthru
          _
      $region66: #{cross_slice_attention.3} parent=5 // pred_fallthru
        _
      %p2109 = scmp.le.s32.totalorder 2, %s10
      // Predicated region
      $region113: #{cross_slice_attention.3} parent=5 // pred_check
        %p2110 = pneg %p2109
      $region114: #{cross_slice_attention.3} parent=5 // pred_check_branch
        %2112 = sbr.rel (%p2110) target = $region116
      $region115: #{cross_slice_attention.3} parent=5 // pred_region
        %s2113 = ssub.s32 %s10, 2
        // Predicated region
        $region117: #{cross_slice_attention.3} parent=115 // pred_check
          %p2114 = pneg %p107
        $region118: #{cross_slice_attention.3} parent=115 // pred_check_branch
          %2116 = sbr.rel (%p2114) target = $region120
        $region119: #{cross_slice_attention.3} parent=115 // pred_region
          %s2117 = sand.u32 %s92, 1
          %s2118 = sand.u32 %s92, 1
          %s2119 = smul.addr %s2118, 256
          %s2120 = scalar_lea.vmem [#allocation5], %s2119
        $region120: #{cross_slice_attention.3} parent=115 // pred_fallthru
          _
      $region116: #{cross_slice_attention.3} parent=5 // pred_fallthru
        _
    $region6: #{cross_slice_attention.3} parent=1 // loop_footer
      %s14 = sadd.s32 1, %s10
    $region7: #{cross_slice_attention.3} parent=1 // loop_footer_branch
      %9 = sbr.rel target = $region3
    $region8: #{cross_slice_attention.3} parent=1 // loop_exit
      _
    %2121 = vsyncpa [#allocation3], 1
    %s2122 = scalar_lea.sflag [#allocation3], 1
    %2123 = vsyncpa %s2122, 1

</llo_original>
